<compile_context>
chip_gen: v7x
topology: tpu7x:2x2x1
jax: 0.10.0
libtpu: 0.0.40
codegen_flags: <defaults>
</compile_context>

<pallas_src>
import functools

import jax
import jax.numpy as jnp
from jax import lax
from jax.experimental import pallas as pl
from jax.experimental.pallas import tpu as pltpu


def _cdiv(a, b):
    return (a + b - 1) // b


# ---------------------------------------------------------------------------
# Kernel 1: streamed attention backbone over the N instances.
# ---------------------------------------------------------------------------
def _clam_attn_kernel(n_valid,              # static python int (real N), bound via partial
                      h_ref,                # [TILE_N, E]      bf16  (streamed tile of h)
                      w_fc_ref, b_fc_ref,   # [E, D1] bf16 , [1, D1] f32
                      w_ab_ref, b_ab_ref,   # [D1, 2*D2] bf16, [1, 2*D2] f32  (fused a|b)
                      w_c_ref, b_c_ref,     # [1, D2] f32, [1, 1] f32
                      att_out,              # [TILE_N, 1] f32  raw attention logits
                      m_out, l_out,         # [1, 1] f32 each  per-split online-softmax stats
                      acc_out):             # [1, D1] f32      per-split sum exp(att-m)*h'
    j = pl.program_id(1)
    tile_n = h_ref.shape[0]
    d2 = w_c_ref.shape[1]

    # Init per-split accumulators at the start of each split (works both when the
    # outer axis runs sequentially on 1 TC and when it is split across 2 TCs).
    @pl.when(j == 0)
    def _():
        m_out[...] = jnp.full_like(m_out, -1e30)
        l_out[...] = jnp.zeros_like(l_out)
        acc_out[...] = jnp.zeros_like(acc_out)

    # fc + ReLU: bf16 MXU matmul, f32 accumulation.
    hh = jnp.dot(h_ref[...], w_fc_ref[...],
                 preferred_element_type=jnp.float32) + b_fc_ref[...]
    hh = jnp.maximum(hh, 0.0)                                        # [TILE_N, D1] f32

    # Fused attention_a / attention_b matmul, then split into tanh / sigmoid halves.
    ab = jnp.dot(hh.astype(jnp.bfloat16), w_ab_ref[...],
                 preferred_element_type=jnp.float32) + b_ab_ref[...]  # [TILE_N, 2*D2]
    a = jnp.tanh(ab[:, :d2])
    b = jax.nn.sigmoid(ab[:, d2:])
    gated = a * b                                                    # [TILE_N, D2] f32

    # attention_c (output width 1): VPU multiply + lane reduction, keep the MXU free.
    att = jnp.sum(gated * w_c_ref[...], axis=-1, keepdims=True) + b_c_ref[...]

    # Mask padded rows so they contribute nothing to the softmax / pooling.
    tile_idx = pl.program_id(0) * pl.num_programs(1) + j
    row = lax.broadcasted_iota(jnp.int32, (tile_n, 1), 0) + tile_idx * tile_n
    att = jnp.where(row < n_valid, att, -1e30)                       # [TILE_N, 1]
    # Raw logits out (softmax normalization is only known after the full pass).
    att_out[...] = att

    # Online softmax update + attention pooling (VPU mul + XLU sublane reduce;
    # the MXU is the busy unit, so this overlaps in other VLIW slots).
    m_prev = m_out[...]
    m_new = jnp.maximum(m_prev, jnp.max(att, axis=0, keepdims=True))
    alpha = jnp.exp(m_prev - m_new)
    p = jnp.exp(att - m_new)                                         # [TILE_N, 1]
    l_out[...] = alpha * l_out[...] + jnp.sum(p, axis=0, keepdims=True)
    acc_out[...] = alpha * acc_out[...] + jnp.sum(p * hh, axis=0, keepdims=True)
    m_out[...] = m_new


# ---------------------------------------------------------------------------
# Kernel 2: combine per-split softmax partials -> M = A^T @ h', then the
# bag-level classifier MLP (tiny, single shot).
# ---------------------------------------------------------------------------
def _clam_head_kernel(m_ref, l_ref, acc_ref,          # [S,1], [S,1], [S,D1] f32
                      w1_ref, b1_ref,                 # [D1, HC], [1, HC] f32
                      w2_ref, b2_ref,                 # [HC, C], [1, C]  f32
                      logits_out):                    # [1, C] f32
    m = m_ref[...]
    w = jnp.exp(m - jnp.max(m, axis=0, keepdims=True))                # [S, 1]
    l = jnp.sum(w * l_ref[...], axis=0, keepdims=True)                # [1, 1]
    acc = jnp.sum(w * acc_ref[...], axis=0, keepdims=True)            # [1, D1]
    bag = acc / l                                                     # M = A^T @ h'
    z = jnp.maximum(
        jnp.dot(bag, w1_ref[...], preferred_element_type=jnp.float32) + b1_ref[...],
        0.0)
    logits_out[...] = (jnp.dot(z, w2_ref[...], preferred_element_type=jnp.float32)
                       + b2_ref[...])


# ---------------------------------------------------------------------------
# Wrapper
# ---------------------------------------------------------------------------
def clam_sb_forward(h, params, *, tile_n=256, num_splits=2):
    """CLAM_SB forward (instance_eval=False path).

    Returns (logits [1,C], Y_prob [1,C], results_dict (empty), A [1,N]).
    """
    N, E = h.shape
    D1 = params["w_fc"].shape[1]
    D2 = params["w_a"].shape[1]
    C = params["w_cls2"].shape[1]

    tiles_per_split = max(1, _cdiv(_cdiv(N, tile_n), num_splits))
    n_pad = num_splits * tiles_per_split * tile_n

    # Pad instances (masked inside the kernel) and cast the streamed input to bf16.
    h_pad = jnp.pad(h, ((0, n_pad - N), (0, 0))).astype(jnp.bfloat16)

    # Pre-fused / pre-cast weights (layout [in, out], y = x @ W + b).
    w_fc = params["w_fc"].astype(jnp.bfloat16)
    b_fc = params["b_fc"].astype(jnp.float32)
    w_ab = jnp.concatenate([params["w_a"], params["w_b"]], axis=1).astype(jnp.bfloat16)
    b_ab = jnp.concatenate([params["b_a"], params["b_b"]], axis=1).astype(jnp.float32)
    w_c_row = params["w_c"].reshape(1, D2).astype(jnp.float32)
    b_c = params["b_c"].reshape(1, 1).astype(jnp.float32)

    const = lambda i, j: (0, 0)
    row_map = lambda i, j: (i * tiles_per_split + j, 0)

    flops = 2 * n_pad * (E * D1 + D1 * 2 * D2 + D2 + D1)
    transcendentals = n_pad * (2 * D2 + 2)
    bytes_accessed = (h_pad.size * 2 + w_fc.size * 2 + w_ab.size * 2
                      + (b_fc.size + b_ab.size + D2 + 1) * 4
                      + n_pad * 4 + num_splits * (D1 + 2) * 4)

    att_raw, m_part, l_part, acc_part = pl.pallas_call(
        functools.partial(_clam_attn_kernel, N),
        grid=(num_splits, tiles_per_split),
        in_specs=[
            pl.BlockSpec((tile_n, E), row_map),          # h (streamed)
            pl.BlockSpec((E, D1), const),                # w_fc   (resident)
            pl.BlockSpec((1, D1), const),                # b_fc
            pl.BlockSpec((D1, 2 * D2), const),           # w_ab
            pl.BlockSpec((1, 2 * D2), const),            # b_ab
            pl.BlockSpec((1, D2), const),                # w_c row
            pl.BlockSpec((1, 1), const),                 # b_c
        ],
        out_specs=(
            pl.BlockSpec((tile_n, 1), row_map),                      # raw attention logits
            pl.BlockSpec((None, 1, 1), lambda i, j: (i, 0, 0)),      # m  (per split)
            pl.BlockSpec((None, 1, 1), lambda i, j: (i, 0, 0)),      # l  (per split)
            pl.BlockSpec((None, 1, D1), lambda i, j: (i, 0, 0)),     # acc(per split)
        ),
        out_shape=(
            jax.ShapeDtypeStruct((n_pad, 1), jnp.float32),
            jax.ShapeDtypeStruct((num_splits, 1, 1), jnp.float32),
            jax.ShapeDtypeStruct((num_splits, 1, 1), jnp.float32),
            jax.ShapeDtypeStruct((num_splits, 1, D1), jnp.float32),
        ),
        compiler_params=pltpu.CompilerParams(
            dimension_semantics=("parallel", "arbitrary"),
            vmem_limit_bytes=48 * 1024 * 1024,
        ),
        cost_estimate=pl.CostEstimate(
            flops=flops,
            transcendentals=transcendentals,
            bytes_accessed=bytes_accessed,
        ),
    )(h_pad, w_fc, b_fc, w_ab, b_ab, w_c_row, b_c)

    # Tiny finalize kernel: combine split partials + classifier MLP.
    vmem = pl.BlockSpec(memory_space=pltpu.MemorySpace.VMEM)
    logits = pl.pallas_call(
        _clam_head_kernel,
        out_shape=jax.ShapeDtypeStruct((1, C), jnp.float32),
        in_specs=[vmem] * 7,
        out_specs=vmem,
    )(m_part.reshape(num_splits, 1),
      l_part.reshape(num_splits, 1),
      acc_part.reshape(num_splits, D1),
      params["w_cls1"].astype(jnp.float32), params["b_cls1"].astype(jnp.float32),
      params["w_cls2"].astype(jnp.float32), params["b_cls2"].astype(jnp.float32))

    # Lane-sparse epilogue kept in plain JAX (per review): A softmax over N, Y_prob.
    att = att_raw[:N, 0][None, :]                       # [1, N] raw attention logits
    A = jax.nn.softmax(att, axis=1)
    y_prob = jax.nn.softmax(logits, axis=1)
    results_dict = {}
    return logits, y_prob, results_dict, A


def init_params(key, embed_size, d1, d2, cls_hidden, n_classes):
    """Deterministic synthetic parameter init (Linear weights stored as [in, out])."""
    keys = jax.random.split(key, 12)

    def lin(kw, kb, fan_in, fan_out):
        scale = 1.0 / jnp.sqrt(fan_in)
        w = jax.random.normal(kw, (fan_in, fan_out), jnp.float32) * scale
        b = jax.random.normal(kb, (1, fan_out), jnp.float32) * 0.01
        return w, b

    w_fc, b_fc = lin(keys[0], keys[1], embed_size, d1)
    w_a, b_a = lin(keys[2], keys[3], d1, d2)
    w_b, b_b = lin(keys[4], keys[5], d1, d2)
    w_c, b_c = lin(keys[6], keys[7], d2, 1)
    w_cls1, b_cls1 = lin(keys[8], keys[9], d1, cls_hidden)
    w_cls2, b_cls2 = lin(keys[10], keys[11], cls_hidden, n_classes)

    return {
        "w_fc": w_fc, "b_fc": b_fc,
        "w_a": w_a, "b_a": b_a,
        "w_b": w_b, "b_b": b_b,
        "w_c": w_c, "b_c": b_c,
        "w_cls1": w_cls1, "b_cls1": b_cls1,
        "w_cls2": w_cls2, "b_cls2": b_cls2,
    }


def _reference_forward(h, p):
    """Pure-JAX f32 reference of the PyTorch CLAM_SB forward (inference path)."""
    hh = jax.nn.relu(h @ p["w_fc"] + p["b_fc"])
    a = jnp.tanh(hh @ p["w_a"] + p["b_a"])
    b = jax.nn.sigmoid(hh @ p["w_b"] + p["b_b"])
    att = (a * b) @ p["w_c"] + p["b_c"]                 # [N, 1]
    A = jax.nn.softmax(att.T, axis=1)                   # [1, N]
    M = A @ hh
    z = jax.nn.relu(M @ p["w_cls1"] + p["b_cls1"])
    logits = z @ p["w_cls2"] + p["b_cls2"]
    return logits, jax.nn.softmax(logits, axis=1), A


if __name__ == "__main__":
    # Small shapes consistent with CLAM_SB('small') ([embed, 512, 256]) scaled down.
    N = 600            # number of patch instances in the bag (exercises padding + both splits)
    EMBED = 256        # embed_size
    D1 = 256           # size[1]
    D2 = 128           # size[2]
    CLS_HIDDEN = 128   # classifier hidden (256 in the original)
    N_CLASSES = 2

    key = jax.random.PRNGKey(0)
    k_h, k_p = jax.random.split(key)
    h = jax.random.normal(k_h, (N, EMBED), jnp.float32)
    params = init_params(k_p, EMBED, D1, D2, CLS_HIDDEN, N_CLASSES)

    fwd = jax.jit(functools.partial(clam_sb_forward, tile_n=256, num_splits=2))
    logits, y_prob, results_dict, A = fwd(h, params)
    jax.block_until_ready((logits, y_prob, A))

    ref_logits, ref_prob, ref_A = _reference_forward(h, params)

    assert logits.shape == (1, N_CLASSES)
    assert y_prob.shape == (1, N_CLASSES)
    assert A.shape == (1, N)
    assert bool(jnp.all(jnp.isfinite(logits)))
    assert float(jnp.abs(jnp.sum(A) - 1.0)) < 1e-3
    # Loose tolerances: kernel matmuls run in bf16 with f32 accumulation.
    assert float(jnp.max(jnp.abs(A - ref_A))) < 2e-3
    assert float(jnp.max(jnp.abs(y_prob - ref_prob))) < 0.08

    print("KERNEL_OK")
</pallas_src>

<mosaic_0001>
module attributes {stable_mosaic.version = 11 : i64} {
  func.func @_clam_head_kernel(%arg0: memref<2x1xf32, #tpu.memory_space<vmem>>, %arg1: memref<2x1xf32, #tpu.memory_space<vmem>>, %arg2: memref<2x256xf32, #tpu.memory_space<vmem>>, %arg3: memref<256x128xf32, #tpu.memory_space<vmem>>, %arg4: memref<1x128xf32, #tpu.memory_space<vmem>>, %arg5: memref<128x2xf32, #tpu.memory_space<vmem>>, %arg6: memref<1x2xf32, #tpu.memory_space<vmem>>, %arg7: memref<1x2xf32, #tpu.memory_space<vmem>>) attributes {dimension_semantics = [], scalar_prefetch = 0 : i64, scratch_operands = 0 : i64, tpu.core_type = #tpu.core_type<tc>} {
    %c0 = arith.constant 0 : index
    %c0_0 = arith.constant 0 : index
    %0 = vector.load %arg0[%c0, %c0_0] : memref<2x1xf32, #tpu.memory_space<vmem>>, vector<2x1xf32>
    %cst = arith.constant dense<0xFF800000> : vector<1xf32>
    %1 = vector.multi_reduction <maximumf>, %0, %cst [0] : vector<2x1xf32> to vector<1xf32>
    %2 = vector.shape_cast %1 : vector<1xf32> to vector<1x1xf32>
    %3 = vector.broadcast %2 : vector<1x1xf32> to vector<2x1xf32>
    %4 = arith.subf %0, %3 : vector<2x1xf32>
    %5 = math.exp %4 : vector<2x1xf32>
    %c0_1 = arith.constant 0 : index
    %c0_2 = arith.constant 0 : index
    %6 = vector.load %arg1[%c0_1, %c0_2] : memref<2x1xf32, #tpu.memory_space<vmem>>, vector<2x1xf32>
    %7 = arith.mulf %5, %6 : vector<2x1xf32>
    %cst_3 = arith.constant dense<0.000000e+00> : vector<1xf32>
    %8 = vector.multi_reduction <add>, %7, %cst_3 [0] : vector<2x1xf32> to vector<1xf32>
    %9 = vector.shape_cast %8 : vector<1xf32> to vector<1x1xf32>
    %c0_4 = arith.constant 0 : index
    %c0_5 = arith.constant 0 : index
    %10 = vector.load %arg2[%c0_4, %c0_5] : memref<2x256xf32, #tpu.memory_space<vmem>>, vector<2x256xf32>
    %11 = vector.broadcast %5 : vector<2x1xf32> to vector<2x256xf32>
    %12 = arith.mulf %11, %10 : vector<2x256xf32>
    %cst_6 = arith.constant dense<0.000000e+00> : vector<256xf32>
    %13 = vector.multi_reduction <add>, %12, %cst_6 [0] : vector<2x256xf32> to vector<256xf32>
    %14 = vector.shape_cast %13 : vector<256xf32> to vector<1x256xf32>
    %15 = vector.broadcast %9 : vector<1x1xf32> to vector<1x256xf32>
    %16 = arith.divf %14, %15 : vector<1x256xf32>
    %c0_7 = arith.constant 0 : index
    %c0_8 = arith.constant 0 : index
    %17 = vector.load %arg3[%c0_7, %c0_8] : memref<256x128xf32, #tpu.memory_space<vmem>>, vector<256x128xf32>
    %cst_9 = arith.constant dense<0.000000e+00> : vector<1x128xf32>
    %18 = tpu.matmul %16, %17, %cst_9 {dimension_numbers = #tpu.dot_dimension_numbers<[1], [0], [0], [1], [0, 0, 1, 1], [], []>} : vector<1x256xf32>, vector<256x128xf32>, vector<1x128xf32> -> vector<1x128xf32>
    %c0_10 = arith.constant 0 : index
    %c0_11 = arith.constant 0 : index
    %19 = vector.load %arg4[%c0_10, %c0_11] : memref<1x128xf32, #tpu.memory_space<vmem>>, vector<1x128xf32>
    %20 = arith.addf %18, %19 : vector<1x128xf32>
    %cst_12 = arith.constant 0.000000e+00 : f32
    %21 = vector.broadcast %cst_12 : f32 to vector<1x128xf32>
    %22 = arith.maximumf %20, %21 : vector<1x128xf32>
    %c0_13 = arith.constant 0 : index
    %c0_14 = arith.constant 0 : index
    %23 = vector.load %arg5[%c0_13, %c0_14] : memref<128x2xf32, #tpu.memory_space<vmem>>, vector<128x2xf32>
    %cst_15 = arith.constant dense<0.000000e+00> : vector<1x2xf32>
    %24 = tpu.matmul %22, %23, %cst_15 {dimension_numbers = #tpu.dot_dimension_numbers<[1], [0], [0], [1], [0, 0, 1, 1], [], []>} : vector<1x128xf32>, vector<128x2xf32>, vector<1x2xf32> -> vector<1x2xf32>
    %c0_16 = arith.constant 0 : index
    %c0_17 = arith.constant 0 : index
    %25 = vector.load %arg6[%c0_16, %c0_17] : memref<1x2xf32, #tpu.memory_space<vmem>>, vector<1x2xf32>
    %26 = arith.addf %24, %25 : vector<1x2xf32>
    %c0_18 = arith.constant 0 : index
    %c0_19 = arith.constant 0 : index
    %27 = vector.load %arg7[%c0_18, %c0_19] : memref<1x2xf32, #tpu.memory_space<vmem>>, vector<1x2xf32>
    tpu.vector_store %arg7[%c0_18, %c0_19], %26 {strides = array<i32>} : memref<1x2xf32, #tpu.memory_space<vmem>>, vector<1x2xf32>,
    return
  }
}

module attributes {stable_mosaic.version = 11 : i64} {
  func.func @_clam_attn_kernel(%arg0: i32, %arg1: i32, %arg2: memref<256x256xbf16, #tpu.memory_space<vmem>>, %arg3: memref<256x256xbf16, #tpu.memory_space<vmem>>, %arg4: memref<1x256xf32, #tpu.memory_space<vmem>>, %arg5: memref<256x256xbf16, #tpu.memory_space<vmem>>, %arg6: memref<1x256xf32, #tpu.memory_space<vmem>>, %arg7: memref<1x128xf32, #tpu.memory_space<vmem>>, %arg8: memref<1x1xf32, #tpu.memory_space<vmem>>, %arg9: memref<256x1xf32, #tpu.memory_space<vmem>>, %arg10: memref<1x1x1xf32, #tpu.memory_space<vmem>>, %arg11: memref<1x1x1xf32, #tpu.memory_space<vmem>>, %arg12: memref<1x1x256xf32, #tpu.memory_space<vmem>>) attributes {dimension_semantics = [#tpu.dimension_semantics<parallel>, #tpu.dimension_semantics<arbitrary>], iteration_bounds = array<i64: 2, 2>, scalar_prefetch = 0 : i64, scratch_operands = 0 : i64, tpu.core_type = #tpu.core_type<tc>, window_params = [{transform_indices = @transform_0, window_bounds = array<i64: 256, 256>}, {pipeline_mode = #tpu.pipeline_mode<synchronous>, transform_indices = @transform_1, window_bounds = array<i64: 256, 256>}, {pipeline_mode = #tpu.pipeline_mode<synchronous>, transform_indices = @transform_2, window_bounds = array<i64: 1, 256>}, {pipeline_mode = #tpu.pipeline_mode<synchronous>, transform_indices = @transform_3, window_bounds = array<i64: 256, 256>}, {pipeline_mode = #tpu.pipeline_mode<synchronous>, transform_indices = @transform_4, window_bounds = array<i64: 1, 256>}, {pipeline_mode = #tpu.pipeline_mode<synchronous>, transform_indices = @transform_5, window_bounds = array<i64: 1, 128>}, {pipeline_mode = #tpu.pipeline_mode<synchronous>, transform_indices = @transform_6, window_bounds = array<i64: 1, 1>}, {transform_indices = @transform_7, window_bounds = array<i64: 256, 1>}, {transform_indices = @transform_8, window_bounds = array<i64: 1, 1, 1>}, {transform_indices = @transform_9, window_bounds = array<i64: 1, 1, 1>}, {transform_indices = @transform_10, window_bounds = array<i64: 1, 1, 256>}]} {
    %c0_i32 = arith.constant 0 : i32
    %0 = arith.cmpi eq, %arg1, %c0_i32 : i32
    %1 = arith.extui %0 : i1 to i32
    %c0_i32_0 = arith.constant 0 : i32
    %2 = arith.cmpi ne, %1, %c0_i32_0 : i32
    scf.if %2 {
      %cst_42 = arith.constant -1.000000e+30 : f32
      %79 = vector.broadcast %cst_42 : f32 to vector<1x1xf32>
      %c0_43 = arith.constant 0 : index
      %c0_44 = arith.constant 0 : index
      %c0_45 = arith.constant 0 : index
      %80 = vector.load %arg10[%c0_43, %c0_44, %c0_45] : memref<1x1x1xf32, #tpu.memory_space<vmem>>, vector<1x1x1xf32>
      %81 = vector.shape_cast %80 : vector<1x1x1xf32> to vector<1x1xf32>
      %82 = vector.shape_cast %79 : vector<1x1xf32> to vector<1x1x1xf32>
      tpu.vector_store %arg10[%c0_43, %c0_44, %c0_45], %82 {strides = array<i32>} : memref<1x1x1xf32, #tpu.memory_space<vmem>>, vector<1x1x1xf32>,
      %cst_46 = arith.constant 0.000000e+00 : f32
      %83 = vector.broadcast %cst_46 : f32 to vector<1x1xf32>
      %c0_47 = arith.constant 0 : index
      %c0_48 = arith.constant 0 : index
      %c0_49 = arith.constant 0 : index
      %84 = vector.load %arg11[%c0_47, %c0_48, %c0_49] : memref<1x1x1xf32, #tpu.memory_space<vmem>>, vector<1x1x1xf32>
      %85 = vector.shape_cast %84 : vector<1x1x1xf32> to vector<1x1xf32>
      %86 = vector.shape_cast %83 : vector<1x1xf32> to vector<1x1x1xf32>
      tpu.vector_store %arg11[%c0_47, %c0_48, %c0_49], %86 {strides = array<i32>} : memref<1x1x1xf32, #tpu.memory_space<vmem>>, vector<1x1x1xf32>,
      %cst_50 = arith.constant 0.000000e+00 : f32
      %87 = vector.broadcast %cst_50 : f32 to vector<1x256xf32>
      %c0_51 = arith.constant 0 : index
      %c0_52 = arith.constant 0 : index
      %c0_53 = arith.constant 0 : index
      %88 = vector.load %arg12[%c0_51, %c0_52, %c0_53] : memref<1x1x256xf32, #tpu.memory_space<vmem>>, vector<1x1x256xf32>
      %89 = vector.shape_cast %88 : vector<1x1x256xf32> to vector<1x256xf32>
      %90 = vector.shape_cast %87 : vector<1x256xf32> to vector<1x1x256xf32>
      tpu.vector_store %arg12[%c0_51, %c0_52, %c0_53], %90 {strides = array<i32>} : memref<1x1x256xf32, #tpu.memory_space<vmem>>, vector<1x1x256xf32>,
    } else {
    }
    %c0 = arith.constant 0 : index
    %c0_1 = arith.constant 0 : index
    %3 = vector.load %arg2[%c0, %c0_1] : memref<256x256xbf16, #tpu.memory_space<vmem>>, vector<256x256xbf16>
    %c0_2 = arith.constant 0 : index
    %c0_3 = arith.constant 0 : index
    %4 = vector.load %arg3[%c0_2, %c0_3] : memref<256x256xbf16, #tpu.memory_space<vmem>>, vector<256x256xbf16>
    %cst = arith.constant dense<0.000000e+00> : vector<256x256xf32>
    %5 = tpu.matmul %3, %4, %cst {dimension_numbers = #tpu.dot_dimension_numbers<[1], [0], [0], [1], [0, 0, 1, 1], [], []>} : vector<256x256xbf16>, vector<256x256xbf16>, vector<256x256xf32> -> vector<256x256xf32>
    %c0_4 = arith.constant 0 : index
    %c0_5 = arith.constant 0 : index
    %6 = vector.load %arg4[%c0_4, %c0_5] : memref<1x256xf32, #tpu.memory_space<vmem>>, vector<1x256xf32>
    %7 = vector.broadcast %6 : vector<1x256xf32> to vector<256x256xf32>
    %8 = arith.addf %5, %7 : vector<256x256xf32>
    %cst_6 = arith.constant 0.000000e+00 : f32
    %9 = vector.broadcast %cst_6 : f32 to vector<256x256xf32>
    %10 = arith.maximumf %8, %9 : vector<256x256xf32>
    %11 = arith.truncf %10 : vector<256x256xf32> to vector<256x256xbf16>
    %c0_7 = arith.constant 0 : index
    %c0_8 = arith.constant 0 : index
    %12 = vector.load %arg5[%c0_7, %c0_8] : memref<256x256xbf16, #tpu.memory_space<vmem>>, vector<256x256xbf16>
    %cst_9 = arith.constant dense<0.000000e+00> : vector<256x256xf32>
    %13 = tpu.matmul %11, %12, %cst_9 {dimension_numbers = #tpu.dot_dimension_numbers<[1], [0], [0], [1], [0, 0, 1, 1], [], []>} : vector<256x256xbf16>, vector<256x256xbf16>, vector<256x256xf32> -> vector<256x256xf32>
    %c0_10 = arith.constant 0 : index
    %c0_11 = arith.constant 0 : index
    %14 = vector.load %arg6[%c0_10, %c0_11] : memref<1x256xf32, #tpu.memory_space<vmem>>, vector<1x256xf32>
    %15 = vector.broadcast %14 : vector<1x256xf32> to vector<256x256xf32>
    %16 = arith.addf %13, %15 : vector<256x256xf32>
    %17 = vector.extract_strided_slice %16 {offsets = [0, 0], sizes = [256, 128], strides = [1, 1]} : vector<256x256xf32> to vector<256x128xf32>
    %18 = math.tanh %17 : vector<256x128xf32>
    %19 = vector.extract_strided_slice %16 {offsets = [0, 128], sizes = [256, 128], strides = [1, 1]} : vector<256x256xf32> to vector<256x128xf32>
    %20 = arith.negf %19 : vector<256x128xf32>
    %21 = math.exp %20 : vector<256x128xf32>
    %cst_12 = arith.constant 1.000000e+00 : f32
    %22 = vector.broadcast %cst_12 : f32 to vector<256x128xf32>
    %23 = arith.addf %22, %21 : vector<256x128xf32>
    %24 = arith.divf %22, %23 : vector<256x128xf32>
    %25 = arith.mulf %18, %24 : vector<256x128xf32>
    %c0_13 = arith.constant 0 : index
    %c0_14 = arith.constant 0 : index
    %26 = vector.load %arg7[%c0_13, %c0_14] : memref<1x128xf32, #tpu.memory_space<vmem>>, vector<1x128xf32>
    %27 = vector.broadcast %26 : vector<1x128xf32> to vector<256x128xf32>
    %28 = arith.mulf %25, %27 : vector<256x128xf32>
    %cst_15 = arith.constant dense<0.000000e+00> : vector<256xf32>
    %29 = vector.multi_reduction <add>, %28, %cst_15 [1] : vector<256x128xf32> to vector<256xf32>
    %30 = vector.shape_cast %29 : vector<256xf32> to vector<256x1xf32>
    %c0_16 = arith.constant 0 : index
    %c0_17 = arith.constant 0 : index
    %31 = vector.load %arg8[%c0_16, %c0_17] : memref<1x1xf32, #tpu.memory_space<vmem>>, vector<1x1xf32>
    %32 = vector.broadcast %31 : vector<1x1xf32> to vector<256x1xf32>
    %33 = arith.addf %30, %32 : vector<256x1xf32>
    %c2_i32 = arith.constant 2 : i32
    %34 = arith.muli %arg0, %c2_i32 : i32
    %35 = arith.addi %34, %arg1 : i32
    %36 = tpu.iota {dimensions = array<i32: 0>} : vector<256x1xi32>
    %c256_i32 = arith.constant 256 : i32
    %37 = arith.muli %35, %c256_i32 : i32
    %38 = vector.broadcast %37 : i32 to vector<256x1xi32>
    %39 = arith.addi %36, %38 : vector<256x1xi32>
    %c600_i32 = arith.constant 600 : i32
    %40 = vector.broadcast %c600_i32 : i32 to vector<256x1xi32>
    %41 = arith.cmpi slt, %39, %40 : vector<256x1xi32>
    %cst_18 = arith.constant -1.000000e+30 : f32
    %42 = vector.broadcast %cst_18 : f32 to vector<256x1xf32>
    %43 = arith.select %41, %33, %42 : vector<256x1xi1>, vector<256x1xf32>
    %c0_19 = arith.constant 0 : index
    %c0_20 = arith.constant 0 : index
    %44 = vector.load %arg9[%c0_19, %c0_20] : memref<256x1xf32, #tpu.memory_space<vmem>>, vector<256x1xf32>
    tpu.vector_store %arg9[%c0_19, %c0_20], %43 {strides = array<i32>} : memref<256x1xf32, #tpu.memory_space<vmem>>, vector<256x1xf32>,
    %c0_21 = arith.constant 0 : index
    %c0_22 = arith.constant 0 : index
    %c0_23 = arith.constant 0 : index
    %45 = vector.load %arg10[%c0_21, %c0_22, %c0_23] : memref<1x1x1xf32, #tpu.memory_space<vmem>>, vector<1x1x1xf32>
    %46 = vector.shape_cast %45 : vector<1x1x1xf32> to vector<1x1xf32>
    %cst_24 = arith.constant dense<0xFF800000> : vector<1xf32>
    %47 = vector.multi_reduction <maximumf>, %43, %cst_24 [0] : vector<256x1xf32> to vector<1xf32>
    %48 = vector.shape_cast %47 : vector<1xf32> to vector<1x1xf32>
    %49 = arith.maximumf %46, %48 : vector<1x1xf32>
    %50 = arith.subf %46, %49 : vector<1x1xf32>
    %51 = math.exp %50 : vector<1x1xf32>
    %52 = vector.broadcast %49 : vector<1x1xf32> to vector<256x1xf32>
    %53 = arith.subf %43, %52 : vector<256x1xf32>
    %54 = math.exp %53 : vector<256x1xf32>
    %c0_25 = arith.constant 0 : index
    %c0_26 = arith.constant 0 : index
    %c0_27 = arith.constant 0 : index
    %55 = vector.load %arg11[%c0_25, %c0_26, %c0_27] : memref<1x1x1xf32, #tpu.memory_space<vmem>>, vector<1x1x1xf32>
    %56 = vector.shape_cast %55 : vector<1x1x1xf32> to vector<1x1xf32>
    %57 = arith.mulf %51, %56 : vector<1x1xf32>
    %cst_28 = arith.constant dense<0.000000e+00> : vector<1xf32>
    %58 = vector.multi_reduction <add>, %54, %cst_28 [0] : vector<256x1xf32> to vector<1xf32>
    %59 = vector.shape_cast %58 : vector<1xf32> to vector<1x1xf32>
    %60 = arith.addf %57, %59 : vector<1x1xf32>
    %c0_29 = arith.constant 0 : index
    %c0_30 = arith.constant 0 : index
    %c0_31 = arith.constant 0 : index
    %61 = vector.load %arg11[%c0_29, %c0_30, %c0_31] : memref<1x1x1xf32, #tpu.memory_space<vmem>>, vector<1x1x1xf32>
    %62 = vector.shape_cast %61 : vector<1x1x1xf32> to vector<1x1xf32>
    %63 = vector.shape_cast %60 : vector<1x1xf32> to vector<1x1x1xf32>
    tpu.vector_store %arg11[%c0_29, %c0_30, %c0_31], %63 {strides = array<i32>} : memref<1x1x1xf32, #tpu.memory_space<vmem>>, vector<1x1x1xf32>,
    %c0_32 = arith.constant 0 : index
    %c0_33 = arith.constant 0 : index
    %c0_34 = arith.constant 0 : index
    %64 = vector.load %arg12[%c0_32, %c0_33, %c0_34] : memref<1x1x256xf32, #tpu.memory_space<vmem>>, vector<1x1x256xf32>
    %65 = vector.shape_cast %64 : vector<1x1x256xf32> to vector<1x256xf32>
    %66 = vector.broadcast %51 : vector<1x1xf32> to vector<1x256xf32>
    %67 = arith.mulf %66, %65 : vector<1x256xf32>
    %68 = vector.broadcast %54 : vector<256x1xf32> to vector<256x256xf32>
    %69 = arith.mulf %68, %10 : vector<256x256xf32>
    %cst_35 = arith.constant dense<0.000000e+00> : vector<256xf32>
    %70 = vector.multi_reduction <add>, %69, %cst_35 [0] : vector<256x256xf32> to vector<256xf32>
    %71 = vector.shape_cast %70 : vector<256xf32> to vector<1x256xf32>
    %72 = arith.addf %67, %71 : vector<1x256xf32>
    %c0_36 = arith.constant 0 : index
    %c0_37 = arith.constant 0 : index
    %c0_38 = arith.constant 0 : index
    %73 = vector.load %arg12[%c0_36, %c0_37, %c0_38] : memref<1x1x256xf32, #tpu.memory_space<vmem>>, vector<1x1x256xf32>
    %74 = vector.shape_cast %73 : vector<1x1x256xf32> to vector<1x256xf32>
    %75 = vector.shape_cast %72 : vector<1x256xf32> to vector<1x1x256xf32>
    tpu.vector_store %arg12[%c0_36, %c0_37, %c0_38], %75 {strides = array<i32>} : memref<1x1x256xf32, #tpu.memory_space<vmem>>, vector<1x1x256xf32>,
    %c0_39 = arith.constant 0 : index
    %c0_40 = arith.constant 0 : index
    %c0_41 = arith.constant 0 : index
    %76 = vector.load %arg10[%c0_39, %c0_40, %c0_41] : memref<1x1x1xf32, #tpu.memory_space<vmem>>, vector<1x1x1xf32>
    %77 = vector.shape_cast %76 : vector<1x1x1xf32> to vector<1x1xf32>
    %78 = vector.shape_cast %49 : vector<1x1xf32> to vector<1x1x1xf32>
    tpu.vector_store %arg10[%c0_39, %c0_40, %c0_41], %78 {strides = array<i32>} : memref<1x1x1xf32, #tpu.memory_space<vmem>>, vector<1x1x1xf32>,
    return
  }
  func.func @transform_0(%arg0: i32, %arg1: i32) -> (i32, i32) {
    %c2_i32 = arith.constant 2 : i32
    %0 = arith.muli %arg0, %c2_i32 : i32
    %1 = arith.addi %0, %arg1 : i32
    %c0_i32 = arith.constant 0 : i32
    %c0_i32_0 = arith.constant 0 : i32
    return %1, %c0_i32 : i32, i32
  }
  func.func @transform_1(%arg0: i32, %arg1: i32) -> (i32, i32) {
    %c0_i32 = arith.constant 0 : i32
    %c0_i32_0 = arith.constant 0 : i32
    %c0_i32_1 = arith.constant 0 : i32
    return %c0_i32, %c0_i32_0 : i32, i32
  }
  func.func @transform_2(%arg0: i32, %arg1: i32) -> (i32, i32) {
    %c0_i32 = arith.constant 0 : i32
    %c0_i32_0 = arith.constant 0 : i32
    %c0_i32_1 = arith.constant 0 : i32
    return %c0_i32, %c0_i32_0 : i32, i32
  }
  func.func @transform_3(%arg0: i32, %arg1: i32) -> (i32, i32) {
    %c0_i32 = arith.constant 0 : i32
    %c0_i32_0 = arith.constant 0 : i32
    %c0_i32_1 = arith.constant 0 : i32
    return %c0_i32, %c0_i32_0 : i32, i32
  }
  func.func @transform_4(%arg0: i32, %arg1: i32) -> (i32, i32) {
    %c0_i32 = arith.constant 0 : i32
    %c0_i32_0 = arith.constant 0 : i32
    %c0_i32_1 = arith.constant 0 : i32
    return %c0_i32, %c0_i32_0 : i32, i32
  }
  func.func @transform_5(%arg0: i32, %arg1: i32) -> (i32, i32) {
    %c0_i32 = arith.constant 0 : i32
    %c0_i32_0 = arith.constant 0 : i32
    %c0_i32_1 = arith.constant 0 : i32
    return %c0_i32, %c0_i32_0 : i32, i32
  }
  func.func @transform_6(%arg0: i32, %arg1: i32) -> (i32, i32) {
    %c0_i32 = arith.constant 0 : i32
    %c0_i32_0 = arith.constant 0 : i32
    %c0_i32_1 = arith.constant 0 : i32
    return %c0_i32, %c0_i32_0 : i32, i32
  }
  func.func @transform_7(%arg0: i32, %arg1: i32) -> (i32, i32) {
    %c2_i32 = arith.constant 2 : i32
    %0 = arith.muli %arg0, %c2_i32 : i32
    %1 = arith.addi %0, %arg1 : i32
    %c0_i32 = arith.constant 0 : i32
    %c0_i32_0 = arith.constant 0 : i32
    return %1, %c0_i32 : i32, i32
  }
  func.func @transform_8(%arg0: i32, %arg1: i32) -> (i32, i32, i32) {
    %c0_i32 = arith.constant 0 : i32
    %c0_i32_0 = arith.constant 0 : i32
    %c0_i32_1 = arith.constant 0 : i32
    return %arg0, %c0_i32, %c0_i32_0 : i32, i32, i32
  }
  func.func @transform_9(%arg0: i32, %arg1: i32) -> (i32, i32, i32) {
    %c0_i32 = arith.constant 0 : i32
    %c0_i32_0 = arith.constant 0 : i32
    %c0_i32_1 = arith.constant 0 : i32
    return %arg0, %c0_i32, %c0_i32_0 : i32, i32, i32
  }
  func.func @transform_10(%arg0: i32, %arg1: i32) -> (i32, i32, i32) {
    %c0_i32 = arith.constant 0 : i32
    %c0_i32_0 = arith.constant 0 : i32
    %c0_i32_1 = arith.constant 0 : i32
    return %arg0, %c0_i32, %c0_i32_0 : i32, i32, i32
  }
}

</mosaic_0001>

<llo_original>
// kernel: clam_sb_forward.3
$region0: #{clam_sb_forward.3}
  #allocation0 [shape = 'u32[]', space=smem, size = 0x4, offset = 0x4, fixed_abs, tag = 'smem constant byte address 0x4 - core index']
  #allocation1 [shape = 'u32[144,128]{1,0:T(1,128)}', space=vmem, size = 0x12000, scoped, tag = 'internal scratch']
  %s0 = inlined_call_operand.vmem [shape: f32[2,1], index: 0, kind: input, shape index: {}]
  %s1 = inlined_call_operand.vmem [shape: f32[2,1], index: 1, kind: input, shape index: {}]
  %s2 = inlined_call_operand.vmem [shape: f32[2,256], index: 2, kind: input, shape index: {}]
  %s3 = inlined_call_operand.vmem [shape: f32[256,128], index: 3, kind: input, shape index: {}]
  %s4 = inlined_call_operand.vmem [shape: f32[1,128], index: 4, kind: input, shape index: {}]
  %s5 = inlined_call_operand.vmem [shape: f32[128,2], index: 5, kind: input, shape index: {}]
  %s6 = inlined_call_operand.vmem [shape: f32[1,2], index: 6, kind: input, shape index: {}]
  %s7 = inlined_call_operand.vmem [shape: f32[1,2], index: 7, kind: output, shape index: {}]
  %s8 = sld [smem:[#allocation0]]
  $region38: #{clam_sb_forward.3} parent=0
    _
  %s10 = ssub.s32 1, %s8
  %s11 = scalar_select 0, %s10, %s8
  // Predicated region
  $region2: #{clam_sb_forward.3} parent=0 // pred_check
    _
  $region3: #{clam_sb_forward.3} parent=0 // pred_check_branch
    %13 = sbr.rel (0) target = $region5
  $region4: #{clam_sb_forward.3} parent=0 // pred_region
    _
  $region5: #{clam_sb_forward.3} parent=0 // pred_fallthru
    _
  // Predicated region
  $region6: #{clam_sb_forward.3} parent=0 // pred_check
    _
  $region7: #{clam_sb_forward.3} parent=0 // pred_check_branch
    %15 = sbr.rel (0) target = $region9
  $region8: #{clam_sb_forward.3} parent=0 // pred_region
    _
  $region9: #{clam_sb_forward.3} parent=0 // pred_fallthru
    _
  // Predicated region
  $region10: #{clam_sb_forward.3} parent=0 // pred_check
    _
  $region11: #{clam_sb_forward.3} parent=0 // pred_check_branch
    %17 = sbr.rel (0) target = $region13
  $region12: #{clam_sb_forward.3} parent=0 // pred_region
    _
  $region13: #{clam_sb_forward.3} parent=0 // pred_fallthru
    _
  // Predicated region
  $region14: #{clam_sb_forward.3} parent=0 // pred_check
    _
  $region15: #{clam_sb_forward.3} parent=0 // pred_check_branch
    %19 = sbr.rel (0) target = $region17
  $region16: #{clam_sb_forward.3} parent=0 // pred_region
    _
  $region17: #{clam_sb_forward.3} parent=0 // pred_fallthru
    _
  // Predicated region
  $region18: #{clam_sb_forward.3} parent=0 // pred_check
    _
  $region19: #{clam_sb_forward.3} parent=0 // pred_check_branch
    %21 = sbr.rel (0) target = $region21
  $region20: #{clam_sb_forward.3} parent=0 // pred_region
    _
  $region21: #{clam_sb_forward.3} parent=0 // pred_fallthru
    _
  // Predicated region
  $region22: #{clam_sb_forward.3} parent=0 // pred_check
    _
  $region23: #{clam_sb_forward.3} parent=0 // pred_check_branch
    %23 = sbr.rel (0) target = $region25
  $region24: #{clam_sb_forward.3} parent=0 // pred_region
    _
  $region25: #{clam_sb_forward.3} parent=0 // pred_fallthru
    _
  // Predicated region
  $region26: #{clam_sb_forward.3} parent=0 // pred_check
    _
  $region27: #{clam_sb_forward.3} parent=0 // pred_check_branch
    %25 = sbr.rel (0) target = $region29
  $region28: #{clam_sb_forward.3} parent=0 // pred_region
    _
  $region29: #{clam_sb_forward.3} parent=0 // pred_fallthru
    _
  %v26 = vld [vmem:[%s0] sm:$0x3]
  %vm27 = vcmask 1024
  %v28 = vsel %vm27, %v26, -inf
  %v29 = vrot.slane %v28, 4
  %v30 = vmax.f32 %v28, %v29
  %v31 = vrot.slane %v30, 2
  %v32 = vmax.f32 %v30, %v31
  %v33 = vrot.slane %v32, 1
  %v34 = vmax.f32 %v32, %v33
  %v35 = vsub.f32 %v26, %v34
  %v36 = vmul.f32 %v35, 1.442695
  %v37 = vpow.pop %v36
  %v38 = vld [vmem:[%s1] sm:$0x3]
  %v39 = vmul.f32 %v37, %v38
  %v40 = vsel %vm27, %v39, 0.0
  %v41 = vrot.slane %v40, 4
  %v42 = vadd.f32 %v40, %v41
  %v43 = vrot.slane %v42, 2
  %v44 = vadd.f32 %v42, %v43
  %v45 = vrot.slane %v44, 1
  %v46 = vadd.f32 %v44, %v45
  %v47 = vld [vmem:[%s2] sm:$0xf]
  %49 = vset.pattern.permute.xlu0 0
  %50 = vperm.xlu0 %49, %v37
  %v51 = vpop.permute.xlu0 %50
  %v55 = vunpack.c.l.s4 1983009808
  %v56 = vunpack.c.0.s8 %v55
  %v57 = vlaneseq
  %v58 = vshrl.u32 %v57, 7
  %v59 = vsub.s32 %v56, %v58
  %v60 = vrot.slane %v47, %v59
  %v61 = vcombine.high %v60, %v60
  %v64 = vmul.f32 %v51, %v60
  %v65 = vmul.f32 %v51, %v61
  %vm66 = vcmask 1041408
  %v67 = vsel %vm66, %v64, 0.0
  %v68 = vrot.slane %v67, 4
  %v69 = vadd.f32 %v67, %v68
  %v70 = vrot.slane %v69, 2
  %v71 = vadd.f32 %v69, %v70
  %v72 = vrot.slane %v71, 1
  %v73 = vadd.f32 %v71, %v72
  %v74 = vsel %vm66, %v65, 0.0
  %v75 = vrot.slane %v74, 4
  %v76 = vadd.f32 %v74, %v75
  %v77 = vrot.slane %v76, 2
  %v78 = vadd.f32 %v76, %v77
  %v79 = vrot.slane %v78, 1
  %v80 = vadd.f32 %v78, %v79
  %82 = vset.pattern.permute.xlu0 0
  %83 = vperm.xlu0 %82, %v46
  %v84 = vpop.permute.xlu0 %83
  %v86 = vrcp.pop %v84
  %v87 = vmul.f32 %v73, %v86
  %v88 = vmul.f32 %v80, %v86
  %v89 = vld [vmem:[%s3] sm:$0xff]
  %v90 = vld [vmem:[%s3 + $0x8] sm:$0xff]
  %v91 = vld [vmem:[%s3 + $0x10] sm:$0xff]
  %v92 = vld [vmem:[%s3 + $0x18] sm:$0xff]
  %v93 = vld [vmem:[%s3 + $0x20] sm:$0xff]
  %v94 = vld [vmem:[%s3 + $0x28] sm:$0xff]
  %v95 = vld [vmem:[%s3 + $0x30] sm:$0xff]
  %v96 = vld [vmem:[%s3 + $0x38] sm:$0xff]
  %v97 = vld [vmem:[%s3 + $0x40] sm:$0xff]
  %v98 = vld [vmem:[%s3 + $0x48] sm:$0xff]
  %v99 = vld [vmem:[%s3 + $0x50] sm:$0xff]
  %v100 = vld [vmem:[%s3 + $0x58] sm:$0xff]
  %v101 = vld [vmem:[%s3 + $0x60] sm:$0xff]
  %v102 = vld [vmem:[%s3 + $0x68] sm:$0xff]
  %v103 = vld [vmem:[%s3 + $0x70] sm:$0xff]
  %v104 = vld [vmem:[%s3 + $0x78] sm:$0xff]
  %v105 = vld [vmem:[%s3 + $0x80] sm:$0xff]
  %v106 = vld [vmem:[%s3 + $0x88] sm:$0xff]
  %v107 = vld [vmem:[%s3 + $0x90] sm:$0xff]
  %v108 = vld [vmem:[%s3 + $0x98] sm:$0xff]
  %v109 = vld [vmem:[%s3 + $0xa0] sm:$0xff]
  %v110 = vld [vmem:[%s3 + $0xa8] sm:$0xff]
  %v111 = vld [vmem:[%s3 + $0xb0] sm:$0xff]
  %v112 = vld [vmem:[%s3 + $0xb8] sm:$0xff]
  %v113 = vld [vmem:[%s3 + $0xc0] sm:$0xff]
  %v114 = vld [vmem:[%s3 + $0xc8] sm:$0xff]
  %v115 = vld [vmem:[%s3 + $0xd0] sm:$0xff]
  %v116 = vld [vmem:[%s3 + $0xd8] sm:$0xff]
  %v117 = vld [vmem:[%s3 + $0xe0] sm:$0xff]
  %v118 = vld [vmem:[%s3 + $0xe8] sm:$0xff]
  %v119 = vld [vmem:[%s3 + $0xf0] sm:$0xff]
  %v120 = vld [vmem:[%s3 + $0xf8] sm:$0xff]
  %v121 = vld [vmem:[%s4] sm:$0x1]
  %122 = vmatprep.subr.mxu0 0.0
  %123 = vmatpush1.msra.mxu0 %v89
  %124 = vmatprep.subr.mxu0 0.0
  %125 = vmatpush1.msra.mxu0 %v90
  %126 = vmatprep.subr.mxu0 0.0
  %127 = vmatpush1.msra.mxu0 %v91
  %128 = vmatprep.subr.mxu0 0.0
  %129 = vmatpush1.msra.mxu0 %v92
  %130 = vmatprep.subr.mxu0 0.0
  %131 = vmatpush1.msra.mxu0 %v93
  %132 = vmatprep.subr.mxu0 0.0
  %133 = vmatpush1.msra.mxu0 %v94
  %134 = vmatprep.subr.mxu0 0.0
  %135 = vmatpush1.msra.mxu0 %v95
  %136 = vmatprep.subr.mxu0 0.0
  %137 = vmatpush1.msra.mxu0 %v96
  %138 = vmatprep.subr.mxu0 0.0
  %139 = vmatpush1.msra.mxu0 %v97
  %140 = vmatprep.subr.mxu0 0.0
  %141 = vmatpush1.msra.mxu0 %v98
  %142 = vmatprep.subr.mxu0 0.0
  %143 = vmatpush1.msra.mxu0 %v99
  %144 = vmatprep.subr.mxu0 0.0
  %145 = vmatpush1.msra.mxu0 %v100
  %146 = vmatprep.subr.mxu0 0.0
  %147 = vmatpush1.msra.mxu0 %v101
  %148 = vmatprep.subr.mxu0 0.0
  %149 = vmatpush1.msra.mxu0 %v102
  %150 = vmatprep.subr.mxu0 0.0
  %151 = vmatpush1.msra.mxu0 %v103
  %152 = vmatprep.subr.mxu0 0.0
  %153 = vmatpush1.msra.mxu0 %v104
  %154 = vmatprep.subr.mxu0 0.0
  %155 = vmatpush1.msra.mxu0 %v105
  %156 = vmatprep.subr.mxu0 0.0
  %157 = vmatpush1.msra.mxu0 %v106
  %158 = vmatprep.subr.mxu0 0.0
  %159 = vmatpush1.msra.mxu0 %v107
  %160 = vmatprep.subr.mxu0 0.0
  %161 = vmatpush1.msra.mxu0 %v108
  %162 = vmatprep.subr.mxu0 0.0
  %163 = vmatpush1.msra.mxu0 %v109
  %164 = vmatprep.subr.mxu0 0.0
  %165 = vmatpush1.msra.mxu0 %v110
  %166 = vmatprep.subr.mxu0 0.0
  %167 = vmatpush1.msra.mxu0 %v111
  %168 = vmatprep.subr.mxu0 0.0
  %169 = vmatpush1.msra.mxu0 %v112
  %170 = vmatprep.subr.mxu0 0.0
  %171 = vmatpush1.msra.mxu0 %v113
  %172 = vmatprep.subr.mxu0 0.0
  %173 = vmatpush1.msra.mxu0 %v114
  %174 = vmatprep.subr.mxu0 0.0
  %175 = vmatpush1.msra.mxu0 %v115
  %176 = vmatprep.subr.mxu0 0.0
  %177 = vmatpush1.msra.mxu0 %v116
  %178 = vmatprep.subr.mxu0 0.0
  %179 = vmatpush1.msra.mxu0 %v117
  %180 = vmatprep.subr.mxu0 0.0
  %181 = vmatpush1.msra.mxu0 %v118
  %182 = vmatprep.subr.mxu0 0.0
  %183 = vmatpush1.msra.mxu0 %v119
  %184 = vmatprep.subr.mxu0 0.0
  %185 = vmatpush1.msra.mxu0 %v120
  %186 = vmatprep.mubr.f32.mxu0 %v88
  %187 = vmatmul.mubr.f32.gmra.mrb[0].mxu0 %v87
  %v188 = vpop.f32.mrb[0].mxu0
  %v189 = vadd.f32 %v121, %v188
  %v190 = vpop.f32.mrb[0].mxu0
  %191 = vdwg.mxu0
  %v192 = vmax.f32 %v189, 0.0
  %v193 = vld [vmem:[%s5] sm:$0xff]
  %v194 = vld [vmem:[%s5 + $0x8] sm:$0xff]
  %v195 = vld [vmem:[%s5 + $0x10] sm:$0xff]
  %v196 = vld [vmem:[%s5 + $0x18] sm:$0xff]
  %v197 = vld [vmem:[%s5 + $0x20] sm:$0xff]
  %v198 = vld [vmem:[%s5 + $0x28] sm:$0xff]
  %v199 = vld [vmem:[%s5 + $0x30] sm:$0xff]
  %v200 = vld [vmem:[%s5 + $0x38] sm:$0xff]
  %v201 = vld [vmem:[%s5 + $0x40] sm:$0xff]
  %v202 = vld [vmem:[%s5 + $0x48] sm:$0xff]
  %v203 = vld [vmem:[%s5 + $0x50] sm:$0xff]
  %v204 = vld [vmem:[%s5 + $0x58] sm:$0xff]
  %v205 = vld [vmem:[%s5 + $0x60] sm:$0xff]
  %v206 = vld [vmem:[%s5 + $0x68] sm:$0xff]
  %v207 = vld [vmem:[%s5 + $0x70] sm:$0xff]
  %v208 = vld [vmem:[%s5 + $0x78] sm:$0xff]
  %v209 = vld [vmem:[%s6] sm:$0x1]
  %210 = vmatprep.subr.mxu0 0.0
  %211 = vmatpush1.msra.mxu0 %v193
  %212 = vmatprep.subr.mxu0 0.0
  %213 = vmatpush1.msra.mxu0 %v194
  %214 = vmatprep.subr.mxu0 0.0
  %215 = vmatpush1.msra.mxu0 %v195
  %216 = vmatprep.subr.mxu0 0.0
  %217 = vmatpush1.msra.mxu0 %v196
  %218 = vmatprep.subr.mxu0 0.0
  %219 = vmatpush1.msra.mxu0 %v197
  %220 = vmatprep.subr.mxu0 0.0
  %221 = vmatpush1.msra.mxu0 %v198
  %222 = vmatprep.subr.mxu0 0.0
  %223 = vmatpush1.msra.mxu0 %v199
  %224 = vmatprep.subr.mxu0 0.0
  %225 = vmatpush1.msra.mxu0 %v200
  %226 = vmatprep.subr.mxu0 0.0
  %227 = vmatpush1.msra.mxu0 %v201
  %228 = vmatprep.subr.mxu0 0.0
  %229 = vmatpush1.msra.mxu0 %v202
  %230 = vmatprep.subr.mxu0 0.0
  %231 = vmatpush1.msra.mxu0 %v203
  %232 = vmatprep.subr.mxu0 0.0
  %233 = vmatpush1.msra.mxu0 %v204
  %234 = vmatprep.subr.mxu0 0.0
  %235 = vmatpush1.msra.mxu0 %v205
  %236 = vmatprep.subr.mxu0 0.0
  %237 = vmatpush1.msra.mxu0 %v206
  %238 = vmatprep.subr.mxu0 0.0
  %239 = vmatpush1.msra.mxu0 %v207
  %240 = vmatprep.subr.mxu0 0.0
  %241 = vmatpush1.msra.mxu0 %v208
  %242 = vmatprep.subr.mxu0 0.0
  %243 = vmatpush1.msra.mxu0 0.0
  %244 = vmatprep.subr.mxu0 0.0
  %245 = vmatpush1.msra.mxu0 0.0
  %246 = vmatprep.subr.mxu0 0.0
  %247 = vmatpush1.msra.mxu0 0.0
  %248 = vmatprep.subr.mxu0 0.0
  %249 = vmatpush1.msra.mxu0 0.0
  %250 = vmatprep.subr.mxu0 0.0
  %251 = vmatpush1.msra.mxu0 0.0
  %252 = vmatprep.subr.mxu0 0.0
  %253 = vmatpush1.msra.mxu0 0.0
  %254 = vmatprep.subr.mxu0 0.0
  %255 = vmatpush1.msra.mxu0 0.0
  %256 = vmatprep.subr.mxu0 0.0
  %257 = vmatpush1.msra.mxu0 0.0
  %258 = vmatprep.subr.mxu0 0.0
  %259 = vmatpush1.msra.mxu0 0.0
  %260 = vmatprep.subr.mxu0 0.0
  %261 = vmatpush1.msra.mxu0 0.0
  %262 = vmatprep.subr.mxu0 0.0
  %263 = vmatpush1.msra.mxu0 0.0
  %264 = vmatprep.subr.mxu0 0.0
  %265 = vmatpush1.msra.mxu0 0.0
  %266 = vmatprep.subr.mxu0 0.0
  %267 = vmatpush1.msra.mxu0 0.0
  %268 = vmatprep.subr.mxu0 0.0
  %269 = vmatpush1.msra.mxu0 0.0
  %270 = vmatprep.subr.mxu0 0.0
  %271 = vmatpush1.msra.mxu0 0.0
  %272 = vmatprep.subr.mxu0 0.0
  %273 = vmatpush1.msra.mxu0 0.0
  %274 = vmatprep.mubr.f32.mxu0 0.0
  %275 = vmatmul.mubr.f32.gmra.mrb[0].mxu0 %v192
  %v276 = vpop.f32.mrb[0].mxu0
  %v277 = vadd.f32 %v209, %v276
  %v278 = vpop.f32.mrb[0].mxu0
  %279 = vdwg.mxu0
  %vm280 = vcmask 8192
  %281 = vst.msk [vmem:[%s7] sm:$0x1] %vm280, %v277
  // Predicated region
  $region30: #{clam_sb_forward.3} parent=0 // pred_check
    _
  $region31: #{clam_sb_forward.3} parent=0 // pred_check_branch
    %283 = sbr.rel (0) target = $region33
  $region32: #{clam_sb_forward.3} parent=0 // pred_region
    _
  $region33: #{clam_sb_forward.3} parent=0 // pred_fallthru
    _
  // Predicated region
  $region34: #{clam_sb_forward.3} parent=0 // pred_check
    _
  $region35: #{clam_sb_forward.3} parent=0 // pred_check_branch
    %285 = sbr.rel (0) target = $region37
  $region36: #{clam_sb_forward.3} parent=0 // pred_region
    _
  $region37: #{clam_sb_forward.3} parent=0 // pred_fallthru
    _

// kernel: clam_sb_forward.2
$region0: #{clam_sb_forward.2}
  #allocation0 [shape = 'u32[]', space=smem, size = 0x4, offset = 0x4, fixed_abs, tag = 'smem constant byte address 0x4 - core index']
  #allocation1 [shape = 'u32[144,128]{1,0:T(1,128)}', space=vmem, size = 0x12000, scoped, tag = 'internal scratch']
  #allocation2 [shape = 'f32[1,1]{1,0:T(1,128)S(1)}', space=vmem, size = 0x200, scoped, tag = 'scoped memory for clam_sb_forward.2']
  %s0 = inlined_call_operand.vmem [shape: bf16[1024,256], index: 0, kind: input, shape index: {}]
  %s1 = inlined_call_operand.vmem [shape: bf16[256,256], index: 1, kind: input, shape index: {}]
  %s2 = inlined_call_operand.vmem [shape: f32[1,256], index: 2, kind: input, shape index: {}]
  %s3 = inlined_call_operand.vmem [shape: bf16[256,256], index: 3, kind: input, shape index: {}]
  %s4 = inlined_call_operand.vmem [shape: f32[1,256], index: 4, kind: input, shape index: {}]
  %s5 = inlined_call_operand.vmem [shape: f32[1,128], index: 5, kind: input, shape index: {}]
  %s6 = inlined_call_operand.<no memory space> [shape: f32[1,1], index: 6, kind: input, shape index: {}]
  %s7 = inlined_call_operand.vmem [shape: f32[1024,1], index: 7, kind: output, shape index: {0}]
  %s8 = inlined_call_operand.vmem [shape: f32[2,1,1], index: 8, kind: output, shape index: {1}]
  %s9 = inlined_call_operand.vmem [shape: f32[2,1,1], index: 9, kind: output, shape index: {2}]
  %s10 = inlined_call_operand.vmem [shape: f32[2,1,256], index: 10, kind: output, shape index: {3}]
  %11 = xla_tuple %s7, %s8, %s9, %s10
  %s12 = sld [smem:[#allocation0]]
  $region89: #{clam_sb_forward.2} parent=0
    _
  %s14 = ssub.s32 1, %s12
  %s15 = scalar_select 0, %s14, %s12
  %v16 = vstv %s6
  %17 = vst [vmem:[#allocation2] sm:$0x1] %v16
  loop: start=0, step=1, limit=6
  $region2: #{clam_sb_forward.2} parent=0 // loop_pre_header
    _
  $region3: #{clam_sb_forward.2} parent=0 // loop_header
    %s19 = sphi 0, %s23
    %p20 = scmp.ge.s32.totalorder %s19, 6
    %s26 = sphi 0, %s38
    %s27 = sphi 0, %s34
    %s28 = sphi 0, %s26
    %s29 = sphi 0, %s27
    %s30 = sphi 0, %s28
    %s31 = sphi 0, %s29
    %s45 = sphi 0, %s47
    %s48 = sphi 0, %s45
    %s49 = sphi 0, %s48
    %s65 = sphi 0, %s49
    %s69 = sphi 0, %s69
    %s71 = sphi 0, %s69
    %s72 = sphi 0, %s71
    %s86 = sphi 0, %s72
    %s90 = sphi 0, %s90
    %s92 = sphi 0, %s90
    %s93 = sphi 0, %s92
    %s107 = sphi 0, %s93
    %s111 = sphi 0, %s111
    %s113 = sphi 0, %s111
    %s114 = sphi 0, %s113
    %s128 = sphi 0, %s114
    %s132 = sphi 0, %s132
    %s134 = sphi 0, %s132
    %s135 = sphi 0, %s134
    %s149 = sphi 0, %s135
    %s153 = sphi 0, %s153
    %s155 = sphi 0, %s153
    %s156 = sphi 0, %s155
    %s170 = sphi 0, %s156
    %s174 = sphi 0, %s174
    %s176 = sphi 0, %s174
    %s177 = sphi 0, %s176
    %s191 = sphi 0, %s177
    %s201 = sphi 0, %s203
    %s204 = sphi 0, %s201
    %s205 = sphi 0, %s204
    %s221 = sphi 0, %s205
    %s227 = sphi 0, %s229
    %s230 = sphi 0, %s227
    %s231 = sphi 0, %s230
    %s247 = sphi 0, %s231
    %s253 = sphi 0, %s255
    %s256 = sphi 0, %s253
    %s257 = sphi 0, %s256
    %s273 = sphi 0, %s257
    %s279 = sphi 0, %s281
    %s282 = sphi 0, %s279
    %s283 = sphi 0, %s282
    %s299 = sphi 0, %s283
  $region4: #{clam_sb_forward.2} parent=0 // loop_header_branch
    %22 = sbr.rel (%p20) target = $region8
  $region5: #{clam_sb_forward.2} parent=0 // loop_body
    %s24 = ssub.s32 %s19, 1
    %s25 = ssub.s32 %s19, 2
    %s32 = sadd.s32 1, %s27
    %p33 = scmp.ge.s32.totalorder %s32, 2
    %s34 = scalar_select %p33, 0, %s32
    %s35 = sadd.s32 1, %s26
    %s36 = scalar_select %p33, %s35, %s26
    %p37 = scmp.ge.s32.totalorder %s36, 2
    %s38 = scalar_select %p37, 0, %s36
    %s39 = smul.u32 %s26, 2
    %s40 = sadd.s32 %s39, %s27
    %s41 = smul.u32 %s38, 2
    %s42 = sadd.s32 %s41, %s34
    %s43 = ssub.s32 %s40, %s42
    %p44 = scmp.eq.s32.totalorder %s43, 0
    %s46 = sadd.s32 %s45, 1
    %s47 = scalar_select %p44, %s45, %s46
    %p50 = pneg %p44
    %p51 = scmp.eq.s32.totalorder %s19, 3
    %p52 = por %p50, %p51
    %p53 = scmp.ne.s32.totalorder %s45, %s48
    %p54 = scmp.eq.s32.totalorder %s19, 0
    %p55 = por %p53, %p54
    %p56 = scmp.ne.s32.totalorder %s45, %s48
    %p57 = scmp.eq.s32.totalorder %s24, 3
    %p58 = por %p56, %p57
    %p59 = scmp.ne.s32.totalorder %s48, %s49
    %p60 = scmp.eq.s32.totalorder %s24, 0
    %p61 = por %p59, %p60
    %p62 = scmp.ne.s32.totalorder %s48, %s49
    %p63 = scmp.eq.s32.totalorder %s25, 3
    %p64 = por %p62, %p63
    %p66 = scmp.ne.s32.totalorder %s49, %s65
    %p67 = scmp.eq.s32.totalorder %s25, 0
    %p68 = por %p66, %p67
    %s70 = sadd.s32 %s69, 1
    %p73 = scmp.eq.s32.totalorder %s19, 3
    %p74 = scmp.ne.s32.totalorder %s69, %s71
    %p75 = scmp.eq.s32.totalorder %s19, 0
    %p76 = por %p74, %p75
    %p77 = scmp.ne.s32.totalorder %s69, %s71
    %p78 = scmp.eq.s32.totalorder %s24, 3
    %p79 = por %p77, %p78
    %p80 = scmp.ne.s32.totalorder %s71, %s72
    %p81 = scmp.eq.s32.totalorder %s24, 0
    %p82 = por %p80, %p81
    %p83 = scmp.ne.s32.totalorder %s71, %s72
    %p84 = scmp.eq.s32.totalorder %s25, 3
    %p85 = por %p83, %p84
    %p87 = scmp.ne.s32.totalorder %s72, %s86
    %p88 = scmp.eq.s32.totalorder %s25, 0
    %p89 = por %p87, %p88
    %s91 = sadd.s32 %s90, 1
    %p94 = scmp.eq.s32.totalorder %s19, 3
    %p95 = scmp.ne.s32.totalorder %s90, %s92
    %p96 = scmp.eq.s32.totalorder %s19, 0
    %p97 = por %p95, %p96
    %p98 = scmp.ne.s32.totalorder %s90, %s92
    %p99 = scmp.eq.s32.totalorder %s24, 3
    %p100 = por %p98, %p99
    %p101 = scmp.ne.s32.totalorder %s92, %s93
    %p102 = scmp.eq.s32.totalorder %s24, 0
    %p103 = por %p101, %p102
    %p104 = scmp.ne.s32.totalorder %s92, %s93
    %p105 = scmp.eq.s32.totalorder %s25, 3
    %p106 = por %p104, %p105
    %p108 = scmp.ne.s32.totalorder %s93, %s107
    %p109 = scmp.eq.s32.totalorder %s25, 0
    %p110 = por %p108, %p109
    %s112 = sadd.s32 %s111, 1
    %p115 = scmp.eq.s32.totalorder %s19, 3
    %p116 = scmp.ne.s32.totalorder %s111, %s113
    %p117 = scmp.eq.s32.totalorder %s19, 0
    %p118 = por %p116, %p117
    %p119 = scmp.ne.s32.totalorder %s111, %s113
    %p120 = scmp.eq.s32.totalorder %s24, 3
    %p121 = por %p119, %p120
    %p122 = scmp.ne.s32.totalorder %s113, %s114
    %p123 = scmp.eq.s32.totalorder %s24, 0
    %p124 = por %p122, %p123
    %p125 = scmp.ne.s32.totalorder %s113, %s114
    %p126 = scmp.eq.s32.totalorder %s25, 3
    %p127 = por %p125, %p126
    %p129 = scmp.ne.s32.totalorder %s114, %s128
    %p130 = scmp.eq.s32.totalorder %s25, 0
    %p131 = por %p129, %p130
    %s133 = sadd.s32 %s132, 1
    %p136 = scmp.eq.s32.totalorder %s19, 3
    %p137 = scmp.ne.s32.totalorder %s132, %s134
    %p138 = scmp.eq.s32.totalorder %s19, 0
    %p139 = por %p137, %p138
    %p140 = scmp.ne.s32.totalorder %s132, %s134
    %p141 = scmp.eq.s32.totalorder %s24, 3
    %p142 = por %p140, %p141
    %p143 = scmp.ne.s32.totalorder %s134, %s135
    %p144 = scmp.eq.s32.totalorder %s24, 0
    %p145 = por %p143, %p144
    %p146 = scmp.ne.s32.totalorder %s134, %s135
    %p147 = scmp.eq.s32.totalorder %s25, 3
    %p148 = por %p146, %p147
    %p150 = scmp.ne.s32.totalorder %s135, %s149
    %p151 = scmp.eq.s32.totalorder %s25, 0
    %p152 = por %p150, %p151
    %s154 = sadd.s32 %s153, 1
    %p157 = scmp.eq.s32.totalorder %s19, 3
    %p158 = scmp.ne.s32.totalorder %s153, %s155
    %p159 = scmp.eq.s32.totalorder %s19, 0
    %p160 = por %p158, %p159
    %p161 = scmp.ne.s32.totalorder %s153, %s155
    %p162 = scmp.eq.s32.totalorder %s24, 3
    %p163 = por %p161, %p162
    %p164 = scmp.ne.s32.totalorder %s155, %s156
    %p165 = scmp.eq.s32.totalorder %s24, 0
    %p166 = por %p164, %p165
    %p167 = scmp.ne.s32.totalorder %s155, %s156
    %p168 = scmp.eq.s32.totalorder %s25, 3
    %p169 = por %p167, %p168
    %p171 = scmp.ne.s32.totalorder %s156, %s170
    %p172 = scmp.eq.s32.totalorder %s25, 0
    %p173 = por %p171, %p172
    %s175 = sadd.s32 %s174, 1
    %p178 = scmp.eq.s32.totalorder %s19, 3
    %p179 = scmp.ne.s32.totalorder %s174, %s176
    %p180 = scmp.eq.s32.totalorder %s19, 0
    %p181 = por %p179, %p180
    %p182 = scmp.ne.s32.totalorder %s174, %s176
    %p183 = scmp.eq.s32.totalorder %s24, 3
    %p184 = por %p182, %p183
    %p185 = scmp.ne.s32.totalorder %s176, %s177
    %p186 = scmp.eq.s32.totalorder %s24, 0
    %p187 = por %p185, %p186
    %p188 = scmp.ne.s32.totalorder %s176, %s177
    %p189 = scmp.eq.s32.totalorder %s25, 3
    %p190 = por %p188, %p189
    %p192 = scmp.ne.s32.totalorder %s177, %s191
    %p193 = scmp.eq.s32.totalorder %s25, 0
    %p194 = por %p192, %p193
    %s195 = smul.u32 %s26, 2
    %s196 = sadd.s32 %s195, %s27
    %s197 = smul.u32 %s38, 2
    %s198 = sadd.s32 %s197, %s34
    %s199 = ssub.s32 %s196, %s198
    %p200 = scmp.eq.s32.totalorder %s199, 0
    %s202 = sadd.s32 %s201, 1
    %s203 = scalar_select %p200, %s201, %s202
    %p206 = pneg %p200
    %p207 = scmp.eq.s32.totalorder %s19, 3
    %p208 = por %p206, %p207
    %p209 = scmp.ne.s32.totalorder %s201, %s204
    %p210 = scmp.eq.s32.totalorder %s19, 0
    %p211 = por %p209, %p210
    %p212 = scmp.ne.s32.totalorder %s201, %s204
    %p213 = scmp.eq.s32.totalorder %s24, 3
    %p214 = por %p212, %p213
    %p215 = scmp.ne.s32.totalorder %s204, %s205
    %p216 = scmp.eq.s32.totalorder %s24, 0
    %p217 = por %p215, %p216
    %p218 = scmp.ne.s32.totalorder %s204, %s205
    %p219 = scmp.eq.s32.totalorder %s25, 3
    %p220 = por %p218, %p219
    %p222 = scmp.ne.s32.totalorder %s205, %s221
    %p223 = scmp.eq.s32.totalorder %s25, 0
    %p224 = por %p222, %p223
    %s225 = ssub.s32 %s26, %s38
    %p226 = scmp.eq.s32.totalorder %s225, 0
    %s228 = sadd.s32 %s227, 1
    %s229 = scalar_select %p226, %s227, %s228
    %p232 = pneg %p226
    %p233 = scmp.eq.s32.totalorder %s19, 3
    %p234 = por %p232, %p233
    %p235 = scmp.ne.s32.totalorder %s227, %s230
    %p236 = scmp.eq.s32.totalorder %s19, 0
    %p237 = por %p235, %p236
    %p238 = scmp.ne.s32.totalorder %s227, %s230
    %p239 = scmp.eq.s32.totalorder %s24, 3
    %p240 = por %p238, %p239
    %p241 = scmp.ne.s32.totalorder %s230, %s231
    %p242 = scmp.eq.s32.totalorder %s24, 0
    %p243 = por %p241, %p242
    %p244 = scmp.ne.s32.totalorder %s230, %s231
    %p245 = scmp.eq.s32.totalorder %s25, 3
    %p246 = por %p244, %p245
    %p248 = scmp.ne.s32.totalorder %s231, %s247
    %p249 = scmp.eq.s32.totalorder %s25, 0
    %p250 = por %p248, %p249
    %s251 = ssub.s32 %s26, %s38
    %p252 = scmp.eq.s32.totalorder %s251, 0
    %s254 = sadd.s32 %s253, 1
    %s255 = scalar_select %p252, %s253, %s254
    %p258 = pneg %p252
    %p259 = scmp.eq.s32.totalorder %s19, 3
    %p260 = por %p258, %p259
    %p261 = scmp.ne.s32.totalorder %s253, %s256
    %p262 = scmp.eq.s32.totalorder %s19, 0
    %p263 = por %p261, %p262
    %p264 = scmp.ne.s32.totalorder %s253, %s256
    %p265 = scmp.eq.s32.totalorder %s24, 3
    %p266 = por %p264, %p265
    %p267 = scmp.ne.s32.totalorder %s256, %s257
    %p268 = scmp.eq.s32.totalorder %s24, 0
    %p269 = por %p267, %p268
    %p270 = scmp.ne.s32.totalorder %s256, %s257
    %p271 = scmp.eq.s32.totalorder %s25, 3
    %p272 = por %p270, %p271
    %p274 = scmp.ne.s32.totalorder %s257, %s273
    %p275 = scmp.eq.s32.totalorder %s25, 0
    %p276 = por %p274, %p275
    %s277 = ssub.s32 %s26, %s38
    %p278 = scmp.eq.s32.totalorder %s277, 0
    %s280 = sadd.s32 %s279, 1
    %s281 = scalar_select %p278, %s279, %s280
    %p284 = pneg %p278
    %p285 = scmp.eq.s32.totalorder %s19, 3
    %p286 = por %p284, %p285
    %p287 = scmp.ne.s32.totalorder %s279, %s282
    %p288 = scmp.eq.s32.totalorder %s19, 0
    %p289 = por %p287, %p288
    %p290 = scmp.ne.s32.totalorder %s279, %s282
    %p291 = scmp.eq.s32.totalorder %s24, 3
    %p292 = por %p290, %p291
    %p293 = scmp.ne.s32.totalorder %s282, %s283
    %p294 = scmp.eq.s32.totalorder %s24, 0
    %p295 = por %p293, %p294
    %p296 = scmp.ne.s32.totalorder %s282, %s283
    %p297 = scmp.eq.s32.totalorder %s25, 3
    %p298 = por %p296, %p297
    %p300 = scmp.ne.s32.totalorder %s283, %s299
    %p301 = scmp.eq.s32.totalorder %s25, 0
    %p302 = por %p300, %p301
    %p303 = scmp.le.s32.totalorder 1, %s19
    %p304 = scmp.lt.s32.totalorder %s19, 5
    %p305 = pnand %p303, %p304
    %p306 = pneg %p305
    // Predicated region
    $region9: #{clam_sb_forward.2} parent=5 // pred_check
      _
    $region10: #{clam_sb_forward.2} parent=5 // pred_check_branch
      %308 = sbr.rel (%p305) target = $region12
    $region11: #{clam_sb_forward.2} parent=5 // pred_region
      %s309 = ssub.s32 %s19, 1
      // Predicated region
      $region13: #{clam_sb_forward.2} parent=11 // pred_check
        %p310 = pneg %p82
      $region14: #{clam_sb_forward.2} parent=11 // pred_check_branch
        %312 = sbr.rel (%p310) target = $region16
      $region15: #{clam_sb_forward.2} parent=11 // pred_region
        _
      $region16: #{clam_sb_forward.2} parent=11 // pred_fallthru
        _
      // Predicated region
      $region17: #{clam_sb_forward.2} parent=11 // pred_check
        %p313 = pneg %p103
      $region18: #{clam_sb_forward.2} parent=11 // pred_check_branch
        %315 = sbr.rel (%p313) target = $region20
      $region19: #{clam_sb_forward.2} parent=11 // pred_region
        _
      $region20: #{clam_sb_forward.2} parent=11 // pred_fallthru
        _
      // Predicated region
      $region21: #{clam_sb_forward.2} parent=11 // pred_check
        %p316 = pneg %p124
      $region22: #{clam_sb_forward.2} parent=11 // pred_check_branch
        %318 = sbr.rel (%p316) target = $region24
      $region23: #{clam_sb_forward.2} parent=11 // pred_region
        _
      $region24: #{clam_sb_forward.2} parent=11 // pred_fallthru
        _
      // Predicated region
      $region25: #{clam_sb_forward.2} parent=11 // pred_check
        %p319 = pneg %p145
      $region26: #{clam_sb_forward.2} parent=11 // pred_check_branch
        %321 = sbr.rel (%p319) target = $region28
      $region27: #{clam_sb_forward.2} parent=11 // pred_region
        _
      $region28: #{clam_sb_forward.2} parent=11 // pred_fallthru
        _
      // Predicated region
      $region29: #{clam_sb_forward.2} parent=11 // pred_check
        %p322 = pneg %p166
      $region30: #{clam_sb_forward.2} parent=11 // pred_check_branch
        %324 = sbr.rel (%p322) target = $region32
      $region31: #{clam_sb_forward.2} parent=11 // pred_region
        _
      $region32: #{clam_sb_forward.2} parent=11 // pred_fallthru
        _
      // Predicated region
      $region33: #{clam_sb_forward.2} parent=11 // pred_check
        %p325 = pneg %p187
      $region34: #{clam_sb_forward.2} parent=11 // pred_check_branch
        %327 = sbr.rel (%p325) target = $region36
      $region35: #{clam_sb_forward.2} parent=11 // pred_region
        _
      $region36: #{clam_sb_forward.2} parent=11 // pred_fallthru
        _
    $region12: #{clam_sb_forward.2} parent=5 // pred_fallthru
      _
    %p328 = scmp.lt.s32.totalorder %s19, 4
    // Predicated region
    $region37: #{clam_sb_forward.2} parent=5 // pred_check
      %p329 = pneg %p328
    $region38: #{clam_sb_forward.2} parent=5 // pred_check_branch
      %331 = sbr.rel (%p329) target = $region40
    $region39: #{clam_sb_forward.2} parent=5 // pred_region
      // Predicated region
      $region41: #{clam_sb_forward.2} parent=39 // pred_check
        %p332 = pneg %p55
      $region42: #{clam_sb_forward.2} parent=39 // pred_check_branch
        %334 = sbr.rel (%p332) target = $region44
      $region43: #{clam_sb_forward.2} parent=39 // pred_region
        %s335 = smul.u32 %s26, 2
        %s336 = sadd.s32 %s335, %s27
        %s337 = smul.u32 32, %s336
        %p338 = scmp.lt.s32.totalorder %s337, 127
        %s339 = scalar_select %p338, %s337, 127
        %s340 = smul.addr %s339, 2
        %s341 = smul.addr %s340, 4
        %s342 = scalar_lea.vmem %s0, %s341
        %s343 = smul.u32 %s26, 2
        %s344 = sadd.s32 %s343, %s27
        %s345 = smul.u32 32, %s344
      $region44: #{clam_sb_forward.2} parent=39 // pred_fallthru
        _
    $region40: #{clam_sb_forward.2} parent=5 // pred_fallthru
      _
    %p346 = scmp.le.s32.totalorder 1, %s19
    %p347 = scmp.lt.s32.totalorder %s19, 5
    %p348 = pnand %p346, %p347
    %p349 = pneg %p348
    // Predicated region
    $region45: #{clam_sb_forward.2} parent=5 // pred_check
      _
    $region46: #{clam_sb_forward.2} parent=5 // pred_check_branch
      %351 = sbr.rel (%p348) target = $region48
    $region47: #{clam_sb_forward.2} parent=5 // pred_region
      %s352 = ssub.s32 %s19, 1
      %s353 = smul.u32 %s28, 2
      %s354 = sadd.s32 %s353, %s29
      %s355 = smul.u32 32, %s354
      %p356 = scmp.lt.s32.totalorder %s355, 127
      %s357 = scalar_select %p356, %s355, 127
      %s358 = smul.addr %s357, 2
      %s359 = smul.addr %s358, 4
      %s360 = scalar_lea.vmem %s0, %s359
      %p361 = pneg %p61
      %p362 = pneg %p58
      %p363 = pneg %p82
      %p364 = pneg %p79
      %p365 = pneg %p103
      %p366 = pneg %p100
      %p367 = pneg %p124
      %p368 = pneg %p121
      %p369 = pneg %p145
      %p370 = pneg %p142
      %p371 = pneg %p166
      %p372 = pneg %p163
      %p373 = pneg %p187
      %p374 = pneg %p184
      %p375 = pneg %p217
      %p376 = pneg %p214
      %s377 = smul.u32 %s28, 2
      %s378 = sadd.s32 %s377, %s29
      %s379 = smul.u32 32, %s378
      %p380 = scmp.lt.s32.totalorder %s379, 127
      %s381 = scalar_select %p380, %s379, 127
      %s382 = smul.addr %s381, 8
      %s383 = scalar_lea.vmem %s7, %s382
      %p384 = pneg %p243
      %p385 = pneg %p240
      %p386 = scmp.lt.s32.totalorder %s28, 1
      %s387 = scalar_select %p386, %s28, 1
      %s388 = scalar_lea.vmem %s8, %s387
      %p389 = pneg %p269
      %p390 = pneg %p266
      %p391 = scmp.lt.s32.totalorder %s28, 1
      %s392 = scalar_select %p391, %s28, 1
      %s393 = scalar_lea.vmem %s9, %s392
      %p394 = pneg %p295
      %p395 = pneg %p292
      %p396 = scmp.lt.s32.totalorder %s28, 1
      %s397 = scalar_select %p396, %s28, 1
      %s398 = smul.addr %s397, 2
      %s399 = scalar_lea.vmem %s10, %s398
      %s400 = smul.u32 %s28, 2
      %s401 = sadd.s32 %s400, %s29
      %s402 = smul.u32 32, %s401
      %p403 = scmp.lt.s32.totalorder %s402, 127
      %s404 = scalar_select %p403, %s402, 127
      %s405 = smul.addr %s404, 2
      %s406 = smul.addr %s405, 4
      %s407 = scalar_lea.vmem %s0, %s406
      %s408 = smul.u32 %s28, 2
      %s409 = sadd.s32 %s408, %s29
      %s410 = smul.u32 32, %s409
      %s411 = smul.u32 %s28, 2
      %s412 = sadd.s32 %s411, %s29
      %s413 = smul.u32 32, %s412
      %p414 = scmp.lt.s32.totalorder %s413, 127
      %s415 = scalar_select %p414, %s413, 127
      %s416 = smul.addr %s415, 8
      %s417 = scalar_lea.vmem %s7, %s416
      %s418 = smul.u32 %s28, 2
      %s419 = sadd.s32 %s418, %s29
      %s420 = smul.u32 32, %s419
      %p421 = scmp.lt.s32.totalorder %s28, 1
      %s422 = scalar_select %p421, %s28, 1
      %s423 = scalar_lea.vmem %s8, %s422
      %p424 = scmp.lt.s32.totalorder %s28, 1
      %s425 = scalar_select %p424, %s28, 1
      %s426 = scalar_lea.vmem %s9, %s425
      %p427 = scmp.lt.s32.totalorder %s28, 1
      %s428 = scalar_select %p427, %s28, 1
      %s429 = smul.addr %s428, 2
      %s430 = scalar_lea.vmem %s10, %s429
      %p431 = scmp.eq.s32.totalorder %s29, 0
      // Predicated region
      $region49: #{clam_sb_forward.2} parent=47 // pred_check
        %p432 = pneg %p431
      $region50: #{clam_sb_forward.2} parent=47 // pred_check_branch
        %434 = sbr.rel (%p432) target = $region52
      $region51: #{clam_sb_forward.2} parent=47 // pred_region
        %vm435 = vcmask 0
        %436 = vst.msk [vmem:[%s423] sm:$0x1] %vm435, -1e+30
        %437 = vst.msk [vmem:[%s426] sm:$0x1] %vm435, 0.0
        %v438 = vlaneseq
        %vm439 = vcmp.ge.s32.totalorder %v438, 0
        %vm440 = vcmp.lt.s32.totalorder %v438, 256
        %vm441 = vmand %vm439, %vm440
        %442 = vst.msk [vmem:[%s430] sm:$0x3] %vm441, 0.0
      $region52: #{clam_sb_forward.2} parent=47 // pred_fallthru
        _
      %v443 = vld [vmem:[%s407] sm:$0xff]
      %v444 = vld [vmem:[%s407 + $0x8] sm:$0xff]
      %v445 = vld [vmem:[%s407 + $0x10] sm:$0xff]
      %v446 = vld [vmem:[%s407 + $0x18] sm:$0xff]
      %v447 = vld [vmem:[%s407 + $0x20] sm:$0xff]
      %v448 = vld [vmem:[%s407 + $0x28] sm:$0xff]
      %v449 = vld [vmem:[%s407 + $0x30] sm:$0xff]
      %v450 = vld [vmem:[%s407 + $0x38] sm:$0xff]
      %v451 = vld [vmem:[%s407 + $0x40] sm:$0xff]
      %v452 = vld [vmem:[%s407 + $0x48] sm:$0xff]
      %v453 = vld [vmem:[%s407 + $0x50] sm:$0xff]
      %v454 = vld [vmem:[%s407 + $0x58] sm:$0xff]
      %v455 = vld [vmem:[%s407 + $0x60] sm:$0xff]
      %v456 = vld [vmem:[%s407 + $0x68] sm:$0xff]
      %v457 = vld [vmem:[%s407 + $0x70] sm:$0xff]
      %v458 = vld [vmem:[%s407 + $0x78] sm:$0xff]
      %v459 = vld [vmem:[%s407 + $0x80] sm:$0xff]
      %v460 = vld [vmem:[%s407 + $0x88] sm:$0xff]
      %v461 = vld [vmem:[%s407 + $0x90] sm:$0xff]
      %v462 = vld [vmem:[%s407 + $0x98] sm:$0xff]
      %v463 = vld [vmem:[%s407 + $0xa0] sm:$0xff]
      %v464 = vld [vmem:[%s407 + $0xa8] sm:$0xff]
      %v465 = vld [vmem:[%s407 + $0xb0] sm:$0xff]
      %v466 = vld [vmem:[%s407 + $0xb8] sm:$0xff]
      %v467 = vld [vmem:[%s407 + $0xc0] sm:$0xff]
      %v468 = vld [vmem:[%s407 + $0xc8] sm:$0xff]
      %v469 = vld [vmem:[%s407 + $0xd0] sm:$0xff]
      %v470 = vld [vmem:[%s407 + $0xd8] sm:$0xff]
      %v471 = vld [vmem:[%s407 + $0xe0] sm:$0xff]
      %v472 = vld [vmem:[%s407 + $0xe8] sm:$0xff]
      %v473 = vld [vmem:[%s407 + $0xf0] sm:$0xff]
      %v474 = vld [vmem:[%s407 + $0xf8] sm:$0xff]
      %v475 = vld [vmem:[%s1] sm:$0xff]
      %v476 = vld [vmem:[%s1 + $0x8] sm:$0xff]
      %v477 = vld [vmem:[%s1 + $0x10] sm:$0xff]
      %v478 = vld [vmem:[%s1 + $0x18] sm:$0xff]
      %v479 = vld [vmem:[%s1 + $0x20] sm:$0xff]
      %v480 = vld [vmem:[%s1 + $0x28] sm:$0xff]
      %v481 = vld [vmem:[%s1 + $0x30] sm:$0xff]
      %v482 = vld [vmem:[%s1 + $0x38] sm:$0xff]
      %v483 = vld [vmem:[%s1 + $0x40] sm:$0xff]
      %v484 = vld [vmem:[%s1 + $0x48] sm:$0xff]
      %v485 = vld [vmem:[%s1 + $0x50] sm:$0xff]
      %v486 = vld [vmem:[%s1 + $0x58] sm:$0xff]
      %v487 = vld [vmem:[%s1 + $0x60] sm:$0xff]
      %v488 = vld [vmem:[%s1 + $0x68] sm:$0xff]
      %v489 = vld [vmem:[%s1 + $0x70] sm:$0xff]
      %v490 = vld [vmem:[%s1 + $0x78] sm:$0xff]
      %v491 = vld [vmem:[%s1 + $0x80] sm:$0xff]
      %v492 = vld [vmem:[%s1 + $0x88] sm:$0xff]
      %v493 = vld [vmem:[%s1 + $0x90] sm:$0xff]
      %v494 = vld [vmem:[%s1 + $0x98] sm:$0xff]
      %v495 = vld [vmem:[%s1 + $0xa0] sm:$0xff]
      %v496 = vld [vmem:[%s1 + $0xa8] sm:$0xff]
      %v497 = vld [vmem:[%s1 + $0xb0] sm:$0xff]
      %v498 = vld [vmem:[%s1 + $0xb8] sm:$0xff]
      %v499 = vld [vmem:[%s1 + $0xc0] sm:$0xff]
      %v500 = vld [vmem:[%s1 + $0xc8] sm:$0xff]
      %v501 = vld [vmem:[%s1 + $0xd0] sm:$0xff]
      %v502 = vld [vmem:[%s1 + $0xd8] sm:$0xff]
      %v503 = vld [vmem:[%s1 + $0xe0] sm:$0xff]
      %v504 = vld [vmem:[%s1 + $0xe8] sm:$0xff]
      %v505 = vld [vmem:[%s1 + $0xf0] sm:$0xff]
      %v506 = vld [vmem:[%s1 + $0xf8] sm:$0xff]
      %v507 = vld [vmem:[%s2] sm:$0x3]
      %v509 = vlaneseq
      %v510 = vshrl.u32 %v509, 7
      %v511 = vsub.s32 0, %v510
      %v512 = vrot.slane %v507, %v511
      %v513 = vlaneseq
      %v514 = vshrl.u32 %v513, 7
      %v515 = vsub.s32 1, %v514
      %v516 = vrot.slane %v507, %v515
      %v551 = vunpack.c.l.b16 %v443
      %v552 = vunpack.c.h.b16 %v443
      %v553 = vunpack.c.l.b16 %v444
      %v554 = vunpack.c.h.b16 %v444
      %v555 = vunpack.c.l.b16 %v445
      %v556 = vunpack.c.h.b16 %v445
      %v557 = vunpack.c.l.b16 %v446
      %v558 = vunpack.c.h.b16 %v446
      %v559 = vunpack.c.l.b16 %v447
      %v560 = vunpack.c.h.b16 %v447
      %v561 = vunpack.c.l.b16 %v448
      %v562 = vunpack.c.h.b16 %v448
      %v563 = vunpack.c.l.b16 %v449
      %v564 = vunpack.c.h.b16 %v449
      %v565 = vunpack.c.l.b16 %v450
      %v566 = vunpack.c.h.b16 %v450
      %v567 = vunpack.c.l.b16 %v451
      %v568 = vunpack.c.h.b16 %v451
      %v569 = vunpack.c.l.b16 %v452
      %v570 = vunpack.c.h.b16 %v452
      %v571 = vunpack.c.l.b16 %v453
      %v572 = vunpack.c.h.b16 %v453
      %v573 = vunpack.c.l.b16 %v454
      %v574 = vunpack.c.h.b16 %v454
      %v575 = vunpack.c.l.b16 %v455
      %v576 = vunpack.c.h.b16 %v455
      %v577 = vunpack.c.l.b16 %v456
      %v578 = vunpack.c.h.b16 %v456
      %v579 = vunpack.c.l.b16 %v457
      %v580 = vunpack.c.h.b16 %v457
      %v581 = vunpack.c.l.b16 %v458
      %v582 = vunpack.c.h.b16 %v458
      %v583 = vunpack.c.l.b16 %v459
      %v584 = vunpack.c.h.b16 %v459
      %v585 = vunpack.c.l.b16 %v460
      %v586 = vunpack.c.h.b16 %v460
      %v587 = vunpack.c.l.b16 %v461
      %v588 = vunpack.c.h.b16 %v461
      %v589 = vunpack.c.l.b16 %v462
      %v590 = vunpack.c.h.b16 %v462
      %v591 = vunpack.c.l.b16 %v463
      %v592 = vunpack.c.h.b16 %v463
      %v593 = vunpack.c.l.b16 %v464
      %v594 = vunpack.c.h.b16 %v464
      %v595 = vunpack.c.l.b16 %v465
      %v596 = vunpack.c.h.b16 %v465
      %v597 = vunpack.c.l.b16 %v466
      %v598 = vunpack.c.h.b16 %v466
      %v599 = vunpack.c.l.b16 %v467
      %v600 = vunpack.c.h.b16 %v467
      %v601 = vunpack.c.l.b16 %v468
      %v602 = vunpack.c.h.b16 %v468
      %v603 = vunpack.c.l.b16 %v469
      %v604 = vunpack.c.h.b16 %v469
      %v605 = vunpack.c.l.b16 %v470
      %v606 = vunpack.c.h.b16 %v470
      %v607 = vunpack.c.l.b16 %v471
      %v608 = vunpack.c.h.b16 %v471
      %v609 = vunpack.c.l.b16 %v472
      %v610 = vunpack.c.h.b16 %v472
      %v611 = vunpack.c.l.b16 %v473
      %v612 = vunpack.c.h.b16 %v473
      %v613 = vunpack.c.l.b16 %v474
      %v614 = vunpack.c.h.b16 %v474
      %v615 = vpack.c.b16 %v553, %v551
      %v616 = vpack.c.b16 %v554, %v552
      %v617 = vpack.c.b16 %v557, %v555
      %v618 = vpack.c.b16 %v558, %v556
      %v619 = vpack.c.b16 %v561, %v559
      %v620 = vpack.c.b16 %v562, %v560
      %v621 = vpack.c.b16 %v565, %v563
      %v622 = vpack.c.b16 %v566, %v564
      %v623 = vpack.c.b16 %v569, %v567
      %v624 = vpack.c.b16 %v570, %v568
      %v625 = vpack.c.b16 %v573, %v571
      %v626 = vpack.c.b16 %v574, %v572
      %v627 = vpack.c.b16 %v577, %v575
      %v628 = vpack.c.b16 %v578, %v576
      %v629 = vpack.c.b16 %v581, %v579
      %v630 = vpack.c.b16 %v582, %v580
      %v631 = vpack.c.b16 %v585, %v583
      %v632 = vpack.c.b16 %v586, %v584
      %v633 = vpack.c.b16 %v589, %v587
      %v634 = vpack.c.b16 %v590, %v588
      %v635 = vpack.c.b16 %v593, %v591
      %v636 = vpack.c.b16 %v594, %v592
      %v637 = vpack.c.b16 %v597, %v595
      %v638 = vpack.c.b16 %v598, %v596
      %v639 = vpack.c.b16 %v601, %v599
      %v640 = vpack.c.b16 %v602, %v600
      %v641 = vpack.c.b16 %v605, %v603
      %v642 = vpack.c.b16 %v606, %v604
      %v643 = vpack.c.b16 %v609, %v607
      %v644 = vpack.c.b16 %v610, %v608
      %v645 = vpack.c.b16 %v613, %v611
      %v646 = vpack.c.b16 %v614, %v612
      %v711 = vunpack.c.l.b16 %v475
      %v712 = vunpack.c.h.b16 %v475
      %v713 = vunpack.c.l.b16 %v476
      %v714 = vunpack.c.h.b16 %v476
      %v715 = vunpack.c.l.b16 %v477
      %v716 = vunpack.c.h.b16 %v477
      %v717 = vunpack.c.l.b16 %v478
      %v718 = vunpack.c.h.b16 %v478
      %v719 = vunpack.c.l.b16 %v479
      %v720 = vunpack.c.h.b16 %v479
      %v721 = vunpack.c.l.b16 %v480
      %v722 = vunpack.c.h.b16 %v480
      %v723 = vunpack.c.l.b16 %v481
      %v724 = vunpack.c.h.b16 %v481
      %v725 = vunpack.c.l.b16 %v482
      %v726 = vunpack.c.h.b16 %v482
      %v727 = vunpack.c.l.b16 %v483
      %v728 = vunpack.c.h.b16 %v483
      %v729 = vunpack.c.l.b16 %v484
      %v730 = vunpack.c.h.b16 %v484
      %v731 = vunpack.c.l.b16 %v485
      %v732 = vunpack.c.h.b16 %v485
      %v733 = vunpack.c.l.b16 %v486
      %v734 = vunpack.c.h.b16 %v486
      %v735 = vunpack.c.l.b16 %v487
      %v736 = vunpack.c.h.b16 %v487
      %v737 = vunpack.c.l.b16 %v488
      %v738 = vunpack.c.h.b16 %v488
      %v739 = vunpack.c.l.b16 %v489
      %v740 = vunpack.c.h.b16 %v489
      %v741 = vunpack.c.l.b16 %v490
      %v742 = vunpack.c.h.b16 %v490
      %v743 = vunpack.c.l.b16 %v491
      %v744 = vunpack.c.h.b16 %v491
      %v745 = vunpack.c.l.b16 %v492
      %v746 = vunpack.c.h.b16 %v492
      %v747 = vunpack.c.l.b16 %v493
      %v748 = vunpack.c.h.b16 %v493
      %v749 = vunpack.c.l.b16 %v494
      %v750 = vunpack.c.h.b16 %v494
      %v751 = vunpack.c.l.b16 %v495
      %v752 = vunpack.c.h.b16 %v495
      %v753 = vunpack.c.l.b16 %v496
      %v754 = vunpack.c.h.b16 %v496
      %v755 = vunpack.c.l.b16 %v497
      %v756 = vunpack.c.h.b16 %v497
      %v757 = vunpack.c.l.b16 %v498
      %v758 = vunpack.c.h.b16 %v498
      %v759 = vunpack.c.l.b16 %v499
      %v760 = vunpack.c.h.b16 %v499
      %v761 = vunpack.c.l.b16 %v500
      %v762 = vunpack.c.h.b16 %v500
      %v763 = vunpack.c.l.b16 %v501
      %v764 = vunpack.c.h.b16 %v501
      %v765 = vunpack.c.l.b16 %v502
      %v766 = vunpack.c.h.b16 %v502
      %v767 = vunpack.c.l.b16 %v503
      %v768 = vunpack.c.h.b16 %v503
      %v769 = vunpack.c.l.b16 %v504
      %v770 = vunpack.c.h.b16 %v504
      %v771 = vunpack.c.l.b16 %v505
      %v772 = vunpack.c.h.b16 %v505
      %v773 = vunpack.c.l.b16 %v506
      %v774 = vunpack.c.h.b16 %v506
      %v775 = vpack.c.b16 %v713, %v711
      %v776 = vpack.c.b16 %v714, %v712
      %v777 = vpack.c.b16 %v717, %v715
      %v778 = vpack.c.b16 %v718, %v716
      %v779 = vpack.c.b16 %v721, %v719
      %v780 = vpack.c.b16 %v722, %v720
      %v781 = vpack.c.b16 %v725, %v723
      %v782 = vpack.c.b16 %v726, %v724
      %v783 = vpack.c.b16 %v729, %v727
      %v784 = vpack.c.b16 %v730, %v728
      %v785 = vpack.c.b16 %v733, %v731
      %v786 = vpack.c.b16 %v734, %v732
      %v787 = vpack.c.b16 %v737, %v735
      %v788 = vpack.c.b16 %v738, %v736
      %v789 = vpack.c.b16 %v741, %v739
      %v790 = vpack.c.b16 %v742, %v740
      %v791 = vpack.c.b16 %v745, %v743
      %v792 = vpack.c.b16 %v746, %v744
      %v793 = vpack.c.b16 %v749, %v747
      %v794 = vpack.c.b16 %v750, %v748
      %v795 = vpack.c.b16 %v753, %v751
      %v796 = vpack.c.b16 %v754, %v752
      %v797 = vpack.c.b16 %v757, %v755
      %v798 = vpack.c.b16 %v758, %v756
      %v799 = vpack.c.b16 %v761, %v759
      %v800 = vpack.c.b16 %v762, %v760
      %v801 = vpack.c.b16 %v765, %v763
      %v802 = vpack.c.b16 %v766, %v764
      %v803 = vpack.c.b16 %v769, %v767
      %v804 = vpack.c.b16 %v770, %v768
      %v805 = vpack.c.b16 %v773, %v771
      %v806 = vpack.c.b16 %v774, %v772
      %839 = vmatprep.subr.bf16.mxu0 %v776
      %840 = vmatpush1.bf16.msra.mxu0 %v775
      %841 = vmatprep.subr.bf16.mxu0 %v778
      %842 = vmatpush1.bf16.msra.mxu0 %v777
      %843 = vmatprep.subr.bf16.mxu0 %v780
      %844 = vmatpush1.bf16.msra.mxu0 %v779
      %845 = vmatprep.subr.bf16.mxu0 %v782
      %846 = vmatpush1.bf16.msra.mxu0 %v781
      %847 = vmatprep.subr.bf16.mxu0 %v784
      %848 = vmatpush1.bf16.msra.mxu0 %v783
      %849 = vmatprep.subr.bf16.mxu0 %v786
      %850 = vmatpush1.bf16.msra.mxu0 %v785
      %851 = vmatprep.subr.bf16.mxu0 %v788
      %852 = vmatpush1.bf16.msra.mxu0 %v787
      %853 = vmatprep.subr.bf16.mxu0 %v790
      %854 = vmatpush1.bf16.msra.mxu0 %v789
      %855 = vmatprep.subr.bf16.mxu0 %v792
      %856 = vmatpush1.bf16.msra.mxu0 %v791
      %857 = vmatprep.subr.bf16.mxu0 %v794
      %858 = vmatpush1.bf16.msra.mxu0 %v793
      %859 = vmatprep.subr.bf16.mxu0 %v796
      %860 = vmatpush1.bf16.msra.mxu0 %v795
      %861 = vmatprep.subr.bf16.mxu0 %v798
      %862 = vmatpush1.bf16.msra.mxu0 %v797
      %863 = vmatprep.subr.bf16.mxu0 %v800
      %864 = vmatpush1.bf16.msra.mxu0 %v799
      %865 = vmatprep.subr.bf16.mxu0 %v802
      %866 = vmatpush1.bf16.msra.mxu0 %v801
      %867 = vmatprep.subr.bf16.mxu0 %v804
      %868 = vmatpush1.bf16.msra.mxu0 %v803
      %869 = vmatprep.subr.bf16.mxu0 %v806
      %870 = vmatpush1.bf16.msra.mxu0 %v805
      %871 = vmatprep.mubr.bf16.mxu0 %v616
      %872 = vmatmul.mubr.bf16.gmra.mrb[0].mxu0 %v615
      %v873 = vpop.f32.mrb[0].mxu0
      %v874 = vadd.f32 %v512, %v873
      %v875 = vpop.f32.mrb[0].mxu0
      %v876 = vadd.f32 %v516, %v875
      %v877 = vpop.f32.mrb[0].mxu0
      %v878 = vadd.f32 %v512, %v877
      %v879 = vpop.f32.mrb[0].mxu0
      %v880 = vadd.f32 %v516, %v879
      %881 = vmatprep.mubr.bf16.mxu0 %v618
      %882 = vmatmul.mubr.bf16.gmra.mrb[0].mxu0 %v617
      %v883 = vpop.f32.mrb[0].mxu0
      %v884 = vadd.f32 %v512, %v883
      %v885 = vpop.f32.mrb[0].mxu0
      %v886 = vadd.f32 %v516, %v885
      %v887 = vpop.f32.mrb[0].mxu0
      %v888 = vadd.f32 %v512, %v887
      %v889 = vpop.f32.mrb[0].mxu0
      %v890 = vadd.f32 %v516, %v889
      %891 = vmatprep.mubr.bf16.mxu0 %v620
      %892 = vmatmul.mubr.bf16.gmra.mrb[0].mxu0 %v619
      %v893 = vpop.f32.mrb[0].mxu0
      %v894 = vadd.f32 %v512, %v893
      %v895 = vpop.f32.mrb[0].mxu0
      %v896 = vadd.f32 %v516, %v895
      %v897 = vpop.f32.mrb[0].mxu0
      %v898 = vadd.f32 %v512, %v897
      %v899 = vpop.f32.mrb[0].mxu0
      %v900 = vadd.f32 %v516, %v899
      %901 = vmatprep.mubr.bf16.mxu0 %v622
      %902 = vmatmul.mubr.bf16.gmra.mrb[0].mxu0 %v621
      %v903 = vpop.f32.mrb[0].mxu0
      %v904 = vadd.f32 %v512, %v903
      %v905 = vpop.f32.mrb[0].mxu0
      %v906 = vadd.f32 %v516, %v905
      %v907 = vpop.f32.mrb[0].mxu0
      %v908 = vadd.f32 %v512, %v907
      %v909 = vpop.f32.mrb[0].mxu0
      %v910 = vadd.f32 %v516, %v909
      %911 = vmatprep.mubr.bf16.mxu0 %v624
      %912 = vmatmul.mubr.bf16.gmra.mrb[0].mxu0 %v623
      %v913 = vpop.f32.mrb[0].mxu0
      %v914 = vadd.f32 %v512, %v913
      %v915 = vpop.f32.mrb[0].mxu0
      %v916 = vadd.f32 %v516, %v915
      %v917 = vpop.f32.mrb[0].mxu0
      %v918 = vadd.f32 %v512, %v917
      %v919 = vpop.f32.mrb[0].mxu0
      %v920 = vadd.f32 %v516, %v919
      %921 = vmatprep.mubr.bf16.mxu0 %v626
      %922 = vmatmul.mubr.bf16.gmra.mrb[0].mxu0 %v625
      %v923 = vpop.f32.mrb[0].mxu0
      %v924 = vadd.f32 %v512, %v923
      %v925 = vpop.f32.mrb[0].mxu0
      %v926 = vadd.f32 %v516, %v925
      %v927 = vpop.f32.mrb[0].mxu0
      %v928 = vadd.f32 %v512, %v927
      %v929 = vpop.f32.mrb[0].mxu0
      %v930 = vadd.f32 %v516, %v929
      %931 = vmatprep.mubr.bf16.mxu0 %v628
      %932 = vmatmul.mubr.bf16.gmra.mrb[0].mxu0 %v627
      %v933 = vpop.f32.mrb[0].mxu0
      %v934 = vadd.f32 %v512, %v933
      %v935 = vpop.f32.mrb[0].mxu0
      %v936 = vadd.f32 %v516, %v935
      %v937 = vpop.f32.mrb[0].mxu0
      %v938 = vadd.f32 %v512, %v937
      %v939 = vpop.f32.mrb[0].mxu0
      %v940 = vadd.f32 %v516, %v939
      %941 = vmatprep.mubr.bf16.mxu0 %v630
      %942 = vmatmul.mubr.bf16.gmra.mrb[0].mxu0 %v629
      %v943 = vpop.f32.mrb[0].mxu0
      %v944 = vadd.f32 %v512, %v943
      %v945 = vpop.f32.mrb[0].mxu0
      %v946 = vadd.f32 %v516, %v945
      %v947 = vpop.f32.mrb[0].mxu0
      %v948 = vadd.f32 %v512, %v947
      %v949 = vpop.f32.mrb[0].mxu0
      %v950 = vadd.f32 %v516, %v949
      %951 = vmatprep.mubr.bf16.mxu0 %v632
      %952 = vmatmul.mubr.bf16.gmra.mrb[0].mxu0 %v631
      %v953 = vpop.f32.mrb[0].mxu0
      %v954 = vadd.f32 %v512, %v953
      %v955 = vpop.f32.mrb[0].mxu0
      %v956 = vadd.f32 %v516, %v955
      %v957 = vpop.f32.mrb[0].mxu0
      %v958 = vadd.f32 %v512, %v957
      %v959 = vpop.f32.mrb[0].mxu0
      %v960 = vadd.f32 %v516, %v959
      %961 = vmatprep.mubr.bf16.mxu0 %v634
      %962 = vmatmul.mubr.bf16.gmra.mrb[0].mxu0 %v633
      %v963 = vpop.f32.mrb[0].mxu0
      %v964 = vadd.f32 %v512, %v963
      %v965 = vpop.f32.mrb[0].mxu0
      %v966 = vadd.f32 %v516, %v965
      %v967 = vpop.f32.mrb[0].mxu0
      %v968 = vadd.f32 %v512, %v967
      %v969 = vpop.f32.mrb[0].mxu0
      %v970 = vadd.f32 %v516, %v969
      %971 = vmatprep.mubr.bf16.mxu0 %v636
      %972 = vmatmul.mubr.bf16.gmra.mrb[0].mxu0 %v635
      %v973 = vpop.f32.mrb[0].mxu0
      %v974 = vadd.f32 %v512, %v973
      %v975 = vpop.f32.mrb[0].mxu0
      %v976 = vadd.f32 %v516, %v975
      %v977 = vpop.f32.mrb[0].mxu0
      %v978 = vadd.f32 %v512, %v977
      %v979 = vpop.f32.mrb[0].mxu0
      %v980 = vadd.f32 %v516, %v979
      %981 = vmatprep.mubr.bf16.mxu0 %v638
      %982 = vmatmul.mubr.bf16.gmra.mrb[0].mxu0 %v637
      %v983 = vpop.f32.mrb[0].mxu0
      %v984 = vadd.f32 %v512, %v983
      %v985 = vpop.f32.mrb[0].mxu0
      %v986 = vadd.f32 %v516, %v985
      %v987 = vpop.f32.mrb[0].mxu0
      %v988 = vadd.f32 %v512, %v987
      %v989 = vpop.f32.mrb[0].mxu0
      %v990 = vadd.f32 %v516, %v989
      %991 = vmatprep.mubr.bf16.mxu0 %v640
      %992 = vmatmul.mubr.bf16.gmra.mrb[0].mxu0 %v639
      %v993 = vpop.f32.mrb[0].mxu0
      %v994 = vadd.f32 %v512, %v993
      %v995 = vpop.f32.mrb[0].mxu0
      %v996 = vadd.f32 %v516, %v995
      %v997 = vpop.f32.mrb[0].mxu0
      %v998 = vadd.f32 %v512, %v997
      %v999 = vpop.f32.mrb[0].mxu0
      %v1000 = vadd.f32 %v516, %v999
      %1001 = vmatprep.mubr.bf16.mxu0 %v642
      %1002 = vmatmul.mubr.bf16.gmra.mrb[0].mxu0 %v641
      %v1003 = vpop.f32.mrb[0].mxu0
      %v1004 = vadd.f32 %v512, %v1003
      %v1005 = vpop.f32.mrb[0].mxu0
      %v1006 = vadd.f32 %v516, %v1005
      %v1007 = vpop.f32.mrb[0].mxu0
      %v1008 = vadd.f32 %v512, %v1007
      %v1009 = vpop.f32.mrb[0].mxu0
      %v1010 = vadd.f32 %v516, %v1009
      %1011 = vmatprep.mubr.bf16.mxu0 %v644
      %1012 = vmatmul.mubr.bf16.gmra.mrb[0].mxu0 %v643
      %v1013 = vpop.f32.mrb[0].mxu0
      %v1014 = vadd.f32 %v512, %v1013
      %v1015 = vpop.f32.mrb[0].mxu0
      %v1016 = vadd.f32 %v516, %v1015
      %v1017 = vpop.f32.mrb[0].mxu0
      %v1018 = vadd.f32 %v512, %v1017
      %v1019 = vpop.f32.mrb[0].mxu0
      %v1020 = vadd.f32 %v516, %v1019
      %1021 = vmatprep.mubr.bf16.mxu0 %v646
      %1022 = vmatmul.mubr.bf16.gmra.mrb[0].mxu0 %v645
      %v1023 = vpop.f32.mrb[0].mxu0
      %v1024 = vadd.f32 %v512, %v1023
      %v1025 = vpop.f32.mrb[0].mxu0
      %v1026 = vadd.f32 %v516, %v1025
      %v1027 = vpop.f32.mrb[0].mxu0
      %v1028 = vadd.f32 %v512, %v1027
      %v1029 = vpop.f32.mrb[0].mxu0
      %v1030 = vadd.f32 %v516, %v1029
      %1031 = vdwg.mxu0
      %v1032 = vmax.f32 %v874, 0.0
      %v1033 = vmax.f32 %v876, 0.0
      %v1034 = vmax.f32 %v878, 0.0
      %v1035 = vmax.f32 %v880, 0.0
      %v1036 = vmax.f32 %v884, 0.0
      %v1037 = vmax.f32 %v886, 0.0
      %v1038 = vmax.f32 %v888, 0.0
      %v1039 = vmax.f32 %v890, 0.0
      %v1040 = vmax.f32 %v894, 0.0
      %v1041 = vmax.f32 %v896, 0.0
      %v1042 = vmax.f32 %v898, 0.0
      %v1043 = vmax.f32 %v900, 0.0
      %v1044 = vmax.f32 %v904, 0.0
      %v1045 = vmax.f32 %v906, 0.0
      %v1046 = vmax.f32 %v908, 0.0
      %v1047 = vmax.f32 %v910, 0.0
      %v1048 = vmax.f32 %v914, 0.0
      %v1049 = vmax.f32 %v916, 0.0
      %v1050 = vmax.f32 %v918, 0.0
      %v1051 = vmax.f32 %v920, 0.0
      %v1052 = vmax.f32 %v924, 0.0
      %v1053 = vmax.f32 %v926, 0.0
      %v1054 = vmax.f32 %v928, 0.0
      %v1055 = vmax.f32 %v930, 0.0
      %v1056 = vmax.f32 %v934, 0.0
      %v1057 = vmax.f32 %v936, 0.0
      %v1058 = vmax.f32 %v938, 0.0
      %v1059 = vmax.f32 %v940, 0.0
      %v1060 = vmax.f32 %v944, 0.0
      %v1061 = vmax.f32 %v946, 0.0
      %v1062 = vmax.f32 %v948, 0.0
      %v1063 = vmax.f32 %v950, 0.0
      %v1064 = vmax.f32 %v954, 0.0
      %v1065 = vmax.f32 %v956, 0.0
      %v1066 = vmax.f32 %v958, 0.0
      %v1067 = vmax.f32 %v960, 0.0
      %v1068 = vmax.f32 %v964, 0.0
      %v1069 = vmax.f32 %v966, 0.0
      %v1070 = vmax.f32 %v968, 0.0
      %v1071 = vmax.f32 %v970, 0.0
      %v1072 = vmax.f32 %v974, 0.0
      %v1073 = vmax.f32 %v976, 0.0
      %v1074 = vmax.f32 %v978, 0.0
      %v1075 = vmax.f32 %v980, 0.0
      %v1076 = vmax.f32 %v984, 0.0
      %v1077 = vmax.f32 %v986, 0.0
      %v1078 = vmax.f32 %v988, 0.0
      %v1079 = vmax.f32 %v990, 0.0
      %v1080 = vmax.f32 %v994, 0.0
      %v1081 = vmax.f32 %v996, 0.0
      %v1082 = vmax.f32 %v998, 0.0
      %v1083 = vmax.f32 %v1000, 0.0
      %v1084 = vmax.f32 %v1004, 0.0
      %v1085 = vmax.f32 %v1006, 0.0
      %v1086 = vmax.f32 %v1008, 0.0
      %v1087 = vmax.f32 %v1010, 0.0
      %v1088 = vmax.f32 %v1014, 0.0
      %v1089 = vmax.f32 %v1016, 0.0
      %v1090 = vmax.f32 %v1018, 0.0
      %v1091 = vmax.f32 %v1020, 0.0
      %v1092 = vmax.f32 %v1024, 0.0
      %v1093 = vmax.f32 %v1026, 0.0
      %v1094 = vmax.f32 %v1028, 0.0
      %v1095 = vmax.f32 %v1030, 0.0
      %v1096 = vpack.c.bf16 %v1034, %v1032
      %v1097 = vpack.c.bf16 %v1035, %v1033
      %v1098 = vpack.c.bf16 %v1038, %v1036
      %v1099 = vpack.c.bf16 %v1039, %v1037
      %v1100 = vpack.c.bf16 %v1042, %v1040
      %v1101 = vpack.c.bf16 %v1043, %v1041
      %v1102 = vpack.c.bf16 %v1046, %v1044
      %v1103 = vpack.c.bf16 %v1047, %v1045
      %v1104 = vpack.c.bf16 %v1050, %v1048
      %v1105 = vpack.c.bf16 %v1051, %v1049
      %v1106 = vpack.c.bf16 %v1054, %v1052
      %v1107 = vpack.c.bf16 %v1055, %v1053
      %v1108 = vpack.c.bf16 %v1058, %v1056
      %v1109 = vpack.c.bf16 %v1059, %v1057
      %v1110 = vpack.c.bf16 %v1062, %v1060
      %v1111 = vpack.c.bf16 %v1063, %v1061
      %v1112 = vpack.c.bf16 %v1066, %v1064
      %v1113 = vpack.c.bf16 %v1067, %v1065
      %v1114 = vpack.c.bf16 %v1070, %v1068
      %v1115 = vpack.c.bf16 %v1071, %v1069
      %v1116 = vpack.c.bf16 %v1074, %v1072
      %v1117 = vpack.c.bf16 %v1075, %v1073
      %v1118 = vpack.c.bf16 %v1078, %v1076
      %v1119 = vpack.c.bf16 %v1079, %v1077
      %v1120 = vpack.c.bf16 %v1082, %v1080
      %v1121 = vpack.c.bf16 %v1083, %v1081
      %v1122 = vpack.c.bf16 %v1086, %v1084
      %v1123 = vpack.c.bf16 %v1087, %v1085
      %v1124 = vpack.c.bf16 %v1090, %v1088
      %v1125 = vpack.c.bf16 %v1091, %v1089
      %v1126 = vpack.c.bf16 %v1094, %v1092
      %v1127 = vpack.c.bf16 %v1095, %v1093
      %v1128 = vld [vmem:[%s3] sm:$0xff]
      %v1129 = vld [vmem:[%s3 + $0x8] sm:$0xff]
      %v1130 = vld [vmem:[%s3 + $0x10] sm:$0xff]
      %v1131 = vld [vmem:[%s3 + $0x18] sm:$0xff]
      %v1132 = vld [vmem:[%s3 + $0x20] sm:$0xff]
      %v1133 = vld [vmem:[%s3 + $0x28] sm:$0xff]
      %v1134 = vld [vmem:[%s3 + $0x30] sm:$0xff]
      %v1135 = vld [vmem:[%s3 + $0x38] sm:$0xff]
      %v1136 = vld [vmem:[%s3 + $0x40] sm:$0xff]
      %v1137 = vld [vmem:[%s3 + $0x48] sm:$0xff]
      %v1138 = vld [vmem:[%s3 + $0x50] sm:$0xff]
      %v1139 = vld [vmem:[%s3 + $0x58] sm:$0xff]
      %v1140 = vld [vmem:[%s3 + $0x60] sm:$0xff]
      %v1141 = vld [vmem:[%s3 + $0x68] sm:$0xff]
      %v1142 = vld [vmem:[%s3 + $0x70] sm:$0xff]
      %v1143 = vld [vmem:[%s3 + $0x78] sm:$0xff]
      %v1144 = vld [vmem:[%s3 + $0x80] sm:$0xff]
      %v1145 = vld [vmem:[%s3 + $0x88] sm:$0xff]
      %v1146 = vld [vmem:[%s3 + $0x90] sm:$0xff]
      %v1147 = vld [vmem:[%s3 + $0x98] sm:$0xff]
      %v1148 = vld [vmem:[%s3 + $0xa0] sm:$0xff]
      %v1149 = vld [vmem:[%s3 + $0xa8] sm:$0xff]
      %v1150 = vld [vmem:[%s3 + $0xb0] sm:$0xff]
      %v1151 = vld [vmem:[%s3 + $0xb8] sm:$0xff]
      %v1152 = vld [vmem:[%s3 + $0xc0] sm:$0xff]
      %v1153 = vld [vmem:[%s3 + $0xc8] sm:$0xff]
      %v1154 = vld [vmem:[%s3 + $0xd0] sm:$0xff]
      %v1155 = vld [vmem:[%s3 + $0xd8] sm:$0xff]
      %v1156 = vld [vmem:[%s3 + $0xe0] sm:$0xff]
      %v1157 = vld [vmem:[%s3 + $0xe8] sm:$0xff]
      %v1158 = vld [vmem:[%s3 + $0xf0] sm:$0xff]
      %v1159 = vld [vmem:[%s3 + $0xf8] sm:$0xff]
      %v1160 = vld [vmem:[%s4] sm:$0x3]
      %v1162 = vlaneseq
      %v1163 = vshrl.u32 %v1162, 7
      %v1164 = vsub.s32 0, %v1163
      %v1165 = vrot.slane %v1160, %v1164
      %v1166 = vlaneseq
      %v1167 = vshrl.u32 %v1166, 7
      %v1168 = vsub.s32 1, %v1167
      %v1169 = vrot.slane %v1160, %v1168
      %v1204 = vunpack.c.l.b16 %v1128
      %v1205 = vunpack.c.h.b16 %v1128
      %v1206 = vunpack.c.l.b16 %v1129
      %v1207 = vunpack.c.h.b16 %v1129
      %v1208 = vunpack.c.l.b16 %v1130
      %v1209 = vunpack.c.h.b16 %v1130
      %v1210 = vunpack.c.l.b16 %v1131
      %v1211 = vunpack.c.h.b16 %v1131
      %v1212 = vunpack.c.l.b16 %v1132
      %v1213 = vunpack.c.h.b16 %v1132
      %v1214 = vunpack.c.l.b16 %v1133
      %v1215 = vunpack.c.h.b16 %v1133
      %v1216 = vunpack.c.l.b16 %v1134
      %v1217 = vunpack.c.h.b16 %v1134
      %v1218 = vunpack.c.l.b16 %v1135
      %v1219 = vunpack.c.h.b16 %v1135
      %v1220 = vunpack.c.l.b16 %v1136
      %v1221 = vunpack.c.h.b16 %v1136
      %v1222 = vunpack.c.l.b16 %v1137
      %v1223 = vunpack.c.h.b16 %v1137
      %v1224 = vunpack.c.l.b16 %v1138
      %v1225 = vunpack.c.h.b16 %v1138
      %v1226 = vunpack.c.l.b16 %v1139
      %v1227 = vunpack.c.h.b16 %v1139
      %v1228 = vunpack.c.l.b16 %v1140
      %v1229 = vunpack.c.h.b16 %v1140
      %v1230 = vunpack.c.l.b16 %v1141
      %v1231 = vunpack.c.h.b16 %v1141
      %v1232 = vunpack.c.l.b16 %v1142
      %v1233 = vunpack.c.h.b16 %v1142
      %v1234 = vunpack.c.l.b16 %v1143
      %v1235 = vunpack.c.h.b16 %v1143
      %v1236 = vunpack.c.l.b16 %v1144
      %v1237 = vunpack.c.h.b16 %v1144
      %v1238 = vunpack.c.l.b16 %v1145
      %v1239 = vunpack.c.h.b16 %v1145
      %v1240 = vunpack.c.l.b16 %v1146
      %v1241 = vunpack.c.h.b16 %v1146
      %v1242 = vunpack.c.l.b16 %v1147
      %v1243 = vunpack.c.h.b16 %v1147
      %v1244 = vunpack.c.l.b16 %v1148
      %v1245 = vunpack.c.h.b16 %v1148
      %v1246 = vunpack.c.l.b16 %v1149
      %v1247 = vunpack.c.h.b16 %v1149
      %v1248 = vunpack.c.l.b16 %v1150
      %v1249 = vunpack.c.h.b16 %v1150
      %v1250 = vunpack.c.l.b16 %v1151
      %v1251 = vunpack.c.h.b16 %v1151
      %v1252 = vunpack.c.l.b16 %v1152
      %v1253 = vunpack.c.h.b16 %v1152
      %v1254 = vunpack.c.l.b16 %v1153
      %v1255 = vunpack.c.h.b16 %v1153
      %v1256 = vunpack.c.l.b16 %v1154
      %v1257 = vunpack.c.h.b16 %v1154
      %v1258 = vunpack.c.l.b16 %v1155
      %v1259 = vunpack.c.h.b16 %v1155
      %v1260 = vunpack.c.l.b16 %v1156
      %v1261 = vunpack.c.h.b16 %v1156
      %v1262 = vunpack.c.l.b16 %v1157
      %v1263 = vunpack.c.h.b16 %v1157
      %v1264 = vunpack.c.l.b16 %v1158
      %v1265 = vunpack.c.h.b16 %v1158
      %v1266 = vunpack.c.l.b16 %v1159
      %v1267 = vunpack.c.h.b16 %v1159
      %v1268 = vpack.c.b16 %v1206, %v1204
      %v1269 = vpack.c.b16 %v1207, %v1205
      %v1270 = vpack.c.b16 %v1210, %v1208
      %v1271 = vpack.c.b16 %v1211, %v1209
      %v1272 = vpack.c.b16 %v1214, %v1212
      %v1273 = vpack.c.b16 %v1215, %v1213
      %v1274 = vpack.c.b16 %v1218, %v1216
      %v1275 = vpack.c.b16 %v1219, %v1217
      %v1276 = vpack.c.b16 %v1222, %v1220
      %v1277 = vpack.c.b16 %v1223, %v1221
      %v1278 = vpack.c.b16 %v1226, %v1224
      %v1279 = vpack.c.b16 %v1227, %v1225
      %v1280 = vpack.c.b16 %v1230, %v1228
      %v1281 = vpack.c.b16 %v1231, %v1229
      %v1282 = vpack.c.b16 %v1234, %v1232
      %v1283 = vpack.c.b16 %v1235, %v1233
      %v1284 = vpack.c.b16 %v1238, %v1236
      %v1285 = vpack.c.b16 %v1239, %v1237
      %v1286 = vpack.c.b16 %v1242, %v1240
      %v1287 = vpack.c.b16 %v1243, %v1241
      %v1288 = vpack.c.b16 %v1246, %v1244
      %v1289 = vpack.c.b16 %v1247, %v1245
      %v1290 = vpack.c.b16 %v1250, %v1248
      %v1291 = vpack.c.b16 %v1251, %v1249
      %v1292 = vpack.c.b16 %v1254, %v1252
      %v1293 = vpack.c.b16 %v1255, %v1253
      %v1294 = vpack.c.b16 %v1258, %v1256
      %v1295 = vpack.c.b16 %v1259, %v1257
      %v1296 = vpack.c.b16 %v1262, %v1260
      %v1297 = vpack.c.b16 %v1263, %v1261
      %v1298 = vpack.c.b16 %v1266, %v1264
      %v1299 = vpack.c.b16 %v1267, %v1265
      %1332 = vmatprep.subr.bf16.mxu0 %v1269
      %1333 = vmatpush1.bf16.msra.mxu0 %v1268
      %1334 = vmatprep.subr.bf16.mxu0 %v1271
      %1335 = vmatpush1.bf16.msra.mxu0 %v1270
      %1336 = vmatprep.subr.bf16.mxu0 %v1273
      %1337 = vmatpush1.bf16.msra.mxu0 %v1272
      %1338 = vmatprep.subr.bf16.mxu0 %v1275
      %1339 = vmatpush1.bf16.msra.mxu0 %v1274
      %1340 = vmatprep.subr.bf16.mxu0 %v1277
      %1341 = vmatpush1.bf16.msra.mxu0 %v1276
      %1342 = vmatprep.subr.bf16.mxu0 %v1279
      %1343 = vmatpush1.bf16.msra.mxu0 %v1278
      %1344 = vmatprep.subr.bf16.mxu0 %v1281
      %1345 = vmatpush1.bf16.msra.mxu0 %v1280
      %1346 = vmatprep.subr.bf16.mxu0 %v1283
      %1347 = vmatpush1.bf16.msra.mxu0 %v1282
      %1348 = vmatprep.subr.bf16.mxu0 %v1285
      %1349 = vmatpush1.bf16.msra.mxu0 %v1284
      %1350 = vmatprep.subr.bf16.mxu0 %v1287
      %1351 = vmatpush1.bf16.msra.mxu0 %v1286
      %1352 = vmatprep.subr.bf16.mxu0 %v1289
      %1353 = vmatpush1.bf16.msra.mxu0 %v1288
      %1354 = vmatprep.subr.bf16.mxu0 %v1291
      %1355 = vmatpush1.bf16.msra.mxu0 %v1290
      %1356 = vmatprep.subr.bf16.mxu0 %v1293
      %1357 = vmatpush1.bf16.msra.mxu0 %v1292
      %1358 = vmatprep.subr.bf16.mxu0 %v1295
      %1359 = vmatpush1.bf16.msra.mxu0 %v1294
      %1360 = vmatprep.subr.bf16.mxu0 %v1297
      %1361 = vmatpush1.bf16.msra.mxu0 %v1296
      %1362 = vmatprep.subr.bf16.mxu0 %v1299
      %1363 = vmatpush1.bf16.msra.mxu0 %v1298
      %1364 = vmatprep.mubr.bf16.mxu0 %v1097
      %1365 = vmatmul.mubr.bf16.gmra.mrb[0].mxu0 %v1096
      %v1366 = vpop.f32.mrb[0].mxu0
      %v1367 = vadd.f32 %v1165, %v1366
      %v1368 = vpop.f32.mrb[0].mxu0
      %v1369 = vadd.f32 %v1169, %v1368
      %v1370 = vpop.f32.mrb[0].mxu0
      %v1371 = vadd.f32 %v1165, %v1370
      %v1372 = vpop.f32.mrb[0].mxu0
      %v1373 = vadd.f32 %v1169, %v1372
      %1374 = vmatprep.mubr.bf16.mxu0 %v1099
      %1375 = vmatmul.mubr.bf16.gmra.mrb[0].mxu0 %v1098
      %v1376 = vpop.f32.mrb[0].mxu0
      %v1377 = vadd.f32 %v1165, %v1376
      %v1378 = vpop.f32.mrb[0].mxu0
      %v1379 = vadd.f32 %v1169, %v1378
      %v1380 = vpop.f32.mrb[0].mxu0
      %v1381 = vadd.f32 %v1165, %v1380
      %v1382 = vpop.f32.mrb[0].mxu0
      %v1383 = vadd.f32 %v1169, %v1382
      %1384 = vmatprep.mubr.bf16.mxu0 %v1101
      %1385 = vmatmul.mubr.bf16.gmra.mrb[0].mxu0 %v1100
      %v1386 = vpop.f32.mrb[0].mxu0
      %v1387 = vadd.f32 %v1165, %v1386
      %v1388 = vpop.f32.mrb[0].mxu0
      %v1389 = vadd.f32 %v1169, %v1388
      %v1390 = vpop.f32.mrb[0].mxu0
      %v1391 = vadd.f32 %v1165, %v1390
      %v1392 = vpop.f32.mrb[0].mxu0
      %v1393 = vadd.f32 %v1169, %v1392
      %1394 = vmatprep.mubr.bf16.mxu0 %v1103
      %1395 = vmatmul.mubr.bf16.gmra.mrb[0].mxu0 %v1102
      %v1396 = vpop.f32.mrb[0].mxu0
      %v1397 = vadd.f32 %v1165, %v1396
      %v1398 = vpop.f32.mrb[0].mxu0
      %v1399 = vadd.f32 %v1169, %v1398
      %v1400 = vpop.f32.mrb[0].mxu0
      %v1401 = vadd.f32 %v1165, %v1400
      %v1402 = vpop.f32.mrb[0].mxu0
      %v1403 = vadd.f32 %v1169, %v1402
      %1404 = vmatprep.mubr.bf16.mxu0 %v1105
      %1405 = vmatmul.mubr.bf16.gmra.mrb[0].mxu0 %v1104
      %v1406 = vpop.f32.mrb[0].mxu0
      %v1407 = vadd.f32 %v1165, %v1406
      %v1408 = vpop.f32.mrb[0].mxu0
      %v1409 = vadd.f32 %v1169, %v1408
      %v1410 = vpop.f32.mrb[0].mxu0
      %v1411 = vadd.f32 %v1165, %v1410
      %v1412 = vpop.f32.mrb[0].mxu0
      %v1413 = vadd.f32 %v1169, %v1412
      %1414 = vmatprep.mubr.bf16.mxu0 %v1107
      %1415 = vmatmul.mubr.bf16.gmra.mrb[0].mxu0 %v1106
      %v1416 = vpop.f32.mrb[0].mxu0
      %v1417 = vadd.f32 %v1165, %v1416
      %v1418 = vpop.f32.mrb[0].mxu0
      %v1419 = vadd.f32 %v1169, %v1418
      %v1420 = vpop.f32.mrb[0].mxu0
      %v1421 = vadd.f32 %v1165, %v1420
      %v1422 = vpop.f32.mrb[0].mxu0
      %v1423 = vadd.f32 %v1169, %v1422
      %1424 = vmatprep.mubr.bf16.mxu0 %v1109
      %1425 = vmatmul.mubr.bf16.gmra.mrb[0].mxu0 %v1108
      %v1426 = vpop.f32.mrb[0].mxu0
      %v1427 = vadd.f32 %v1165, %v1426
      %v1428 = vpop.f32.mrb[0].mxu0
      %v1429 = vadd.f32 %v1169, %v1428
      %v1430 = vpop.f32.mrb[0].mxu0
      %v1431 = vadd.f32 %v1165, %v1430
      %v1432 = vpop.f32.mrb[0].mxu0
      %v1433 = vadd.f32 %v1169, %v1432
      %1434 = vmatprep.mubr.bf16.mxu0 %v1111
      %1435 = vmatmul.mubr.bf16.gmra.mrb[0].mxu0 %v1110
      %v1436 = vpop.f32.mrb[0].mxu0
      %v1437 = vadd.f32 %v1165, %v1436
      %v1438 = vpop.f32.mrb[0].mxu0
      %v1439 = vadd.f32 %v1169, %v1438
      %v1440 = vpop.f32.mrb[0].mxu0
      %v1441 = vadd.f32 %v1165, %v1440
      %v1442 = vpop.f32.mrb[0].mxu0
      %v1443 = vadd.f32 %v1169, %v1442
      %1444 = vmatprep.mubr.bf16.mxu0 %v1113
      %1445 = vmatmul.mubr.bf16.gmra.mrb[0].mxu0 %v1112
      %v1446 = vpop.f32.mrb[0].mxu0
      %v1447 = vadd.f32 %v1165, %v1446
      %v1448 = vpop.f32.mrb[0].mxu0
      %v1449 = vadd.f32 %v1169, %v1448
      %v1450 = vpop.f32.mrb[0].mxu0
      %v1451 = vadd.f32 %v1165, %v1450
      %v1452 = vpop.f32.mrb[0].mxu0
      %v1453 = vadd.f32 %v1169, %v1452
      %1454 = vmatprep.mubr.bf16.mxu0 %v1115
      %1455 = vmatmul.mubr.bf16.gmra.mrb[0].mxu0 %v1114
      %v1456 = vpop.f32.mrb[0].mxu0
      %v1457 = vadd.f32 %v1165, %v1456
      %v1458 = vpop.f32.mrb[0].mxu0
      %v1459 = vadd.f32 %v1169, %v1458
      %v1460 = vpop.f32.mrb[0].mxu0
      %v1461 = vadd.f32 %v1165, %v1460
      %v1462 = vpop.f32.mrb[0].mxu0
      %v1463 = vadd.f32 %v1169, %v1462
      %1464 = vmatprep.mubr.bf16.mxu0 %v1117
      %1465 = vmatmul.mubr.bf16.gmra.mrb[0].mxu0 %v1116
      %v1466 = vpop.f32.mrb[0].mxu0
      %v1467 = vadd.f32 %v1165, %v1466
      %v1468 = vpop.f32.mrb[0].mxu0
      %v1469 = vadd.f32 %v1169, %v1468
      %v1470 = vpop.f32.mrb[0].mxu0
      %v1471 = vadd.f32 %v1165, %v1470
      %v1472 = vpop.f32.mrb[0].mxu0
      %v1473 = vadd.f32 %v1169, %v1472
      %1474 = vmatprep.mubr.bf16.mxu0 %v1119
      %1475 = vmatmul.mubr.bf16.gmra.mrb[0].mxu0 %v1118
      %v1476 = vpop.f32.mrb[0].mxu0
      %v1477 = vadd.f32 %v1165, %v1476
      %v1478 = vpop.f32.mrb[0].mxu0
      %v1479 = vadd.f32 %v1169, %v1478
      %v1480 = vpop.f32.mrb[0].mxu0
      %v1481 = vadd.f32 %v1165, %v1480
      %v1482 = vpop.f32.mrb[0].mxu0
      %v1483 = vadd.f32 %v1169, %v1482
      %1484 = vmatprep.mubr.bf16.mxu0 %v1121
      %1485 = vmatmul.mubr.bf16.gmra.mrb[0].mxu0 %v1120
      %v1486 = vpop.f32.mrb[0].mxu0
      %v1487 = vadd.f32 %v1165, %v1486
      %v1488 = vpop.f32.mrb[0].mxu0
      %v1489 = vadd.f32 %v1169, %v1488
      %v1490 = vpop.f32.mrb[0].mxu0
      %v1491 = vadd.f32 %v1165, %v1490
      %v1492 = vpop.f32.mrb[0].mxu0
      %v1493 = vadd.f32 %v1169, %v1492
      %1494 = vmatprep.mubr.bf16.mxu0 %v1123
      %1495 = vmatmul.mubr.bf16.gmra.mrb[0].mxu0 %v1122
      %v1496 = vpop.f32.mrb[0].mxu0
      %v1497 = vadd.f32 %v1165, %v1496
      %v1498 = vpop.f32.mrb[0].mxu0
      %v1499 = vadd.f32 %v1169, %v1498
      %v1500 = vpop.f32.mrb[0].mxu0
      %v1501 = vadd.f32 %v1165, %v1500
      %v1502 = vpop.f32.mrb[0].mxu0
      %v1503 = vadd.f32 %v1169, %v1502
      %1504 = vmatprep.mubr.bf16.mxu0 %v1125
      %1505 = vmatmul.mubr.bf16.gmra.mrb[0].mxu0 %v1124
      %v1506 = vpop.f32.mrb[0].mxu0
      %v1507 = vadd.f32 %v1165, %v1506
      %v1508 = vpop.f32.mrb[0].mxu0
      %v1509 = vadd.f32 %v1169, %v1508
      %v1510 = vpop.f32.mrb[0].mxu0
      %v1511 = vadd.f32 %v1165, %v1510
      %v1512 = vpop.f32.mrb[0].mxu0
      %v1513 = vadd.f32 %v1169, %v1512
      %1514 = vmatprep.mubr.bf16.mxu0 %v1127
      %1515 = vmatmul.mubr.bf16.gmra.mrb[0].mxu0 %v1126
      %v1516 = vpop.f32.mrb[0].mxu0
      %v1517 = vadd.f32 %v1165, %v1516
      %v1518 = vpop.f32.mrb[0].mxu0
      %v1519 = vadd.f32 %v1169, %v1518
      %v1520 = vpop.f32.mrb[0].mxu0
      %v1521 = vadd.f32 %v1165, %v1520
      %v1522 = vpop.f32.mrb[0].mxu0
      %v1523 = vadd.f32 %v1169, %v1522
      %1524 = vdwg.mxu0
      %v1525 = vtanh.pop %v1367
      %v1526 = vtanh.pop %v1371
      %v1527 = vtanh.pop %v1377
      %v1528 = vtanh.pop %v1381
      %v1529 = vtanh.pop %v1387
      %v1530 = vtanh.pop %v1391
      %v1531 = vtanh.pop %v1397
      %v1532 = vtanh.pop %v1401
      %v1533 = vtanh.pop %v1407
      %v1534 = vtanh.pop %v1411
      %v1535 = vtanh.pop %v1417
      %v1536 = vtanh.pop %v1421
      %v1537 = vtanh.pop %v1427
      %v1538 = vtanh.pop %v1431
      %v1539 = vtanh.pop %v1437
      %v1540 = vtanh.pop %v1441
      %v1541 = vtanh.pop %v1447
      %v1542 = vtanh.pop %v1451
      %v1543 = vtanh.pop %v1457
      %v1544 = vtanh.pop %v1461
      %v1545 = vtanh.pop %v1467
      %v1546 = vtanh.pop %v1471
      %v1547 = vtanh.pop %v1477
      %v1548 = vtanh.pop %v1481
      %v1549 = vtanh.pop %v1487
      %v1550 = vtanh.pop %v1491
      %v1551 = vtanh.pop %v1497
      %v1552 = vtanh.pop %v1501
      %v1553 = vtanh.pop %v1507
      %v1554 = vtanh.pop %v1511
      %v1555 = vtanh.pop %v1517
      %v1556 = vtanh.pop %v1521
      %v1557 = vxor.u32 %v1369, 2147483648
      %v1558 = vxor.u32 %v1373, 2147483648
      %v1559 = vxor.u32 %v1379, 2147483648
      %v1560 = vxor.u32 %v1383, 2147483648
      %v1561 = vxor.u32 %v1389, 2147483648
      %v1562 = vxor.u32 %v1393, 2147483648
      %v1563 = vxor.u32 %v1399, 2147483648
      %v1564 = vxor.u32 %v1403, 2147483648
      %v1565 = vxor.u32 %v1409, 2147483648
      %v1566 = vxor.u32 %v1413, 2147483648
      %v1567 = vxor.u32 %v1419, 2147483648
      %v1568 = vxor.u32 %v1423, 2147483648
      %v1569 = vxor.u32 %v1429, 2147483648
      %v1570 = vxor.u32 %v1433, 2147483648
      %v1571 = vxor.u32 %v1439, 2147483648
      %v1572 = vxor.u32 %v1443, 2147483648
      %v1573 = vxor.u32 %v1449, 2147483648
      %v1574 = vxor.u32 %v1453, 2147483648
      %v1575 = vxor.u32 %v1459, 2147483648
      %v1576 = vxor.u32 %v1463, 2147483648
      %v1577 = vxor.u32 %v1469, 2147483648
      %v1578 = vxor.u32 %v1473, 2147483648
      %v1579 = vxor.u32 %v1479, 2147483648
      %v1580 = vxor.u32 %v1483, 2147483648
      %v1581 = vxor.u32 %v1489, 2147483648
      %v1582 = vxor.u32 %v1493, 2147483648
      %v1583 = vxor.u32 %v1499, 2147483648
      %v1584 = vxor.u32 %v1503, 2147483648
      %v1585 = vxor.u32 %v1509, 2147483648
      %v1586 = vxor.u32 %v1513, 2147483648
      %v1587 = vxor.u32 %v1519, 2147483648
      %v1588 = vxor.u32 %v1523, 2147483648
      %v1589 = vmul.f32 %v1557, 1.442695
      %v1590 = vpow.pop %v1589
      %v1591 = vmul.f32 %v1558, 1.442695
      %v1592 = vpow.pop %v1591
      %v1593 = vmul.f32 %v1559, 1.442695
      %v1594 = vpow.pop %v1593
      %v1595 = vmul.f32 %v1560, 1.442695
      %v1596 = vpow.pop %v1595
      %v1597 = vmul.f32 %v1561, 1.442695
      %v1598 = vpow.pop %v1597
      %v1599 = vmul.f32 %v1562, 1.442695
      %v1600 = vpow.pop %v1599
      %v1601 = vmul.f32 %v1563, 1.442695
      %v1602 = vpow.pop %v1601
      %v1603 = vmul.f32 %v1564, 1.442695
      %v1604 = vpow.pop %v1603
      %v1605 = vmul.f32 %v1565, 1.442695
      %v1606 = vpow.pop %v1605
      %v1607 = vmul.f32 %v1566, 1.442695
      %v1608 = vpow.pop %v1607
      %v1609 = vmul.f32 %v1567, 1.442695
      %v1610 = vpow.pop %v1609
      %v1611 = vmul.f32 %v1568, 1.442695
      %v1612 = vpow.pop %v1611
      %v1613 = vmul.f32 %v1569, 1.442695
      %v1614 = vpow.pop %v1613
      %v1615 = vmul.f32 %v1570, 1.442695
      %v1616 = vpow.pop %v1615
      %v1617 = vmul.f32 %v1571, 1.442695
      %v1618 = vpow.pop %v1617
      %v1619 = vmul.f32 %v1572, 1.442695
      %v1620 = vpow.pop %v1619
      %v1621 = vmul.f32 %v1573, 1.442695
      %v1622 = vpow.pop %v1621
      %v1623 = vmul.f32 %v1574, 1.442695
      %v1624 = vpow.pop %v1623
      %v1625 = vmul.f32 %v1575, 1.442695
      %v1626 = vpow.pop %v1625
      %v1627 = vmul.f32 %v1576, 1.442695
      %v1628 = vpow.pop %v1627
      %v1629 = vmul.f32 %v1577, 1.442695
      %v1630 = vpow.pop %v1629
      %v1631 = vmul.f32 %v1578, 1.442695
      %v1632 = vpow.pop %v1631
      %v1633 = vmul.f32 %v1579, 1.442695
      %v1634 = vpow.pop %v1633
      %v1635 = vmul.f32 %v1580, 1.442695
      %v1636 = vpow.pop %v1635
      %v1637 = vmul.f32 %v1581, 1.442695
      %v1638 = vpow.pop %v1637
      %v1639 = vmul.f32 %v1582, 1.442695
      %v1640 = vpow.pop %v1639
      %v1641 = vmul.f32 %v1583, 1.442695
      %v1642 = vpow.pop %v1641
      %v1643 = vmul.f32 %v1584, 1.442695
      %v1644 = vpow.pop %v1643
      %v1645 = vmul.f32 %v1585, 1.442695
      %v1646 = vpow.pop %v1645
      %v1647 = vmul.f32 %v1586, 1.442695
      %v1648 = vpow.pop %v1647
      %v1649 = vmul.f32 %v1587, 1.442695
      %v1650 = vpow.pop %v1649
      %v1651 = vmul.f32 %v1588, 1.442695
      %v1652 = vpow.pop %v1651
      %v1653 = vadd.f32 %v1590, 1.0
      %v1654 = vadd.f32 %v1592, 1.0
      %v1655 = vadd.f32 %v1594, 1.0
      %v1656 = vadd.f32 %v1596, 1.0
      %v1657 = vadd.f32 %v1598, 1.0
      %v1658 = vadd.f32 %v1600, 1.0
      %v1659 = vadd.f32 %v1602, 1.0
      %v1660 = vadd.f32 %v1604, 1.0
      %v1661 = vadd.f32 %v1606, 1.0
      %v1662 = vadd.f32 %v1608, 1.0
      %v1663 = vadd.f32 %v1610, 1.0
      %v1664 = vadd.f32 %v1612, 1.0
      %v1665 = vadd.f32 %v1614, 1.0
      %v1666 = vadd.f32 %v1616, 1.0
      %v1667 = vadd.f32 %v1618, 1.0
      %v1668 = vadd.f32 %v1620, 1.0
      %v1669 = vadd.f32 %v1622, 1.0
      %v1670 = vadd.f32 %v1624, 1.0
      %v1671 = vadd.f32 %v1626, 1.0
      %v1672 = vadd.f32 %v1628, 1.0
      %v1673 = vadd.f32 %v1630, 1.0
      %v1674 = vadd.f32 %v1632, 1.0
      %v1675 = vadd.f32 %v1634, 1.0
      %v1676 = vadd.f32 %v1636, 1.0
      %v1677 = vadd.f32 %v1638, 1.0
      %v1678 = vadd.f32 %v1640, 1.0
      %v1679 = vadd.f32 %v1642, 1.0
      %v1680 = vadd.f32 %v1644, 1.0
      %v1681 = vadd.f32 %v1646, 1.0
      %v1682 = vadd.f32 %v1648, 1.0
      %v1683 = vadd.f32 %v1650, 1.0
      %v1684 = vadd.f32 %v1652, 1.0
      %v1685 = vrcp.pop %v1653
      %v1686 = vmul.f32 1.0, %v1685
      %v1687 = vrcp.pop %v1654
      %v1688 = vmul.f32 1.0, %v1687
      %v1689 = vrcp.pop %v1655
      %v1690 = vmul.f32 1.0, %v1689
      %v1691 = vrcp.pop %v1656
      %v1692 = vmul.f32 1.0, %v1691
      %v1693 = vrcp.pop %v1657
      %v1694 = vmul.f32 1.0, %v1693
      %v1695 = vrcp.pop %v1658
      %v1696 = vmul.f32 1.0, %v1695
      %v1697 = vrcp.pop %v1659
      %v1698 = vmul.f32 1.0, %v1697
      %v1699 = vrcp.pop %v1660
      %v1700 = vmul.f32 1.0, %v1699
      %v1701 = vrcp.pop %v1661
      %v1702 = vmul.f32 1.0, %v1701
      %v1703 = vrcp.pop %v1662
      %v1704 = vmul.f32 1.0, %v1703
      %v1705 = vrcp.pop %v1663
      %v1706 = vmul.f32 1.0, %v1705
      %v1707 = vrcp.pop %v1664
      %v1708 = vmul.f32 1.0, %v1707
      %v1709 = vrcp.pop %v1665
      %v1710 = vmul.f32 1.0, %v1709
      %v1711 = vrcp.pop %v1666
      %v1712 = vmul.f32 1.0, %v1711
      %v1713 = vrcp.pop %v1667
      %v1714 = vmul.f32 1.0, %v1713
      %v1715 = vrcp.pop %v1668
      %v1716 = vmul.f32 1.0, %v1715
      %v1717 = vrcp.pop %v1669
      %v1718 = vmul.f32 1.0, %v1717
      %v1719 = vrcp.pop %v1670
      %v1720 = vmul.f32 1.0, %v1719
      %v1721 = vrcp.pop %v1671
      %v1722 = vmul.f32 1.0, %v1721
      %v1723 = vrcp.pop %v1672
      %v1724 = vmul.f32 1.0, %v1723
      %v1725 = vrcp.pop %v1673
      %v1726 = vmul.f32 1.0, %v1725
      %v1727 = vrcp.pop %v1674
      %v1728 = vmul.f32 1.0, %v1727
      %v1729 = vrcp.pop %v1675
      %v1730 = vmul.f32 1.0, %v1729
      %v1731 = vrcp.pop %v1676
      %v1732 = vmul.f32 1.0, %v1731
      %v1733 = vrcp.pop %v1677
      %v1734 = vmul.f32 1.0, %v1733
      %v1735 = vrcp.pop %v1678
      %v1736 = vmul.f32 1.0, %v1735
      %v1737 = vrcp.pop %v1679
      %v1738 = vmul.f32 1.0, %v1737
      %v1739 = vrcp.pop %v1680
      %v1740 = vmul.f32 1.0, %v1739
      %v1741 = vrcp.pop %v1681
      %v1742 = vmul.f32 1.0, %v1741
      %v1743 = vrcp.pop %v1682
      %v1744 = vmul.f32 1.0, %v1743
      %v1745 = vrcp.pop %v1683
      %v1746 = vmul.f32 1.0, %v1745
      %v1747 = vrcp.pop %v1684
      %v1748 = vmul.f32 1.0, %v1747
      %v1749 = vmul.f32 %v1525, %v1686
      %v1750 = vmul.f32 %v1526, %v1688
      %v1751 = vmul.f32 %v1527, %v1690
      %v1752 = vmul.f32 %v1528, %v1692
      %v1753 = vmul.f32 %v1529, %v1694
      %v1754 = vmul.f32 %v1530, %v1696
      %v1755 = vmul.f32 %v1531, %v1698
      %v1756 = vmul.f32 %v1532, %v1700
      %v1757 = vmul.f32 %v1533, %v1702
      %v1758 = vmul.f32 %v1534, %v1704
      %v1759 = vmul.f32 %v1535, %v1706
      %v1760 = vmul.f32 %v1536, %v1708
      %v1761 = vmul.f32 %v1537, %v1710
      %v1762 = vmul.f32 %v1538, %v1712
      %v1763 = vmul.f32 %v1539, %v1714
      %v1764 = vmul.f32 %v1540, %v1716
      %v1765 = vmul.f32 %v1541, %v1718
      %v1766 = vmul.f32 %v1542, %v1720
      %v1767 = vmul.f32 %v1543, %v1722
      %v1768 = vmul.f32 %v1544, %v1724
      %v1769 = vmul.f32 %v1545, %v1726
      %v1770 = vmul.f32 %v1546, %v1728
      %v1771 = vmul.f32 %v1547, %v1730
      %v1772 = vmul.f32 %v1548, %v1732
      %v1773 = vmul.f32 %v1549, %v1734
      %v1774 = vmul.f32 %v1550, %v1736
      %v1775 = vmul.f32 %v1551, %v1738
      %v1776 = vmul.f32 %v1552, %v1740
      %v1777 = vmul.f32 %v1553, %v1742
      %v1778 = vmul.f32 %v1554, %v1744
      %v1779 = vmul.f32 %v1555, %v1746
      %v1780 = vmul.f32 %v1556, %v1748
      %v1781 = vld [vmem:[%s5] sm:$0x1]
      %v1783 = vlaneseq
      %v1784 = vshrl.u32 %v1783, 7
      %v1785 = vsub.s32 0, %v1784
      %v1786 = vrot.slane %v1781, %v1785
      %v1788 = vmul.f32 %v1749, %v1786
      %v1789 = vmul.f32 %v1750, %v1786
      %v1790 = vmul.f32 %v1751, %v1786
      %v1791 = vmul.f32 %v1752, %v1786
      %v1792 = vmul.f32 %v1753, %v1786
      %v1793 = vmul.f32 %v1754, %v1786
      %v1794 = vmul.f32 %v1755, %v1786
      %v1795 = vmul.f32 %v1756, %v1786
      %v1796 = vmul.f32 %v1757, %v1786
      %v1797 = vmul.f32 %v1758, %v1786
      %v1798 = vmul.f32 %v1759, %v1786
      %v1799 = vmul.f32 %v1760, %v1786
      %v1800 = vmul.f32 %v1761, %v1786
      %v1801 = vmul.f32 %v1762, %v1786
      %v1802 = vmul.f32 %v1763, %v1786
      %v1803 = vmul.f32 %v1764, %v1786
      %v1804 = vmul.f32 %v1765, %v1786
      %v1805 = vmul.f32 %v1766, %v1786
      %v1806 = vmul.f32 %v1767, %v1786
      %v1807 = vmul.f32 %v1768, %v1786
      %v1808 = vmul.f32 %v1769, %v1786
      %v1809 = vmul.f32 %v1770, %v1786
      %v1810 = vmul.f32 %v1771, %v1786
      %v1811 = vmul.f32 %v1772, %v1786
      %v1812 = vmul.f32 %v1773, %v1786
      %v1813 = vmul.f32 %v1774, %v1786
      %v1814 = vmul.f32 %v1775, %v1786
      %v1815 = vmul.f32 %v1776, %v1786
      %v1816 = vmul.f32 %v1777, %v1786
      %v1817 = vmul.f32 %v1778, %v1786
      %v1818 = vmul.f32 %v1779, %v1786
      %v1819 = vmul.f32 %v1780, %v1786
      %1820 = vadd.xlane.f32.xlu0 %v1788
      %v1821 = vpop.xlane.xlu0 %1820
      %1822 = vadd.xlane.f32.xlu0 %v1789
      %v1823 = vpop.xlane.xlu0 %1822
      %1824 = vadd.xlane.f32.xlu0 %v1790
      %v1825 = vpop.xlane.xlu0 %1824
      %1826 = vadd.xlane.f32.xlu0 %v1791
      %v1827 = vpop.xlane.xlu0 %1826
      %1828 = vadd.xlane.f32.xlu0 %v1792
      %v1829 = vpop.xlane.xlu0 %1828
      %1830 = vadd.xlane.f32.xlu0 %v1793
      %v1831 = vpop.xlane.xlu0 %1830
      %1832 = vadd.xlane.f32.xlu0 %v1794
      %v1833 = vpop.xlane.xlu0 %1832
      %1834 = vadd.xlane.f32.xlu0 %v1795
      %v1835 = vpop.xlane.xlu0 %1834
      %1836 = vadd.xlane.f32.xlu0 %v1796
      %v1837 = vpop.xlane.xlu0 %1836
      %1838 = vadd.xlane.f32.xlu0 %v1797
      %v1839 = vpop.xlane.xlu0 %1838
      %1840 = vadd.xlane.f32.xlu0 %v1798
      %v1841 = vpop.xlane.xlu0 %1840
      %1842 = vadd.xlane.f32.xlu0 %v1799
      %v1843 = vpop.xlane.xlu0 %1842
      %1844 = vadd.xlane.f32.xlu0 %v1800
      %v1845 = vpop.xlane.xlu0 %1844
      %1846 = vadd.xlane.f32.xlu0 %v1801
      %v1847 = vpop.xlane.xlu0 %1846
      %1848 = vadd.xlane.f32.xlu0 %v1802
      %v1849 = vpop.xlane.xlu0 %1848
      %1850 = vadd.xlane.f32.xlu0 %v1803
      %v1851 = vpop.xlane.xlu0 %1850
      %1852 = vadd.xlane.f32.xlu0 %v1804
      %v1853 = vpop.xlane.xlu0 %1852
      %1854 = vadd.xlane.f32.xlu0 %v1805
      %v1855 = vpop.xlane.xlu0 %1854
      %1856 = vadd.xlane.f32.xlu0 %v1806
      %v1857 = vpop.xlane.xlu0 %1856
      %1858 = vadd.xlane.f32.xlu0 %v1807
      %v1859 = vpop.xlane.xlu0 %1858
      %1860 = vadd.xlane.f32.xlu0 %v1808
      %v1861 = vpop.xlane.xlu0 %1860
      %1862 = vadd.xlane.f32.xlu0 %v1809
      %v1863 = vpop.xlane.xlu0 %1862
      %1864 = vadd.xlane.f32.xlu0 %v1810
      %v1865 = vpop.xlane.xlu0 %1864
      %1866 = vadd.xlane.f32.xlu0 %v1811
      %v1867 = vpop.xlane.xlu0 %1866
      %1868 = vadd.xlane.f32.xlu0 %v1812
      %v1869 = vpop.xlane.xlu0 %1868
      %1870 = vadd.xlane.f32.xlu0 %v1813
      %v1871 = vpop.xlane.xlu0 %1870
      %1872 = vadd.xlane.f32.xlu0 %v1814
      %v1873 = vpop.xlane.xlu0 %1872
      %1874 = vadd.xlane.f32.xlu0 %v1815
      %v1875 = vpop.xlane.xlu0 %1874
      %1876 = vadd.xlane.f32.xlu0 %v1816
      %v1877 = vpop.xlane.xlu0 %1876
      %1878 = vadd.xlane.f32.xlu0 %v1817
      %v1879 = vpop.xlane.xlu0 %1878
      %1880 = vadd.xlane.f32.xlu0 %v1818
      %v1881 = vpop.xlane.xlu0 %1880
      %1882 = vadd.xlane.f32.xlu0 %v1819
      %v1883 = vpop.xlane.xlu0 %1882
      %v1884 = vld [vmem:[#allocation2] sm:$0x1]
      %v1886 = vlaneseq
      %v1887 = vshrl.u32 %v1886, 7
      %v1888 = vsub.s32 0, %v1887
      %v1889 = vrot.slane %v1884, %v1888
      %v1891 = vadd.f32 %v1821, %v1889
      %v1892 = vadd.f32 %v1823, %v1889
      %v1893 = vadd.f32 %v1825, %v1889
      %v1894 = vadd.f32 %v1827, %v1889
      %v1895 = vadd.f32 %v1829, %v1889
      %v1896 = vadd.f32 %v1831, %v1889
      %v1897 = vadd.f32 %v1833, %v1889
      %v1898 = vadd.f32 %v1835, %v1889
      %v1899 = vadd.f32 %v1837, %v1889
      %v1900 = vadd.f32 %v1839, %v1889
      %v1901 = vadd.f32 %v1841, %v1889
      %v1902 = vadd.f32 %v1843, %v1889
      %v1903 = vadd.f32 %v1845, %v1889
      %v1904 = vadd.f32 %v1847, %v1889
      %v1905 = vadd.f32 %v1849, %v1889
      %v1906 = vadd.f32 %v1851, %v1889
      %v1907 = vadd.f32 %v1853, %v1889
      %v1908 = vadd.f32 %v1855, %v1889
      %v1909 = vadd.f32 %v1857, %v1889
      %v1910 = vadd.f32 %v1859, %v1889
      %v1911 = vadd.f32 %v1861, %v1889
      %v1912 = vadd.f32 %v1863, %v1889
      %v1913 = vadd.f32 %v1865, %v1889
      %v1914 = vadd.f32 %v1867, %v1889
      %v1915 = vadd.f32 %v1869, %v1889
      %v1916 = vadd.f32 %v1871, %v1889
      %v1917 = vadd.f32 %v1873, %v1889
      %v1918 = vadd.f32 %v1875, %v1889
      %v1919 = vadd.f32 %v1877, %v1889
      %v1920 = vadd.f32 %v1879, %v1889
      %v1921 = vadd.f32 %v1881, %v1889
      %v1922 = vadd.f32 %v1883, %v1889
      %s1923 = smul.u32 %s28, 2
      %s1924 = sadd.s32 %s1923, %s29
      %v1925 = vlaneseq
      %v1926 = vshrl.u32 %v1925, 7
      %v1927 = vadd.s32 %v1926, 8
      %v1928 = vadd.s32 %v1926, 16
      %v1929 = vadd.s32 %v1926, 24
      %v1930 = vadd.s32 %v1926, 32
      %v1931 = vadd.s32 %v1926, 40
      %v1932 = vadd.s32 %v1926, 48
      %v1933 = vadd.s32 %v1926, 56
      %v1934 = vadd.s32 %v1926, 64
      %v1935 = vadd.s32 %v1926, 72
      %v1936 = vadd.s32 %v1926, 80
      %v1937 = vadd.s32 %v1926, 88
      %v1938 = vadd.s32 %v1926, 96
      %v1939 = vadd.s32 %v1926, 104
      %v1940 = vadd.s32 %v1926, 112
      %v1941 = vadd.s32 %v1926, 120
      %v1942 = vadd.s32 %v1926, 128
      %v1943 = vadd.s32 %v1926, 136
      %v1944 = vadd.s32 %v1926, 144
      %v1945 = vadd.s32 %v1926, 152
      %v1946 = vadd.s32 %v1926, 160
      %v1947 = vadd.s32 %v1926, 168
      %v1948 = vadd.s32 %v1926, 176
      %v1949 = vadd.s32 %v1926, 184
      %v1950 = vadd.s32 %v1926, 192
      %v1951 = vadd.s32 %v1926, 200
      %v1952 = vadd.s32 %v1926, 208
      %v1953 = vadd.s32 %v1926, 216
      %v1954 = vadd.s32 %v1926, 224
      %v1955 = vadd.s32 %v1926, 232
      %v1956 = vadd.s32 %v1926, 240
      %v1957 = vadd.s32 %v1926, 248
      %s1958 = smul.u32 %s1924, 256
      %v1959 = vstv %s1958
      %v1960 = vadd.s32 %v1926, %v1959
      %v1961 = vadd.s32 %v1927, %v1959
      %v1962 = vadd.s32 %v1928, %v1959
      %v1963 = vadd.s32 %v1929, %v1959
      %v1964 = vadd.s32 %v1930, %v1959
      %v1965 = vadd.s32 %v1931, %v1959
      %v1966 = vadd.s32 %v1932, %v1959
      %v1967 = vadd.s32 %v1933, %v1959
      %v1968 = vadd.s32 %v1934, %v1959
      %v1969 = vadd.s32 %v1935, %v1959
      %v1970 = vadd.s32 %v1936, %v1959
      %v1971 = vadd.s32 %v1937, %v1959
      %v1972 = vadd.s32 %v1938, %v1959
      %v1973 = vadd.s32 %v1939, %v1959
      %v1974 = vadd.s32 %v1940, %v1959
      %v1975 = vadd.s32 %v1941, %v1959
      %v1976 = vadd.s32 %v1942, %v1959
      %v1977 = vadd.s32 %v1943, %v1959
      %v1978 = vadd.s32 %v1944, %v1959
      %v1979 = vadd.s32 %v1945, %v1959
      %v1980 = vadd.s32 %v1946, %v1959
      %v1981 = vadd.s32 %v1947, %v1959
      %v1982 = vadd.s32 %v1948, %v1959
      %v1983 = vadd.s32 %v1949, %v1959
      %v1984 = vadd.s32 %v1950, %v1959
      %v1985 = vadd.s32 %v1951, %v1959
      %v1986 = vadd.s32 %v1952, %v1959
      %v1987 = vadd.s32 %v1953, %v1959
      %v1988 = vadd.s32 %v1954, %v1959
      %v1989 = vadd.s32 %v1955, %v1959
      %v1990 = vadd.s32 %v1956, %v1959
      %v1991 = vadd.s32 %v1957, %v1959
      %vm1992 = vcmp.lt.s32.totalorder %v1960, 600
      %vm1993 = vcmp.lt.s32.totalorder %v1961, 600
      %vm1994 = vcmp.lt.s32.totalorder %v1962, 600
      %vm1995 = vcmp.lt.s32.totalorder %v1963, 600
      %vm1996 = vcmp.lt.s32.totalorder %v1964, 600
      %vm1997 = vcmp.lt.s32.totalorder %v1965, 600
      %vm1998 = vcmp.lt.s32.totalorder %v1966, 600
      %vm1999 = vcmp.lt.s32.totalorder %v1967, 600
      %vm2000 = vcmp.lt.s32.totalorder %v1968, 600
      %vm2001 = vcmp.lt.s32.totalorder %v1969, 600
      %vm2002 = vcmp.lt.s32.totalorder %v1970, 600
      %vm2003 = vcmp.lt.s32.totalorder %v1971, 600
      %vm2004 = vcmp.lt.s32.totalorder %v1972, 600
      %vm2005 = vcmp.lt.s32.totalorder %v1973, 600
      %vm2006 = vcmp.lt.s32.totalorder %v1974, 600
      %vm2007 = vcmp.lt.s32.totalorder %v1975, 600
      %vm2008 = vcmp.lt.s32.totalorder %v1976, 600
      %vm2009 = vcmp.lt.s32.totalorder %v1977, 600
      %vm2010 = vcmp.lt.s32.totalorder %v1978, 600
      %vm2011 = vcmp.lt.s32.totalorder %v1979, 600
      %vm2012 = vcmp.lt.s32.totalorder %v1980, 600
      %vm2013 = vcmp.lt.s32.totalorder %v1981, 600
      %vm2014 = vcmp.lt.s32.totalorder %v1982, 600
      %vm2015 = vcmp.lt.s32.totalorder %v1983, 600
      %vm2016 = vcmp.lt.s32.totalorder %v1984, 600
      %vm2017 = vcmp.lt.s32.totalorder %v1985, 600
      %vm2018 = vcmp.lt.s32.totalorder %v1986, 600
      %vm2019 = vcmp.lt.s32.totalorder %v1987, 600
      %vm2020 = vcmp.lt.s32.totalorder %v1988, 600
      %vm2021 = vcmp.lt.s32.totalorder %v1989, 600
      %vm2022 = vcmp.lt.s32.totalorder %v1990, 600
      %vm2023 = vcmp.lt.s32.totalorder %v1991, 600
      %v2024 = vsel %vm1992, %v1891, -1e+30
      %v2025 = vsel %vm1993, %v1892, -1e+30
      %v2026 = vsel %vm1994, %v1893, -1e+30
      %v2027 = vsel %vm1995, %v1894, -1e+30
      %v2028 = vsel %vm1996, %v1895, -1e+30
      %v2029 = vsel %vm1997, %v1896, -1e+30
      %v2030 = vsel %vm1998, %v1897, -1e+30
      %v2031 = vsel %vm1999, %v1898, -1e+30
      %v2032 = vsel %vm2000, %v1899, -1e+30
      %v2033 = vsel %vm2001, %v1900, -1e+30
      %v2034 = vsel %vm2002, %v1901, -1e+30
      %v2035 = vsel %vm2003, %v1902, -1e+30
      %v2036 = vsel %vm2004, %v1903, -1e+30
      %v2037 = vsel %vm2005, %v1904, -1e+30
      %v2038 = vsel %vm2006, %v1905, -1e+30
      %v2039 = vsel %vm2007, %v1906, -1e+30
      %v2040 = vsel %vm2008, %v1907, -1e+30
      %v2041 = vsel %vm2009, %v1908, -1e+30
      %v2042 = vsel %vm2010, %v1909, -1e+30
      %v2043 = vsel %vm2011, %v1910, -1e+30
      %v2044 = vsel %vm2012, %v1911, -1e+30
      %v2045 = vsel %vm2013, %v1912, -1e+30
      %v2046 = vsel %vm2014, %v1913, -1e+30
      %v2047 = vsel %vm2015, %v1914, -1e+30
      %v2048 = vsel %vm2016, %v1915, -1e+30
      %v2049 = vsel %vm2017, %v1916, -1e+30
      %v2050 = vsel %vm2018, %v1917, -1e+30
      %v2051 = vsel %vm2019, %v1918, -1e+30
      %v2052 = vsel %vm2020, %v1919, -1e+30
      %v2053 = vsel %vm2021, %v1920, -1e+30
      %v2054 = vsel %vm2022, %v1921, -1e+30
      %v2055 = vsel %vm2023, %v1922, -1e+30
      %vm2056 = vcmask 7168
      %2057 = vst.msk [vmem:[%s417] sm:$0xff] %vm2056, %v2024
      %2058 = vst.msk [vmem:[%s417 + $0x8] sm:$0xff] %vm2056, %v2025
      %2059 = vst.msk [vmem:[%s417 + $0x10] sm:$0xff] %vm2056, %v2026
      %2060 = vst.msk [vmem:[%s417 + $0x18] sm:$0xff] %vm2056, %v2027
      %2061 = vst.msk [vmem:[%s417 + $0x20] sm:$0xff] %vm2056, %v2028
      %2062 = vst.msk [vmem:[%s417 + $0x28] sm:$0xff] %vm2056, %v2029
      %2063 = vst.msk [vmem:[%s417 + $0x30] sm:$0xff] %vm2056, %v2030
      %2064 = vst.msk [vmem:[%s417 + $0x38] sm:$0xff] %vm2056, %v2031
      %2065 = vst.msk [vmem:[%s417 + $0x40] sm:$0xff] %vm2056, %v2032
      %2066 = vst.msk [vmem:[%s417 + $0x48] sm:$0xff] %vm2056, %v2033
      %2067 = vst.msk [vmem:[%s417 + $0x50] sm:$0xff] %vm2056, %v2034
      %2068 = vst.msk [vmem:[%s417 + $0x58] sm:$0xff] %vm2056, %v2035
      %2069 = vst.msk [vmem:[%s417 + $0x60] sm:$0xff] %vm2056, %v2036
      %2070 = vst.msk [vmem:[%s417 + $0x68] sm:$0xff] %vm2056, %v2037
      %2071 = vst.msk [vmem:[%s417 + $0x70] sm:$0xff] %vm2056, %v2038
      %2072 = vst.msk [vmem:[%s417 + $0x78] sm:$0xff] %vm2056, %v2039
      %2073 = vst.msk [vmem:[%s417 + $0x80] sm:$0xff] %vm2056, %v2040
      %2074 = vst.msk [vmem:[%s417 + $0x88] sm:$0xff] %vm2056, %v2041
      %2075 = vst.msk [vmem:[%s417 + $0x90] sm:$0xff] %vm2056, %v2042
      %2076 = vst.msk [vmem:[%s417 + $0x98] sm:$0xff] %vm2056, %v2043
      %2077 = vst.msk [vmem:[%s417 + $0xa0] sm:$0xff] %vm2056, %v2044
      %2078 = vst.msk [vmem:[%s417 + $0xa8] sm:$0xff] %vm2056, %v2045
      %2079 = vst.msk [vmem:[%s417 + $0xb0] sm:$0xff] %vm2056, %v2046
      %2080 = vst.msk [vmem:[%s417 + $0xb8] sm:$0xff] %vm2056, %v2047
      %2081 = vst.msk [vmem:[%s417 + $0xc0] sm:$0xff] %vm2056, %v2048
      %2082 = vst.msk [vmem:[%s417 + $0xc8] sm:$0xff] %vm2056, %v2049
      %2083 = vst.msk [vmem:[%s417 + $0xd0] sm:$0xff] %vm2056, %v2050
      %2084 = vst.msk [vmem:[%s417 + $0xd8] sm:$0xff] %vm2056, %v2051
      %2085 = vst.msk [vmem:[%s417 + $0xe0] sm:$0xff] %vm2056, %v2052
      %2086 = vst.msk [vmem:[%s417 + $0xe8] sm:$0xff] %vm2056, %v2053
      %2087 = vst.msk [vmem:[%s417 + $0xf0] sm:$0xff] %vm2056, %v2054
      %2088 = vst.msk [vmem:[%s417 + $0xf8] sm:$0xff] %vm2056, %v2055
      %v2089 = vld [vmem:[%s423] sm:$0x1]
      %v2090 = vsel %vm2056, %v2024, -inf
      %v2091 = vsel %vm2056, %v2025, -inf
      %v2092 = vsel %vm2056, %v2026, -inf
      %v2093 = vsel %vm2056, %v2027, -inf
      %v2094 = vsel %vm2056, %v2028, -inf
      %v2095 = vmax.f32 %v2090, %v2094
      %v2096 = vsel %vm2056, %v2029, -inf
      %v2097 = vmax.f32 %v2091, %v2096
      %v2098 = vsel %vm2056, %v2030, -inf
      %v2099 = vmax.f32 %v2092, %v2098
      %v2100 = vsel %vm2056, %v2031, -inf
      %v2101 = vmax.f32 %v2093, %v2100
      %v2102 = vsel %vm2056, %v2032, -inf
      %v2103 = vmax.f32 %v2095, %v2102
      %v2104 = vsel %vm2056, %v2033, -inf
      %v2105 = vmax.f32 %v2097, %v2104
      %v2106 = vsel %vm2056, %v2034, -inf
      %v2107 = vmax.f32 %v2099, %v2106
      %v2108 = vsel %vm2056, %v2035, -inf
      %v2109 = vmax.f32 %v2101, %v2108
      %v2110 = vsel %vm2056, %v2036, -inf
      %v2111 = vmax.f32 %v2103, %v2110
      %v2112 = vsel %vm2056, %v2037, -inf
      %v2113 = vmax.f32 %v2105, %v2112
      %v2114 = vsel %vm2056, %v2038, -inf
      %v2115 = vmax.f32 %v2107, %v2114
      %v2116 = vsel %vm2056, %v2039, -inf
      %v2117 = vmax.f32 %v2109, %v2116
      %v2118 = vsel %vm2056, %v2040, -inf
      %v2119 = vmax.f32 %v2111, %v2118
      %v2120 = vsel %vm2056, %v2041, -inf
      %v2121 = vmax.f32 %v2113, %v2120
      %v2122 = vsel %vm2056, %v2042, -inf
      %v2123 = vmax.f32 %v2115, %v2122
      %v2124 = vsel %vm2056, %v2043, -inf
      %v2125 = vmax.f32 %v2117, %v2124
      %v2126 = vsel %vm2056, %v2044, -inf
      %v2127 = vmax.f32 %v2119, %v2126
      %v2128 = vsel %vm2056, %v2045, -inf
      %v2129 = vmax.f32 %v2121, %v2128
      %v2130 = vsel %vm2056, %v2046, -inf
      %v2131 = vmax.f32 %v2123, %v2130
      %v2132 = vsel %vm2056, %v2047, -inf
      %v2133 = vmax.f32 %v2125, %v2132
      %v2134 = vsel %vm2056, %v2048, -inf
      %v2135 = vmax.f32 %v2127, %v2134
      %v2136 = vsel %vm2056, %v2049, -inf
      %v2137 = vmax.f32 %v2129, %v2136
      %v2138 = vsel %vm2056, %v2050, -inf
      %v2139 = vmax.f32 %v2131, %v2138
      %v2140 = vsel %vm2056, %v2051, -inf
      %v2141 = vmax.f32 %v2133, %v2140
      %v2142 = vsel %vm2056, %v2052, -inf
      %v2143 = vmax.f32 %v2135, %v2142
      %v2144 = vsel %vm2056, %v2053, -inf
      %v2145 = vmax.f32 %v2137, %v2144
      %v2146 = vsel %vm2056, %v2054, -inf
      %v2147 = vmax.f32 %v2139, %v2146
      %v2148 = vsel %vm2056, %v2055, -inf
      %v2149 = vmax.f32 %v2141, %v2148
      %v2150 = vmax.f32 %v2143, %v2145
      %v2151 = vmax.f32 %v2147, %v2149
      %v2152 = vmax.f32 %v2150, %v2151
      %v2153 = vrot.slane %v2152, 4
      %v2154 = vmax.f32 %v2152, %v2153
      %v2155 = vrot.slane %v2154, 2
      %v2156 = vmax.f32 %v2154, %v2155
      %v2157 = vrot.slane %v2156, 1
      %v2158 = vmax.f32 %v2156, %v2157
      %v2159 = vmax.f32 %v2089, %v2158
      %v2160 = vsub.f32 %v2089, %v2159
      %v2161 = vmul.f32 %v2160, 1.442695
      %v2162 = vpow.pop %v2161
      %v2164 = vlaneseq
      %v2165 = vshrl.u32 %v2164, 7
      %v2166 = vsub.s32 0, %v2165
      %v2167 = vrot.slane %v2159, %v2166
      %v2169 = vsub.f32 %v2024, %v2167
      %v2170 = vsub.f32 %v2025, %v2167
      %v2171 = vsub.f32 %v2026, %v2167
      %v2172 = vsub.f32 %v2027, %v2167
      %v2173 = vsub.f32 %v2028, %v2167
      %v2174 = vsub.f32 %v2029, %v2167
      %v2175 = vsub.f32 %v2030, %v2167
      %v2176 = vsub.f32 %v2031, %v2167
      %v2177 = vsub.f32 %v2032, %v2167
      %v2178 = vsub.f32 %v2033, %v2167
      %v2179 = vsub.f32 %v2034, %v2167
      %v2180 = vsub.f32 %v2035, %v2167
      %v2181 = vsub.f32 %v2036, %v2167
      %v2182 = vsub.f32 %v2037, %v2167
      %v2183 = vsub.f32 %v2038, %v2167
      %v2184 = vsub.f32 %v2039, %v2167
      %v2185 = vsub.f32 %v2040, %v2167
      %v2186 = vsub.f32 %v2041, %v2167
      %v2187 = vsub.f32 %v2042, %v2167
      %v2188 = vsub.f32 %v2043, %v2167
      %v2189 = vsub.f32 %v2044, %v2167
      %v2190 = vsub.f32 %v2045, %v2167
      %v2191 = vsub.f32 %v2046, %v2167
      %v2192 = vsub.f32 %v2047, %v2167
      %v2193 = vsub.f32 %v2048, %v2167
      %v2194 = vsub.f32 %v2049, %v2167
      %v2195 = vsub.f32 %v2050, %v2167
      %v2196 = vsub.f32 %v2051, %v2167
      %v2197 = vsub.f32 %v2052, %v2167
      %v2198 = vsub.f32 %v2053, %v2167
      %v2199 = vsub.f32 %v2054, %v2167
      %v2200 = vsub.f32 %v2055, %v2167
      %v2201 = vmul.f32 %v2169, 1.442695
      %v2202 = vpow.pop %v2201
      %v2203 = vmul.f32 %v2170, 1.442695
      %v2204 = vpow.pop %v2203
      %v2205 = vmul.f32 %v2171, 1.442695
      %v2206 = vpow.pop %v2205
      %v2207 = vmul.f32 %v2172, 1.442695
      %v2208 = vpow.pop %v2207
      %v2209 = vmul.f32 %v2173, 1.442695
      %v2210 = vpow.pop %v2209
      %v2211 = vmul.f32 %v2174, 1.442695
      %v2212 = vpow.pop %v2211
      %v2213 = vmul.f32 %v2175, 1.442695
      %v2214 = vpow.pop %v2213
      %v2215 = vmul.f32 %v2176, 1.442695
      %v2216 = vpow.pop %v2215
      %v2217 = vmul.f32 %v2177, 1.442695
      %v2218 = vpow.pop %v2217
      %v2219 = vmul.f32 %v2178, 1.442695
      %v2220 = vpow.pop %v2219
      %v2221 = vmul.f32 %v2179, 1.442695
      %v2222 = vpow.pop %v2221
      %v2223 = vmul.f32 %v2180, 1.442695
      %v2224 = vpow.pop %v2223
      %v2225 = vmul.f32 %v2181, 1.442695
      %v2226 = vpow.pop %v2225
      %v2227 = vmul.f32 %v2182, 1.442695
      %v2228 = vpow.pop %v2227
      %v2229 = vmul.f32 %v2183, 1.442695
      %v2230 = vpow.pop %v2229
      %v2231 = vmul.f32 %v2184, 1.442695
      %v2232 = vpow.pop %v2231
      %v2233 = vmul.f32 %v2185, 1.442695
      %v2234 = vpow.pop %v2233
      %v2235 = vmul.f32 %v2186, 1.442695
      %v2236 = vpow.pop %v2235
      %v2237 = vmul.f32 %v2187, 1.442695
      %v2238 = vpow.pop %v2237
      %v2239 = vmul.f32 %v2188, 1.442695
      %v2240 = vpow.pop %v2239
      %v2241 = vmul.f32 %v2189, 1.442695
      %v2242 = vpow.pop %v2241
      %v2243 = vmul.f32 %v2190, 1.442695
      %v2244 = vpow.pop %v2243
      %v2245 = vmul.f32 %v2191, 1.442695
      %v2246 = vpow.pop %v2245
      %v2247 = vmul.f32 %v2192, 1.442695
      %v2248 = vpow.pop %v2247
      %v2249 = vmul.f32 %v2193, 1.442695
      %v2250 = vpow.pop %v2249
      %v2251 = vmul.f32 %v2194, 1.442695
      %v2252 = vpow.pop %v2251
      %v2253 = vmul.f32 %v2195, 1.442695
      %v2254 = vpow.pop %v2253
      %v2255 = vmul.f32 %v2196, 1.442695
      %v2256 = vpow.pop %v2255
      %v2257 = vmul.f32 %v2197, 1.442695
      %v2258 = vpow.pop %v2257
      %v2259 = vmul.f32 %v2198, 1.442695
      %v2260 = vpow.pop %v2259
      %v2261 = vmul.f32 %v2199, 1.442695
      %v2262 = vpow.pop %v2261
      %v2263 = vmul.f32 %v2200, 1.442695
      %v2264 = vpow.pop %v2263
      %v2265 = vld [vmem:[%s426] sm:$0x1]
      %v2266 = vmul.f32 %v2162, %v2265
      %v2267 = vsel %vm2056, %v2202, 0.0
      %v2268 = vsel %vm2056, %v2204, 0.0
      %v2269 = vadd.f32 %v2267, %v2268
      %v2270 = vsel %vm2056, %v2206, 0.0
      %v2271 = vadd.f32 %v2269, %v2270
      %v2272 = vsel %vm2056, %v2208, 0.0
      %v2273 = vadd.f32 %v2271, %v2272
      %v2274 = vsel %vm2056, %v2210, 0.0
      %v2275 = vadd.f32 %v2273, %v2274
      %v2276 = vsel %vm2056, %v2212, 0.0
      %v2277 = vadd.f32 %v2275, %v2276
      %v2278 = vsel %vm2056, %v2214, 0.0
      %v2279 = vadd.f32 %v2277, %v2278
      %v2280 = vsel %vm2056, %v2216, 0.0
      %v2281 = vadd.f32 %v2279, %v2280
      %v2282 = vsel %vm2056, %v2218, 0.0
      %v2283 = vadd.f32 %v2281, %v2282
      %v2284 = vsel %vm2056, %v2220, 0.0
      %v2285 = vadd.f32 %v2283, %v2284
      %v2286 = vsel %vm2056, %v2222, 0.0
      %v2287 = vadd.f32 %v2285, %v2286
      %v2288 = vsel %vm2056, %v2224, 0.0
      %v2289 = vadd.f32 %v2287, %v2288
      %v2290 = vsel %vm2056, %v2226, 0.0
      %v2291 = vadd.f32 %v2289, %v2290
      %v2292 = vsel %vm2056, %v2228, 0.0
      %v2293 = vadd.f32 %v2291, %v2292
      %v2294 = vsel %vm2056, %v2230, 0.0
      %v2295 = vadd.f32 %v2293, %v2294
      %v2296 = vsel %vm2056, %v2232, 0.0
      %v2297 = vadd.f32 %v2295, %v2296
      %v2298 = vsel %vm2056, %v2234, 0.0
      %v2299 = vadd.f32 %v2297, %v2298
      %v2300 = vsel %vm2056, %v2236, 0.0
      %v2301 = vadd.f32 %v2299, %v2300
      %v2302 = vsel %vm2056, %v2238, 0.0
      %v2303 = vadd.f32 %v2301, %v2302
      %v2304 = vsel %vm2056, %v2240, 0.0
      %v2305 = vadd.f32 %v2303, %v2304
      %v2306 = vsel %vm2056, %v2242, 0.0
      %v2307 = vadd.f32 %v2305, %v2306
      %v2308 = vsel %vm2056, %v2244, 0.0
      %v2309 = vadd.f32 %v2307, %v2308
      %v2310 = vsel %vm2056, %v2246, 0.0
      %v2311 = vadd.f32 %v2309, %v2310
      %v2312 = vsel %vm2056, %v2248, 0.0
      %v2313 = vadd.f32 %v2311, %v2312
      %v2314 = vsel %vm2056, %v2250, 0.0
      %v2315 = vadd.f32 %v2313, %v2314
      %v2316 = vsel %vm2056, %v2252, 0.0
      %v2317 = vadd.f32 %v2315, %v2316
      %v2318 = vsel %vm2056, %v2254, 0.0
      %v2319 = vadd.f32 %v2317, %v2318
      %v2320 = vsel %vm2056, %v2256, 0.0
      %v2321 = vadd.f32 %v2319, %v2320
      %v2322 = vsel %vm2056, %v2258, 0.0
      %v2323 = vadd.f32 %v2321, %v2322
      %v2324 = vsel %vm2056, %v2260, 0.0
      %v2325 = vadd.f32 %v2323, %v2324
      %v2326 = vsel %vm2056, %v2262, 0.0
      %v2327 = vadd.f32 %v2325, %v2326
      %v2328 = vsel %vm2056, %v2264, 0.0
      %v2329 = vadd.f32 %v2327, %v2328
      %v2330 = vrot.slane %v2329, 4
      %v2331 = vadd.f32 %v2329, %v2330
      %v2332 = vrot.slane %v2331, 2
      %v2333 = vadd.f32 %v2331, %v2332
      %v2334 = vrot.slane %v2333, 1
      %v2335 = vadd.f32 %v2333, %v2334
      %v2336 = vadd.f32 %v2266, %v2335
      %vm2337 = vcmask 0
      %2338 = vst.msk [vmem:[%s426] sm:$0x1] %vm2337, %v2336
      %v2339 = vld [vmem:[%s430] sm:$0x3]
      %2341 = vset.pattern.permute.xlu0 0
      %2342 = vperm.xlu0 %2341, %v2162
      %v2343 = vpop.permute.xlu0 %2342
      %v2345 = vlaneseq
      %v2346 = vshrl.u32 %v2345, 7
      %v2347 = vsub.s32 0, %v2346
      %v2348 = vrot.slane %v2343, %v2347
      %v2349 = vmul.f32 %v2348, %v2339
      %2351 = vset.pattern.permute.xlu0 0
      %2352 = vperm.xlu0 %2351, %v2202
      %v2353 = vpop.permute.xlu0 %2352
      %2356 = vset.pattern.permute.xlu0 0
      %2357 = vperm.xlu0 %2356, %v2204
      %v2358 = vpop.permute.xlu0 %2357
      %2361 = vset.pattern.permute.xlu0 0
      %2362 = vperm.xlu0 %2361, %v2206
      %v2363 = vpop.permute.xlu0 %2362
      %2366 = vset.pattern.permute.xlu0 0
      %2367 = vperm.xlu0 %2366, %v2208
      %v2368 = vpop.permute.xlu0 %2367
      %2371 = vset.pattern.permute.xlu0 0
      %2372 = vperm.xlu0 %2371, %v2210
      %v2373 = vpop.permute.xlu0 %2372
      %2376 = vset.pattern.permute.xlu0 0
      %2377 = vperm.xlu0 %2376, %v2212
      %v2378 = vpop.permute.xlu0 %2377
      %2381 = vset.pattern.permute.xlu0 0
      %2382 = vperm.xlu0 %2381, %v2214
      %v2383 = vpop.permute.xlu0 %2382
      %2386 = vset.pattern.permute.xlu0 0
      %2387 = vperm.xlu0 %2386, %v2216
      %v2388 = vpop.permute.xlu0 %2387
      %2391 = vset.pattern.permute.xlu0 0
      %2392 = vperm.xlu0 %2391, %v2218
      %v2393 = vpop.permute.xlu0 %2392
      %2396 = vset.pattern.permute.xlu0 0
      %2397 = vperm.xlu0 %2396, %v2220
      %v2398 = vpop.permute.xlu0 %2397
      %2401 = vset.pattern.permute.xlu0 0
      %2402 = vperm.xlu0 %2401, %v2222
      %v2403 = vpop.permute.xlu0 %2402
      %2406 = vset.pattern.permute.xlu0 0
      %2407 = vperm.xlu0 %2406, %v2224
      %v2408 = vpop.permute.xlu0 %2407
      %2411 = vset.pattern.permute.xlu0 0
      %2412 = vperm.xlu0 %2411, %v2226
      %v2413 = vpop.permute.xlu0 %2412
      %2416 = vset.pattern.permute.xlu0 0
      %2417 = vperm.xlu0 %2416, %v2228
      %v2418 = vpop.permute.xlu0 %2417
      %2421 = vset.pattern.permute.xlu0 0
      %2422 = vperm.xlu0 %2421, %v2230
      %v2423 = vpop.permute.xlu0 %2422
      %2426 = vset.pattern.permute.xlu0 0
      %2427 = vperm.xlu0 %2426, %v2232
      %v2428 = vpop.permute.xlu0 %2427
      %2431 = vset.pattern.permute.xlu0 0
      %2432 = vperm.xlu0 %2431, %v2234
      %v2433 = vpop.permute.xlu0 %2432
      %2436 = vset.pattern.permute.xlu0 0
      %2437 = vperm.xlu0 %2436, %v2236
      %v2438 = vpop.permute.xlu0 %2437
      %2441 = vset.pattern.permute.xlu0 0
      %2442 = vperm.xlu0 %2441, %v2238
      %v2443 = vpop.permute.xlu0 %2442
      %2446 = vset.pattern.permute.xlu0 0
      %2447 = vperm.xlu0 %2446, %v2240
      %v2448 = vpop.permute.xlu0 %2447
      %2451 = vset.pattern.permute.xlu0 0
      %2452 = vperm.xlu0 %2451, %v2242
      %v2453 = vpop.permute.xlu0 %2452
      %2456 = vset.pattern.permute.xlu0 0
      %2457 = vperm.xlu0 %2456, %v2244
      %v2458 = vpop.permute.xlu0 %2457
      %2461 = vset.pattern.permute.xlu0 0
      %2462 = vperm.xlu0 %2461, %v2246
      %v2463 = vpop.permute.xlu0 %2462
      %2466 = vset.pattern.permute.xlu0 0
      %2467 = vperm.xlu0 %2466, %v2248
      %v2468 = vpop.permute.xlu0 %2467
      %2471 = vset.pattern.permute.xlu0 0
      %2472 = vperm.xlu0 %2471, %v2250
      %v2473 = vpop.permute.xlu0 %2472
      %2476 = vset.pattern.permute.xlu0 0
      %2477 = vperm.xlu0 %2476, %v2252
      %v2478 = vpop.permute.xlu0 %2477
      %2481 = vset.pattern.permute.xlu0 0
      %2482 = vperm.xlu0 %2481, %v2254
      %v2483 = vpop.permute.xlu0 %2482
      %2486 = vset.pattern.permute.xlu0 0
      %2487 = vperm.xlu0 %2486, %v2256
      %v2488 = vpop.permute.xlu0 %2487
      %2491 = vset.pattern.permute.xlu0 0
      %2492 = vperm.xlu0 %2491, %v2258
      %v2493 = vpop.permute.xlu0 %2492
      %2496 = vset.pattern.permute.xlu0 0
      %2497 = vperm.xlu0 %2496, %v2260
      %v2498 = vpop.permute.xlu0 %2497
      %2501 = vset.pattern.permute.xlu0 0
      %2502 = vperm.xlu0 %2501, %v2262
      %v2503 = vpop.permute.xlu0 %2502
      %2506 = vset.pattern.permute.xlu0 0
      %2507 = vperm.xlu0 %2506, %v2264
      %v2508 = vpop.permute.xlu0 %2507
      %v2510 = vmul.f32 %v2353, %v1032
      %v2511 = vmul.f32 %v2353, %v1033
      %v2512 = vmul.f32 %v2358, %v1034
      %v2513 = vmul.f32 %v2358, %v1035
      %v2514 = vmul.f32 %v2363, %v1036
      %v2515 = vmul.f32 %v2363, %v1037
      %v2516 = vmul.f32 %v2368, %v1038
      %v2517 = vmul.f32 %v2368, %v1039
      %v2518 = vmul.f32 %v2373, %v1040
      %v2519 = vmul.f32 %v2373, %v1041
      %v2520 = vmul.f32 %v2378, %v1042
      %v2521 = vmul.f32 %v2378, %v1043
      %v2522 = vmul.f32 %v2383, %v1044
      %v2523 = vmul.f32 %v2383, %v1045
      %v2524 = vmul.f32 %v2388, %v1046
      %v2525 = vmul.f32 %v2388, %v1047
      %v2526 = vmul.f32 %v2393, %v1048
      %v2527 = vmul.f32 %v2393, %v1049
      %v2528 = vmul.f32 %v2398, %v1050
      %v2529 = vmul.f32 %v2398, %v1051
      %v2530 = vmul.f32 %v2403, %v1052
      %v2531 = vmul.f32 %v2403, %v1053
      %v2532 = vmul.f32 %v2408, %v1054
      %v2533 = vmul.f32 %v2408, %v1055
      %v2534 = vmul.f32 %v2413, %v1056
      %v2535 = vmul.f32 %v2413, %v1057
      %v2536 = vmul.f32 %v2418, %v1058
      %v2537 = vmul.f32 %v2418, %v1059
      %v2538 = vmul.f32 %v2423, %v1060
      %v2539 = vmul.f32 %v2423, %v1061
      %v2540 = vmul.f32 %v2428, %v1062
      %v2541 = vmul.f32 %v2428, %v1063
      %v2542 = vmul.f32 %v2433, %v1064
      %v2543 = vmul.f32 %v2433, %v1065
      %v2544 = vmul.f32 %v2438, %v1066
      %v2545 = vmul.f32 %v2438, %v1067
      %v2546 = vmul.f32 %v2443, %v1068
      %v2547 = vmul.f32 %v2443, %v1069
      %v2548 = vmul.f32 %v2448, %v1070
      %v2549 = vmul.f32 %v2448, %v1071
      %v2550 = vmul.f32 %v2453, %v1072
      %v2551 = vmul.f32 %v2453, %v1073
      %v2552 = vmul.f32 %v2458, %v1074
      %v2553 = vmul.f32 %v2458, %v1075
      %v2554 = vmul.f32 %v2463, %v1076
      %v2555 = vmul.f32 %v2463, %v1077
      %v2556 = vmul.f32 %v2468, %v1078
      %v2557 = vmul.f32 %v2468, %v1079
      %v2558 = vmul.f32 %v2473, %v1080
      %v2559 = vmul.f32 %v2473, %v1081
      %v2560 = vmul.f32 %v2478, %v1082
      %v2561 = vmul.f32 %v2478, %v1083
      %v2562 = vmul.f32 %v2483, %v1084
      %v2563 = vmul.f32 %v2483, %v1085
      %v2564 = vmul.f32 %v2488, %v1086
      %v2565 = vmul.f32 %v2488, %v1087
      %v2566 = vmul.f32 %v2493, %v1088
      %v2567 = vmul.f32 %v2493, %v1089
      %v2568 = vmul.f32 %v2498, %v1090
      %v2569 = vmul.f32 %v2498, %v1091
      %v2570 = vmul.f32 %v2503, %v1092
      %v2571 = vmul.f32 %v2503, %v1093
      %v2572 = vmul.f32 %v2508, %v1094
      %v2573 = vmul.f32 %v2508, %v1095
      %v2574 = vadd.f32 %v2510, %v2512
      %v2575 = vadd.f32 %v2574, %v2514
      %v2576 = vadd.f32 %v2575, %v2516
      %v2577 = vadd.f32 %v2576, %v2518
      %v2578 = vadd.f32 %v2577, %v2520
      %v2579 = vadd.f32 %v2578, %v2522
      %v2580 = vadd.f32 %v2579, %v2524
      %v2581 = vadd.f32 %v2580, %v2526
      %v2582 = vadd.f32 %v2581, %v2528
      %v2583 = vadd.f32 %v2582, %v2530
      %v2584 = vadd.f32 %v2583, %v2532
      %v2585 = vadd.f32 %v2584, %v2534
      %v2586 = vadd.f32 %v2585, %v2536
      %v2587 = vadd.f32 %v2586, %v2538
      %v2588 = vadd.f32 %v2587, %v2540
      %v2589 = vadd.f32 %v2588, %v2542
      %v2590 = vadd.f32 %v2589, %v2544
      %v2591 = vadd.f32 %v2590, %v2546
      %v2592 = vadd.f32 %v2591, %v2548
      %v2593 = vadd.f32 %v2592, %v2550
      %v2594 = vadd.f32 %v2593, %v2552
      %v2595 = vadd.f32 %v2594, %v2554
      %v2596 = vadd.f32 %v2595, %v2556
      %v2597 = vadd.f32 %v2596, %v2558
      %v2598 = vadd.f32 %v2597, %v2560
      %v2599 = vadd.f32 %v2598, %v2562
      %v2600 = vadd.f32 %v2599, %v2564
      %v2601 = vadd.f32 %v2600, %v2566
      %v2602 = vadd.f32 %v2601, %v2568
      %v2603 = vadd.f32 %v2602, %v2570
      %v2604 = vadd.f32 %v2603, %v2572
      %v2605 = vrot.slane %v2604, 4
      %v2606 = vadd.f32 %v2604, %v2605
      %v2607 = vrot.slane %v2606, 2
      %v2608 = vadd.f32 %v2606, %v2607
      %v2609 = vrot.slane %v2608, 1
      %v2610 = vadd.f32 %v2608, %v2609
      %v2611 = vadd.f32 %v2511, %v2513
      %v2612 = vadd.f32 %v2611, %v2515
      %v2613 = vadd.f32 %v2612, %v2517
      %v2614 = vadd.f32 %v2613, %v2519
      %v2615 = vadd.f32 %v2614, %v2521
      %v2616 = vadd.f32 %v2615, %v2523
      %v2617 = vadd.f32 %v2616, %v2525
      %v2618 = vadd.f32 %v2617, %v2527
      %v2619 = vadd.f32 %v2618, %v2529
      %v2620 = vadd.f32 %v2619, %v2531
      %v2621 = vadd.f32 %v2620, %v2533
      %v2622 = vadd.f32 %v2621, %v2535
      %v2623 = vadd.f32 %v2622, %v2537
      %v2624 = vadd.f32 %v2623, %v2539
      %v2625 = vadd.f32 %v2624, %v2541
      %v2626 = vadd.f32 %v2625, %v2543
      %v2627 = vadd.f32 %v2626, %v2545
      %v2628 = vadd.f32 %v2627, %v2547
      %v2629 = vadd.f32 %v2628, %v2549
      %v2630 = vadd.f32 %v2629, %v2551
      %v2631 = vadd.f32 %v2630, %v2553
      %v2632 = vadd.f32 %v2631, %v2555
      %v2633 = vadd.f32 %v2632, %v2557
      %v2634 = vadd.f32 %v2633, %v2559
      %v2635 = vadd.f32 %v2634, %v2561
      %v2636 = vadd.f32 %v2635, %v2563
      %v2637 = vadd.f32 %v2636, %v2565
      %v2638 = vadd.f32 %v2637, %v2567
      %v2639 = vadd.f32 %v2638, %v2569
      %v2640 = vadd.f32 %v2639, %v2571
      %v2641 = vadd.f32 %v2640, %v2573
      %v2642 = vrot.slane %v2641, 4
      %v2643 = vadd.f32 %v2641, %v2642
      %v2644 = vrot.slane %v2643, 2
      %v2645 = vadd.f32 %v2643, %v2644
      %v2646 = vrot.slane %v2645, 1
      %v2647 = vadd.f32 %v2645, %v2646
      %v2650 = vcombine.low %v2610, %v2647
      %v2652 = vunpack.c.l.s4 1966171168
      %v2653 = vunpack.c.0.s8 %v2652
      %v2654 = vlaneseq
      %v2655 = vshrl.u32 %v2654, 7
      %v2656 = vsub.s32 %v2653, %v2655
      %v2657 = vrot.slane %v2650, %v2656
      %v2659 = vunpack.c.l.s4 1966171168
      %v2660 = vunpack.c.0.s8 %v2659
      %v2661 = vlaneseq
      %v2662 = vshrl.u32 %v2661, 7
      %v2663 = vsub.s32 %v2660, %v2662
      %v2664 = vrot.slane %v2657, %v2663
      %v2666 = vadd.f32 %v2349, %v2664
      %v2667 = vlaneseq
      %vm2668 = vcmp.ge.s32.totalorder %v2667, 0
      %vm2669 = vcmp.lt.s32.totalorder %v2667, 256
      %vm2670 = vmand %vm2668, %vm2669
      %2671 = vst.msk [vmem:[%s430] sm:$0x3] %vm2670, %v2666
      %2672 = vst.msk [vmem:[%s423] sm:$0x1] %vm2337, %v2159
      %s2673 = smul.u32 %s28, 2
      %s2674 = sadd.s32 %s2673, %s29
      %s2675 = smul.u32 32, %s2674
      %p2676 = scmp.lt.s32.totalorder %s2675, 127
      %s2677 = scalar_select %p2676, %s2675, 127
      %s2678 = smul.addr %s2677, 8
      %s2679 = scalar_lea.vmem %s7, %s2678
      %p2680 = scmp.lt.s32.totalorder %s28, 1
      %s2681 = scalar_select %p2680, %s28, 1
      %s2682 = scalar_lea.vmem %s8, %s2681
      %p2683 = scmp.lt.s32.totalorder %s28, 1
      %s2684 = scalar_select %p2683, %s28, 1
      %s2685 = scalar_lea.vmem %s9, %s2684
      %p2686 = scmp.lt.s32.totalorder %s28, 1
      %s2687 = scalar_select %p2686, %s28, 1
      %s2688 = smul.addr %s2687, 2
      %s2689 = scalar_lea.vmem %s10, %s2688
      // Predicated region
      $region53: #{clam_sb_forward.2} parent=47 // pred_check
        %p2690 = pneg %p214
      $region54: #{clam_sb_forward.2} parent=47 // pred_check_branch
        %2692 = sbr.rel (%p2690) target = $region56
      $region55: #{clam_sb_forward.2} parent=47 // pred_region
        %s2693 = smul.u32 %s28, 2
        %s2694 = sadd.s32 %s2693, %s29
        %s2695 = smul.u32 32, %s2694
      $region56: #{clam_sb_forward.2} parent=47 // pred_fallthru
        _
      // Predicated region
      $region57: #{clam_sb_forward.2} parent=47 // pred_check
        %p2696 = pneg %p240
      $region58: #{clam_sb_forward.2} parent=47 // pred_check_branch
        %2698 = sbr.rel (%p2696) target = $region60
      $region59: #{clam_sb_forward.2} parent=47 // pred_region
        _
      $region60: #{clam_sb_forward.2} parent=47 // pred_fallthru
        _
      // Predicated region
      $region61: #{clam_sb_forward.2} parent=47 // pred_check
        %p2699 = pneg %p266
      $region62: #{clam_sb_forward.2} parent=47 // pred_check_branch
        %2701 = sbr.rel (%p2699) target = $region64
      $region63: #{clam_sb_forward.2} parent=47 // pred_region
        _
      $region64: #{clam_sb_forward.2} parent=47 // pred_fallthru
        _
      // Predicated region
      $region65: #{clam_sb_forward.2} parent=47 // pred_check
        %p2702 = pneg %p292
      $region66: #{clam_sb_forward.2} parent=47 // pred_check_branch
        %2704 = sbr.rel (%p2702) target = $region68
      $region67: #{clam_sb_forward.2} parent=47 // pred_region
        _
      $region68: #{clam_sb_forward.2} parent=47 // pred_fallthru
        _
    $region48: #{clam_sb_forward.2} parent=5 // pred_fallthru
      _
    %p2705 = scmp.le.s32.totalorder 2, %s19
    // Predicated region
    $region69: #{clam_sb_forward.2} parent=5 // pred_check
      %p2706 = pneg %p2705
    $region70: #{clam_sb_forward.2} parent=5 // pred_check_branch
      %2708 = sbr.rel (%p2706) target = $region72
    $region71: #{clam_sb_forward.2} parent=5 // pred_region
      %s2709 = ssub.s32 %s19, 2
      // Predicated region
      $region73: #{clam_sb_forward.2} parent=71 // pred_check
        %p2710 = pneg %p220
      $region74: #{clam_sb_forward.2} parent=71 // pred_check_branch
        %2712 = sbr.rel (%p2710) target = $region76
      $region75: #{clam_sb_forward.2} parent=71 // pred_region
        %s2713 = smul.u32 %s30, 2
        %s2714 = sadd.s32 %s2713, %s31
        %s2715 = smul.u32 32, %s2714
        %p2716 = scmp.lt.s32.totalorder %s2715, 127
        %s2717 = scalar_select %p2716, %s2715, 127
        %s2718 = smul.addr %s2717, 8
        %s2719 = scalar_lea.vmem %s7, %s2718
      $region76: #{clam_sb_forward.2} parent=71 // pred_fallthru
        _
      // Predicated region
      $region77: #{clam_sb_forward.2} parent=71 // pred_check
        %p2720 = pneg %p246
      $region78: #{clam_sb_forward.2} parent=71 // pred_check_branch
        %2722 = sbr.rel (%p2720) target = $region80
      $region79: #{clam_sb_forward.2} parent=71 // pred_region
        %p2723 = scmp.lt.s32.totalorder %s30, 1
        %s2724 = scalar_select %p2723, %s30, 1
        %s2725 = scalar_lea.vmem %s8, %s2724
      $region80: #{clam_sb_forward.2} parent=71 // pred_fallthru
        _
      // Predicated region
      $region81: #{clam_sb_forward.2} parent=71 // pred_check
        %p2726 = pneg %p272
      $region82: #{clam_sb_forward.2} parent=71 // pred_check_branch
        %2728 = sbr.rel (%p2726) target = $region84
      $region83: #{clam_sb_forward.2} parent=71 // pred_region
        %p2729 = scmp.lt.s32.totalorder %s30, 1
        %s2730 = scalar_select %p2729, %s30, 1
        %s2731 = scalar_lea.vmem %s9, %s2730
      $region84: #{clam_sb_forward.2} parent=71 // pred_fallthru
        _
      // Predicated region
      $region85: #{clam_sb_forward.2} parent=71 // pred_check
        %p2732 = pneg %p298
      $region86: #{clam_sb_forward.2} parent=71 // pred_check_branch
        %2734 = sbr.rel (%p2732) target = $region88
      $region87: #{clam_sb_forward.2} parent=71 // pred_region
        %p2735 = scmp.lt.s32.totalorder %s30, 1
        %s2736 = scalar_select %p2735, %s30, 1
        %s2737 = smul.addr %s2736, 2
        %s2738 = scalar_lea.vmem %s10, %s2737
      $region88: #{clam_sb_forward.2} parent=71 // pred_fallthru
        _
    $region72: #{clam_sb_forward.2} parent=5 // pred_fallthru
      _
  $region6: #{clam_sb_forward.2} parent=0 // loop_footer
    %s23 = sadd.s32 1, %s19
  $region7: #{clam_sb_forward.2} parent=0 // loop_footer_branch
    %18 = sbr.rel target = $region3
  $region8: #{clam_sb_forward.2} parent=0 // loop_exit
    _

</llo_original>
